<compile_context>
chip_gen: v7x
topology: tpu7x:2x2x1
jax: 0.10.0
libtpu: 0.0.40
codegen_flags: <defaults>
</compile_context>

<pallas_src>
import functools

import numpy as np
import jax
import jax.numpy as jnp
from jax.experimental import pallas as pl
from jax.experimental.pallas import tpu as pltpu


# ---------------------------------------------------------------------------
# Static host-side operators (cached across calls)
# ---------------------------------------------------------------------------
def _bilinear_matrix_1d(in_size, out_size):
    """1-D interpolation matrix matching F.interpolate(bilinear, align_corners=False)."""
    m = np.zeros((out_size, in_size), np.float32)
    scale = in_size / out_size
    for o in range(out_size):
        s = max((o + 0.5) * scale - 0.5, 0.0)
        i0 = min(int(np.floor(s)), in_size - 1)
        i1 = min(i0 + 1, in_size - 1)
        l1 = float(s - i0)
        m[o, i0] += 1.0 - l1
        m[o, i1] += l1
    return m


@functools.lru_cache(maxsize=None)
def _upsample_ut(hx, wx, h, w):
    """U^T (hx*wx, h*w) so that  up = x_lowres @ U^T  (bilinear, align_corners=False)."""
    my = _bilinear_matrix_1d(hx, h)          # (h, hx)
    mx = _bilinear_matrix_1d(wx, w)          # (w, wx)
    u = np.kron(my, mx)                      # (h*w, hx*wx)
    return jnp.asarray(np.ascontiguousarray(u.T, dtype=np.float32))


@functools.lru_cache(maxsize=None)
def _tap_masks(h, w, batch):
    """(9, batch*h*w) 0/1 masks: 1 where the 3x3 tap's neighbour is inside the image."""
    npx = h * w
    ii, jj = np.divmod(np.arange(npx), w)
    m = np.zeros((9, npx), np.float32)
    t = 0
    for ki in range(3):
        for kj in range(3):
            di, dj = ki - 1, kj - 1
            valid = (ii + di >= 0) & (ii + di < h) & (jj + dj >= 0) & (jj + dj < w)
            m[t, valid] = 1.0
            t += 1
    return jnp.asarray(np.tile(m, (1, batch)))


def _tap_shifts(h, w, batch):
    """Lane-roll amounts (jnp.roll convention) so out[p] = in[p + di*W + dj]."""
    ntot = batch * h * w
    return tuple(int((-((ki - 1) * w + (kj - 1))) % ntot)
                 for ki in range(3) for kj in range(3))


# ---------------------------------------------------------------------------
# Fused GuideBlock kernel (grid-less, whole batch folded into the lane axis)
# ---------------------------------------------------------------------------
def _guide_block_kernel(x_ref, skip_ref, ut_ref, w1x1_ref, ws1_ref, ws2_ref,
                        mask_ref, wax_ref, was_ref, sc_ref,
                        out_ref, ctx_ref, *, H, W, B, shifts, eps, slope):
    npx = H * W

    # PRM scalar parameters (SMEM).
    theta0, theta1 = sc_ref[0], sc_ref[1]
    scale = sc_ref[2]
    p_w, p_b = sc_ref[3], sc_ref[4]
    p_one, p_zero = sc_ref[5], sc_ref[6]
    inv_two_s2 = 1.0 / (2.0 * scale * scale)
    inv_norm = 1.0 / (scale * float(np.sqrt(2.0 * np.pi)))   # Normal(0, scale) pdf scale

    ut = ut_ref[...]            # (HxWx, Npix)
    w1x1 = w1x1_ref[...]        # (c_out, Cx)
    wax = wax_ref[...]          # (2, c_out)
    was = was_ref[...]          # (2, c_out)
    masks = mask_ref[...]       # (9, B*Npix)

    def sigmoid(z):
        return pl.reciprocal(1.0 + jnp.exp(-z), approx=True)

    def conv3x3(a, w_taps_ref):
        # a: (Cin, B*Npix); w_taps_ref: (9, Cout, Cin).
        # 3x3/stride1/pad1 via XLU lane-rolls + border masks; MXU only sees the
        # per-tap weight matmul.  Roll wrap across image/batch boundaries is zeroed
        # by the mask (out-of-bounds taps of the zero-padded conv).
        acc = None
        for t in range(9):
            rolled = a if shifts[t] == 0 else pltpu.roll(a, shift=shifts[t], axis=1)
            shifted = masks[t:t + 1, :] * rolled
            term = jnp.dot(w_taps_ref[t], shifted, preferred_element_type=jnp.float32)
            acc = term if acc is None else acc + term
        return acc

    def inorm_lrelu(y):
        # InstanceNorm2d (biased var, eps, affine=False): stats per (image, channel),
        # i.e. per 256-lane batch slice of the folded layout.
        segs = []
        for b in range(B):
            s = y[:, b * npx:(b + 1) * npx]
            m = jnp.mean(s, axis=1, keepdims=True)
            cen = s - m
            v = jnp.mean(cen * cen, axis=1, keepdims=True)
            segs.append(cen * jax.lax.rsqrt(v + eps))
        y = jnp.concatenate(segs, axis=1)
        return jnp.where(y >= 0.0, y, slope * y)      # LeakyReLU(0.01)

    # ---- branch 1: 1x1 channel-mix at low res, then bilinear upsample (matmul) ----
    x_pieces = []
    for b in range(B):
        xmix = jnp.dot(w1x1, x_ref[b], preferred_element_type=jnp.float32)   # (c_out, HxWx)
        x_pieces.append(jnp.dot(xmix, ut, preferred_element_type=jnp.float32))
    xout = jnp.concatenate(x_pieces, axis=1)                                 # (c_out, B*Npix)

    # ---- branch 2: ConvBlock = 2 x (conv3x3 -> InstanceNorm -> LeakyReLU) --------
    skip_all = jnp.concatenate([skip_ref[b] for b in range(B)], axis=1)      # (Cskip, B*Npix)
    a = inorm_lrelu(conv3x3(skip_all, ws1_ref))
    a = inorm_lrelu(conv3x3(a, ws2_ref))                                     # (c_out, B*Npix)

    # ---- attention: 1x1 conv over channel-concat, sigmoid ------------------------
    att = sigmoid(jnp.dot(wax, xout, preferred_element_type=jnp.float32) +
                  jnp.dot(was, a, preferred_element_type=jnp.float32))       # (2, B*Npix)
    fused = xout * att[0:1, :] + a * att[1:2, :]                             # (c_out, B*Npix)

    # ---- PRM layer (per-image reductions on 256-lane slices) ---------------------
    lane_f = jax.lax.broadcasted_iota(jnp.int32, (1, npx), 1).astype(jnp.float32)
    row_f = jnp.floor(lane_f / W)
    col_f = lane_f - row_f * W

    for b in range(B):
        f = fused[:, b * npx:(b + 1) * npx]                                  # (c_out, Npix)
        sumvalue = jnp.sum(f, axis=0, keepdims=True)                         # (1, Npix)
        maxv = jnp.max(sumvalue, axis=1, keepdims=True)
        idx_f = jnp.min(jnp.where(sumvalue == maxv, lane_f, float(npx)),
                        axis=1, keepdims=True)                               # first argmax
        t_row = jnp.floor(idx_f / W)       # torch: maxposition // w
        t_col = jnp.floor(idx_f / H)       # torch: maxposition // h  (quirk kept as-is)
        flat_q = t_row * W + t_col
        onehot = (lane_f == flat_q).astype(jnp.float32)
        t_val = jnp.sum(f * onehot, axis=1, keepdims=True)                   # (c_out, 1)

        sim_max = jnp.sum(t_val * f, axis=0, keepdims=True)                  # (1, Npix)
        gap = jnp.mean(f, axis=1, keepdims=True)                             # (c_out, 1)
        sim_gap = jnp.sum(gap * f, axis=0, keepdims=True)                    # (1, Npix)

        d0 = jnp.abs(row_f - t_row) * theta0
        d1 = jnp.abs(col_f - t_col) * theta1
        g0 = jnp.exp(-(d0 * d0) * inv_two_s2) * inv_norm
        g1 = jnp.exp(-(d1 * d1) * inv_two_s2) * inv_norm
        dist = 0.5 * (g0 + g1)                                               # (1, Npix)

        sim = (sim_max * dist) * p_zero + sim_gap * p_one
        ctx = sim - jnp.mean(sim, axis=1, keepdims=True)
        ctx_c = ctx - jnp.mean(ctx, axis=1, keepdims=True)                   # matches torch.std centering
        std = jnp.sqrt(jnp.sum(ctx_c * ctx_c, axis=1, keepdims=True) *
                       (1.0 / float(npx - 1))) + 1e-5                        # unbiased std + 1e-5
        ctx = ctx * pl.reciprocal(std, approx=True)
        ctx = ctx * p_w + p_b
        ctx = sigmoid(ctx)                                                   # (1, Npix)

        out_ref[b] = f * ctx
        ctx_ref[b] = ctx                                                     # (1, Npix) — broadcast in wrapper


# ---------------------------------------------------------------------------
# Module wrapper (parameters mirror the PyTorch defaults)
# ---------------------------------------------------------------------------
class GuideBlockPallas:
    def __init__(self, in_c_x, in_c_skip, out_c, kernel=3, pad=1,
                 key=jax.random.PRNGKey(42)):
        assert kernel == 3 and pad == 1, "reference GuideBlock uses 3x3 / pad=1"
        ks = jax.random.split(key, 5)

        def conv_init(k, c_o, c_i, ksz):
            bound = 1.0 / np.sqrt(c_i * ksz * ksz)
            return jax.random.uniform(k, (c_o, c_i, ksz, ksz), jnp.float32,
                                      -bound, bound)

        self.out_c = out_c
        self.w_1x1 = conv_init(ks[0], out_c, in_c_x, 1).reshape(out_c, in_c_x)

        # Per-tap weight layout (9, c_out, c_in), tap index t = ki*3 + kj.
        w_s1 = conv_init(ks[1], out_c, in_c_skip, kernel)
        w_s2 = conv_init(ks[2], out_c, out_c, kernel)
        self.ws1 = jnp.asarray(w_s1.reshape(out_c, in_c_skip, 9).transpose(2, 0, 1))
        self.ws2 = jnp.asarray(w_s2.reshape(out_c, out_c, 9).transpose(2, 0, 1))

        w_att = conv_init(ks[3], 2, out_c * 2, 1).reshape(2, out_c * 2)
        self.w_att_x = jnp.asarray(w_att[:, :out_c])
        self.w_att_s = jnp.asarray(w_att[:, out_c:])

        # PRM params (PyTorch init): theta ~ U[0,1), scale=1, weight=0, bias=1, one=1, zero=0
        theta = jax.random.uniform(ks[4], (2,), jnp.float32)
        self.prm_scalars = jnp.concatenate(
            [theta, jnp.array([1.0, 0.0, 1.0, 1.0, 0.0, 0.0], jnp.float32)])
        # layout: [theta0, theta1, scale, weight, bias, one, zero, pad]

    def __call__(self, x, skip_x):
        B, c_skip, H, W = skip_x.shape
        _, c_x, Hx, Wx = x.shape
        npx = H * W
        c_out = self.out_c

        ut = _upsample_ut(Hx, Wx, H, W)          # cached (Hx*Wx, Npix)
        masks = _tap_masks(H, W, B)              # cached (9, B*Npix)
        shifts = _tap_shifts(H, W, B)

        x_flat = x.reshape(B, c_x, Hx * Wx)
        skip_flat = skip_x.reshape(B, c_skip, npx)

        kern = functools.partial(_guide_block_kernel, H=H, W=W, B=B,
                                 shifts=shifts, eps=1e-5, slope=0.01)
        vmem = pl.BlockSpec(memory_space=pltpu.MemorySpace.VMEM)
        smem = pl.BlockSpec(memory_space=pltpu.MemorySpace.SMEM)

        out, ctx = pl.pallas_call(
            kern,
            out_shape=(jax.ShapeDtypeStruct((B, c_out, npx), jnp.float32),
                       jax.ShapeDtypeStruct((B, 1, npx), jnp.float32)),
            in_specs=[vmem] * 9 + [smem],
            out_specs=(vmem, vmem),
        )(x_flat, skip_flat, ut, self.w_1x1, self.ws1, self.ws2, masks,
          self.w_att_x, self.w_att_s, self.prm_scalars)

        out = out.reshape(B, c_out, H, W)
        ctx = jnp.broadcast_to(ctx.reshape(B, 1, H, W), (B, c_out, H, W))
        return out, ctx


if __name__ == "__main__":
    # Decoder-style shapes: low-res x (B, 8, 8, 8), skip (B, 4, 16, 16), out_c = 8.
    key = jax.random.PRNGKey(0)
    kx, ks = jax.random.split(key)
    x = jax.random.normal(kx, (2, 8, 8, 8), dtype=jnp.float32)
    skip = jax.random.normal(ks, (2, 4, 16, 16), dtype=jnp.float32)

    block = GuideBlockPallas(in_c_x=8, in_c_skip=4, out_c=8)
    out, ctx = block(x, skip)
    out, ctx = jax.block_until_ready((out, ctx))

    assert out.shape == (2, 8, 16, 16), out.shape
    assert ctx.shape == (2, 8, 16, 16), ctx.shape
    print("KERNEL_OK")
</pallas_src>

<mosaic_0001>
module attributes {stable_mosaic.version = 11 : i64} {
  func.func @_guide_block_kernel(%arg0: memref<2x8x64xf32, #tpu.memory_space<vmem>>, %arg1: memref<2x4x256xf32, #tpu.memory_space<vmem>>, %arg2: memref<64x256xf32, #tpu.memory_space<vmem>>, %arg3: memref<8x8xf32, #tpu.memory_space<vmem>>, %arg4: memref<9x8x4xf32, #tpu.memory_space<vmem>>, %arg5: memref<9x8x8xf32, #tpu.memory_space<vmem>>, %arg6: memref<9x512xf32, #tpu.memory_space<vmem>>, %arg7: memref<2x8xf32, #tpu.memory_space<vmem>>, %arg8: memref<2x8xf32, #tpu.memory_space<vmem>>, %arg9: memref<8xf32, #tpu.memory_space<smem>>, %arg10: memref<2x8x256xf32, #tpu.memory_space<vmem>>, %arg11: memref<2x1x256xf32, #tpu.memory_space<vmem>>) attributes {dimension_semantics = [], scalar_prefetch = 0 : i64, scratch_operands = 0 : i64, tpu.core_type = #tpu.core_type<tc>} {
    %c0 = arith.constant 0 : index
    %0 = memref.load %arg9[%c0] : memref<8xf32, #tpu.memory_space<smem>>
    %c1 = arith.constant 1 : index
    %1 = memref.load %arg9[%c1] : memref<8xf32, #tpu.memory_space<smem>>
    %c2 = arith.constant 2 : index
    %2 = memref.load %arg9[%c2] : memref<8xf32, #tpu.memory_space<smem>>
    %c3 = arith.constant 3 : index
    %3 = memref.load %arg9[%c3] : memref<8xf32, #tpu.memory_space<smem>>
    %c4 = arith.constant 4 : index
    %4 = memref.load %arg9[%c4] : memref<8xf32, #tpu.memory_space<smem>>
    %c5 = arith.constant 5 : index
    %5 = memref.load %arg9[%c5] : memref<8xf32, #tpu.memory_space<smem>>
    %c6 = arith.constant 6 : index
    %6 = memref.load %arg9[%c6] : memref<8xf32, #tpu.memory_space<smem>>
    %cst = arith.constant 2.000000e+00 : f32
    %7 = arith.mulf %cst, %2 : f32
    %8 = arith.mulf %7, %2 : f32
    %cst_0 = arith.constant 1.000000e+00 : f32
    %9 = arith.divf %cst_0, %8 : f32
    %cst_1 = arith.constant 2.50662827 : f32
    %10 = arith.mulf %2, %cst_1 : f32
    %cst_2 = arith.constant 1.000000e+00 : f32
    %11 = arith.divf %cst_2, %10 : f32
    %c0_3 = arith.constant 0 : index
    %c0_4 = arith.constant 0 : index
    %12 = vector.load %arg2[%c0_3, %c0_4] : memref<64x256xf32, #tpu.memory_space<vmem>>, vector<64x256xf32>
    %c0_5 = arith.constant 0 : index
    %c0_6 = arith.constant 0 : index
    %13 = vector.load %arg3[%c0_5, %c0_6] : memref<8x8xf32, #tpu.memory_space<vmem>>, vector<8x8xf32>
    %c0_7 = arith.constant 0 : index
    %c0_8 = arith.constant 0 : index
    %14 = vector.load %arg7[%c0_7, %c0_8] : memref<2x8xf32, #tpu.memory_space<vmem>>, vector<2x8xf32>
    %c0_9 = arith.constant 0 : index
    %c0_10 = arith.constant 0 : index
    %15 = vector.load %arg8[%c0_9, %c0_10] : memref<2x8xf32, #tpu.memory_space<vmem>>, vector<2x8xf32>
    %c0_11 = arith.constant 0 : index
    %c0_12 = arith.constant 0 : index
    %16 = vector.load %arg6[%c0_11, %c0_12] : memref<9x512xf32, #tpu.memory_space<vmem>>, vector<9x512xf32>
    %c0_13 = arith.constant 0 : index
    %c0_14 = arith.constant 0 : index
    %c0_15 = arith.constant 0 : index
    %17 = vector.load %arg0[%c0_13, %c0_14, %c0_15] : memref<2x8x64xf32, #tpu.memory_space<vmem>>, vector<1x8x64xf32>
    %18 = vector.shape_cast %17 : vector<1x8x64xf32> to vector<8x64xf32>
    %cst_16 = arith.constant dense<0.000000e+00> : vector<8x64xf32>
    %19 = tpu.matmul %13, %18, %cst_16 {dimension_numbers = #tpu.dot_dimension_numbers<[1], [0], [0], [1], [0, 0, 1, 1], [], []>} : vector<8x8xf32>, vector<8x64xf32>, vector<8x64xf32> -> vector<8x64xf32>
    %cst_17 = arith.constant dense<0.000000e+00> : vector<8x256xf32>
    %20 = tpu.matmul %19, %12, %cst_17 {dimension_numbers = #tpu.dot_dimension_numbers<[1], [0], [0], [1], [0, 0, 1, 1], [], []>} : vector<8x64xf32>, vector<64x256xf32>, vector<8x256xf32> -> vector<8x256xf32>
    %c1_18 = arith.constant 1 : index
    %c0_19 = arith.constant 0 : index
    %c0_20 = arith.constant 0 : index
    %21 = vector.load %arg0[%c1_18, %c0_19, %c0_20] : memref<2x8x64xf32, #tpu.memory_space<vmem>>, vector<1x8x64xf32>
    %22 = vector.shape_cast %21 : vector<1x8x64xf32> to vector<8x64xf32>
    %cst_21 = arith.constant dense<0.000000e+00> : vector<8x64xf32>
    %23 = tpu.matmul %13, %22, %cst_21 {dimension_numbers = #tpu.dot_dimension_numbers<[1], [0], [0], [1], [0, 0, 1, 1], [], []>} : vector<8x8xf32>, vector<8x64xf32>, vector<8x64xf32> -> vector<8x64xf32>
    %cst_22 = arith.constant dense<0.000000e+00> : vector<8x256xf32>
    %24 = tpu.matmul %23, %12, %cst_22 {dimension_numbers = #tpu.dot_dimension_numbers<[1], [0], [0], [1], [0, 0, 1, 1], [], []>} : vector<8x64xf32>, vector<64x256xf32>, vector<8x256xf32> -> vector<8x256xf32>
    %25 = tpu.concatenate %20, %24 in 1 : vector<8x256xf32>, vector<8x256xf32> -> vector<8x512xf32>
    %c0_23 = arith.constant 0 : index
    %c0_24 = arith.constant 0 : index
    %c0_25 = arith.constant 0 : index
    %26 = vector.load %arg1[%c0_23, %c0_24, %c0_25] : memref<2x4x256xf32, #tpu.memory_space<vmem>>, vector<1x4x256xf32>
    %27 = vector.shape_cast %26 : vector<1x4x256xf32> to vector<4x256xf32>
    %c1_26 = arith.constant 1 : index
    %c0_27 = arith.constant 0 : index
    %c0_28 = arith.constant 0 : index
    %28 = vector.load %arg1[%c1_26, %c0_27, %c0_28] : memref<2x4x256xf32, #tpu.memory_space<vmem>>, vector<1x4x256xf32>
    %29 = vector.shape_cast %28 : vector<1x4x256xf32> to vector<4x256xf32>
    %30 = tpu.concatenate %27, %29 in 1 : vector<4x256xf32>, vector<4x256xf32> -> vector<4x512xf32>
    %c17_i32 = arith.constant 17 : i32
    %31 = tpu.dynamic_rotate %30 by %c17_i32 dim 1 : vector<4x512xf32>, i32 -> vector<4x512xf32>
    %32 = vector.extract_strided_slice %16 {offsets = [0, 0], sizes = [1, 512], strides = [1, 1]} : vector<9x512xf32> to vector<1x512xf32>
    %33 = vector.broadcast %32 : vector<1x512xf32> to vector<4x512xf32>
    %34 = arith.mulf %33, %31 : vector<4x512xf32>
    %c0_29 = arith.constant 0 : index
    %c0_30 = arith.constant 0 : index
    %c0_31 = arith.constant 0 : index
    %35 = vector.load %arg4[%c0_29, %c0_30, %c0_31] : memref<9x8x4xf32, #tpu.memory_space<vmem>>, vector<1x8x4xf32>
    %36 = vector.shape_cast %35 : vector<1x8x4xf32> to vector<8x4xf32>
    %cst_32 = arith.constant dense<0.000000e+00> : vector<8x512xf32>
    %37 = tpu.matmul %36, %34, %cst_32 {dimension_numbers = #tpu.dot_dimension_numbers<[1], [0], [0], [1], [0, 0, 1, 1], [], []>} : vector<8x4xf32>, vector<4x512xf32>, vector<8x512xf32> -> vector<8x512xf32>
    %c16_i32 = arith.constant 16 : i32
    %38 = tpu.dynamic_rotate %30 by %c16_i32 dim 1 : vector<4x512xf32>, i32 -> vector<4x512xf32>
    %39 = vector.extract_strided_slice %16 {offsets = [1, 0], sizes = [1, 512], strides = [1, 1]} : vector<9x512xf32> to vector<1x512xf32>
    %40 = vector.broadcast %39 : vector<1x512xf32> to vector<4x512xf32>
    %41 = arith.mulf %40, %38 : vector<4x512xf32>
    %c1_33 = arith.constant 1 : index
    %c0_34 = arith.constant 0 : index
    %c0_35 = arith.constant 0 : index
    %42 = vector.load %arg4[%c1_33, %c0_34, %c0_35] : memref<9x8x4xf32, #tpu.memory_space<vmem>>, vector<1x8x4xf32>
    %43 = vector.shape_cast %42 : vector<1x8x4xf32> to vector<8x4xf32>
    %cst_36 = arith.constant dense<0.000000e+00> : vector<8x512xf32>
    %44 = tpu.matmul %43, %41, %cst_36 {dimension_numbers = #tpu.dot_dimension_numbers<[1], [0], [0], [1], [0, 0, 1, 1], [], []>} : vector<8x4xf32>, vector<4x512xf32>, vector<8x512xf32> -> vector<8x512xf32>
    %45 = arith.addf %37, %44 : vector<8x512xf32>
    %c15_i32 = arith.constant 15 : i32
    %46 = tpu.dynamic_rotate %30 by %c15_i32 dim 1 : vector<4x512xf32>, i32 -> vector<4x512xf32>
    %47 = vector.extract_strided_slice %16 {offsets = [2, 0], sizes = [1, 512], strides = [1, 1]} : vector<9x512xf32> to vector<1x512xf32>
    %48 = vector.broadcast %47 : vector<1x512xf32> to vector<4x512xf32>
    %49 = arith.mulf %48, %46 : vector<4x512xf32>
    %c2_37 = arith.constant 2 : index
    %c0_38 = arith.constant 0 : index
    %c0_39 = arith.constant 0 : index
    %50 = vector.load %arg4[%c2_37, %c0_38, %c0_39] : memref<9x8x4xf32, #tpu.memory_space<vmem>>, vector<1x8x4xf32>
    %51 = vector.shape_cast %50 : vector<1x8x4xf32> to vector<8x4xf32>
    %cst_40 = arith.constant dense<0.000000e+00> : vector<8x512xf32>
    %52 = tpu.matmul %51, %49, %cst_40 {dimension_numbers = #tpu.dot_dimension_numbers<[1], [0], [0], [1], [0, 0, 1, 1], [], []>} : vector<8x4xf32>, vector<4x512xf32>, vector<8x512xf32> -> vector<8x512xf32>
    %53 = arith.addf %45, %52 : vector<8x512xf32>
    %c1_i32 = arith.constant 1 : i32
    %54 = tpu.dynamic_rotate %30 by %c1_i32 dim 1 : vector<4x512xf32>, i32 -> vector<4x512xf32>
    %55 = vector.extract_strided_slice %16 {offsets = [3, 0], sizes = [1, 512], strides = [1, 1]} : vector<9x512xf32> to vector<1x512xf32>
    %56 = vector.broadcast %55 : vector<1x512xf32> to vector<4x512xf32>
    %57 = arith.mulf %56, %54 : vector<4x512xf32>
    %c3_41 = arith.constant 3 : index
    %c0_42 = arith.constant 0 : index
    %c0_43 = arith.constant 0 : index
    %58 = vector.load %arg4[%c3_41, %c0_42, %c0_43] : memref<9x8x4xf32, #tpu.memory_space<vmem>>, vector<1x8x4xf32>
    %59 = vector.shape_cast %58 : vector<1x8x4xf32> to vector<8x4xf32>
    %cst_44 = arith.constant dense<0.000000e+00> : vector<8x512xf32>
    %60 = tpu.matmul %59, %57, %cst_44 {dimension_numbers = #tpu.dot_dimension_numbers<[1], [0], [0], [1], [0, 0, 1, 1], [], []>} : vector<8x4xf32>, vector<4x512xf32>, vector<8x512xf32> -> vector<8x512xf32>
    %61 = arith.addf %53, %60 : vector<8x512xf32>
    %62 = vector.extract_strided_slice %16 {offsets = [4, 0], sizes = [1, 512], strides = [1, 1]} : vector<9x512xf32> to vector<1x512xf32>
    %63 = vector.broadcast %62 : vector<1x512xf32> to vector<4x512xf32>
    %64 = arith.mulf %63, %30 : vector<4x512xf32>
    %c4_45 = arith.constant 4 : index
    %c0_46 = arith.constant 0 : index
    %c0_47 = arith.constant 0 : index
    %65 = vector.load %arg4[%c4_45, %c0_46, %c0_47] : memref<9x8x4xf32, #tpu.memory_space<vmem>>, vector<1x8x4xf32>
    %66 = vector.shape_cast %65 : vector<1x8x4xf32> to vector<8x4xf32>
    %cst_48 = arith.constant dense<0.000000e+00> : vector<8x512xf32>
    %67 = tpu.matmul %66, %64, %cst_48 {dimension_numbers = #tpu.dot_dimension_numbers<[1], [0], [0], [1], [0, 0, 1, 1], [], []>} : vector<8x4xf32>, vector<4x512xf32>, vector<8x512xf32> -> vector<8x512xf32>
    %68 = arith.addf %61, %67 : vector<8x512xf32>
    %c511_i32 = arith.constant 511 : i32
    %69 = tpu.dynamic_rotate %30 by %c511_i32 dim 1 : vector<4x512xf32>, i32 -> vector<4x512xf32>
    %70 = vector.extract_strided_slice %16 {offsets = [5, 0], sizes = [1, 512], strides = [1, 1]} : vector<9x512xf32> to vector<1x512xf32>
    %71 = vector.broadcast %70 : vector<1x512xf32> to vector<4x512xf32>
    %72 = arith.mulf %71, %69 : vector<4x512xf32>
    %c5_49 = arith.constant 5 : index
    %c0_50 = arith.constant 0 : index
    %c0_51 = arith.constant 0 : index
    %73 = vector.load %arg4[%c5_49, %c0_50, %c0_51] : memref<9x8x4xf32, #tpu.memory_space<vmem>>, vector<1x8x4xf32>
    %74 = vector.shape_cast %73 : vector<1x8x4xf32> to vector<8x4xf32>
    %cst_52 = arith.constant dense<0.000000e+00> : vector<8x512xf32>
    %75 = tpu.matmul %74, %72, %cst_52 {dimension_numbers = #tpu.dot_dimension_numbers<[1], [0], [0], [1], [0, 0, 1, 1], [], []>} : vector<8x4xf32>, vector<4x512xf32>, vector<8x512xf32> -> vector<8x512xf32>
    %76 = arith.addf %68, %75 : vector<8x512xf32>
    %c497_i32 = arith.constant 497 : i32
    %77 = tpu.dynamic_rotate %30 by %c497_i32 dim 1 : vector<4x512xf32>, i32 -> vector<4x512xf32>
    %78 = vector.extract_strided_slice %16 {offsets = [6, 0], sizes = [1, 512], strides = [1, 1]} : vector<9x512xf32> to vector<1x512xf32>
    %79 = vector.broadcast %78 : vector<1x512xf32> to vector<4x512xf32>
    %80 = arith.mulf %79, %77 : vector<4x512xf32>
    %c6_53 = arith.constant 6 : index
    %c0_54 = arith.constant 0 : index
    %c0_55 = arith.constant 0 : index
    %81 = vector.load %arg4[%c6_53, %c0_54, %c0_55] : memref<9x8x4xf32, #tpu.memory_space<vmem>>, vector<1x8x4xf32>
    %82 = vector.shape_cast %81 : vector<1x8x4xf32> to vector<8x4xf32>
    %cst_56 = arith.constant dense<0.000000e+00> : vector<8x512xf32>
    %83 = tpu.matmul %82, %80, %cst_56 {dimension_numbers = #tpu.dot_dimension_numbers<[1], [0], [0], [1], [0, 0, 1, 1], [], []>} : vector<8x4xf32>, vector<4x512xf32>, vector<8x512xf32> -> vector<8x512xf32>
    %84 = arith.addf %76, %83 : vector<8x512xf32>
    %c496_i32 = arith.constant 496 : i32
    %85 = tpu.dynamic_rotate %30 by %c496_i32 dim 1 : vector<4x512xf32>, i32 -> vector<4x512xf32>
    %86 = vector.extract_strided_slice %16 {offsets = [7, 0], sizes = [1, 512], strides = [1, 1]} : vector<9x512xf32> to vector<1x512xf32>
    %87 = vector.broadcast %86 : vector<1x512xf32> to vector<4x512xf32>
    %88 = arith.mulf %87, %85 : vector<4x512xf32>
    %c7 = arith.constant 7 : index
    %c0_57 = arith.constant 0 : index
    %c0_58 = arith.constant 0 : index
    %89 = vector.load %arg4[%c7, %c0_57, %c0_58] : memref<9x8x4xf32, #tpu.memory_space<vmem>>, vector<1x8x4xf32>
    %90 = vector.shape_cast %89 : vector<1x8x4xf32> to vector<8x4xf32>
    %cst_59 = arith.constant dense<0.000000e+00> : vector<8x512xf32>
    %91 = tpu.matmul %90, %88, %cst_59 {dimension_numbers = #tpu.dot_dimension_numbers<[1], [0], [0], [1], [0, 0, 1, 1], [], []>} : vector<8x4xf32>, vector<4x512xf32>, vector<8x512xf32> -> vector<8x512xf32>
    %92 = arith.addf %84, %91 : vector<8x512xf32>
    %c495_i32 = arith.constant 495 : i32
    %93 = tpu.dynamic_rotate %30 by %c495_i32 dim 1 : vector<4x512xf32>, i32 -> vector<4x512xf32>
    %94 = vector.extract_strided_slice %16 {offsets = [8, 0], sizes = [1, 512], strides = [1, 1]} : vector<9x512xf32> to vector<1x512xf32>
    %95 = vector.broadcast %94 : vector<1x512xf32> to vector<4x512xf32>
    %96 = arith.mulf %95, %93 : vector<4x512xf32>
    %c8 = arith.constant 8 : index
    %c0_60 = arith.constant 0 : index
    %c0_61 = arith.constant 0 : index
    %97 = vector.load %arg4[%c8, %c0_60, %c0_61] : memref<9x8x4xf32, #tpu.memory_space<vmem>>, vector<1x8x4xf32>
    %98 = vector.shape_cast %97 : vector<1x8x4xf32> to vector<8x4xf32>
    %cst_62 = arith.constant dense<0.000000e+00> : vector<8x512xf32>
    %99 = tpu.matmul %98, %96, %cst_62 {dimension_numbers = #tpu.dot_dimension_numbers<[1], [0], [0], [1], [0, 0, 1, 1], [], []>} : vector<8x4xf32>, vector<4x512xf32>, vector<8x512xf32> -> vector<8x512xf32>
    %100 = arith.addf %92, %99 : vector<8x512xf32>
    %101 = vector.extract_strided_slice %100 {offsets = [0, 0], sizes = [8, 256], strides = [1, 1]} : vector<8x512xf32> to vector<8x256xf32>
    %cst_63 = arith.constant dense<0.000000e+00> : vector<8xf32>
    %102 = vector.multi_reduction <add>, %101, %cst_63 [1] : vector<8x256xf32> to vector<8xf32>
    %103 = vector.shape_cast %102 : vector<8xf32> to vector<8x1xf32>
    %cst_64 = arith.constant 2.560000e+02 : f32
    %104 = vector.broadcast %cst_64 : f32 to vector<8x1xf32>
    %105 = arith.divf %103, %104 : vector<8x1xf32>
    %106 = vector.broadcast %105 : vector<8x1xf32> to vector<8x256xf32>
    %107 = arith.subf %101, %106 : vector<8x256xf32>
    %108 = arith.mulf %107, %107 : vector<8x256xf32>
    %cst_65 = arith.constant dense<0.000000e+00> : vector<8xf32>
    %109 = vector.multi_reduction <add>, %108, %cst_65 [1] : vector<8x256xf32> to vector<8xf32>
    %110 = vector.shape_cast %109 : vector<8xf32> to vector<8x1xf32>
    %cst_66 = arith.constant 2.560000e+02 : f32
    %111 = vector.broadcast %cst_66 : f32 to vector<8x1xf32>
    %112 = arith.divf %110, %111 : vector<8x1xf32>
    %cst_67 = arith.constant 9.99999974E-6 : f32
    %113 = vector.broadcast %cst_67 : f32 to vector<8x1xf32>
    %114 = arith.addf %112, %113 : vector<8x1xf32>
    %115 = math.rsqrt %114 : vector<8x1xf32>
    %116 = vector.broadcast %115 : vector<8x1xf32> to vector<8x256xf32>
    %117 = arith.mulf %107, %116 : vector<8x256xf32>
    %118 = vector.extract_strided_slice %100 {offsets = [0, 256], sizes = [8, 256], strides = [1, 1]} : vector<8x512xf32> to vector<8x256xf32>
    %cst_68 = arith.constant dense<0.000000e+00> : vector<8xf32>
    %119 = vector.multi_reduction <add>, %118, %cst_68 [1] : vector<8x256xf32> to vector<8xf32>
    %120 = vector.shape_cast %119 : vector<8xf32> to vector<8x1xf32>
    %cst_69 = arith.constant 2.560000e+02 : f32
    %121 = vector.broadcast %cst_69 : f32 to vector<8x1xf32>
    %122 = arith.divf %120, %121 : vector<8x1xf32>
    %123 = vector.broadcast %122 : vector<8x1xf32> to vector<8x256xf32>
    %124 = arith.subf %118, %123 : vector<8x256xf32>
    %125 = arith.mulf %124, %124 : vector<8x256xf32>
    %cst_70 = arith.constant dense<0.000000e+00> : vector<8xf32>
    %126 = vector.multi_reduction <add>, %125, %cst_70 [1] : vector<8x256xf32> to vector<8xf32>
    %127 = vector.shape_cast %126 : vector<8xf32> to vector<8x1xf32>
    %cst_71 = arith.constant 2.560000e+02 : f32
    %128 = vector.broadcast %cst_71 : f32 to vector<8x1xf32>
    %129 = arith.divf %127, %128 : vector<8x1xf32>
    %cst_72 = arith.constant 9.99999974E-6 : f32
    %130 = vector.broadcast %cst_72 : f32 to vector<8x1xf32>
    %131 = arith.addf %129, %130 : vector<8x1xf32>
    %132 = math.rsqrt %131 : vector<8x1xf32>
    %133 = vector.broadcast %132 : vector<8x1xf32> to vector<8x256xf32>
    %134 = arith.mulf %124, %133 : vector<8x256xf32>
    %135 = tpu.concatenate %117, %134 in 1 : vector<8x256xf32>, vector<8x256xf32> -> vector<8x512xf32>
    %cst_73 = arith.constant 0.000000e+00 : f32
    %136 = vector.broadcast %cst_73 : f32 to vector<8x512xf32>
    %137 = arith.cmpf oge, %135, %136 : vector<8x512xf32>
    %cst_74 = arith.constant 0.00999999977 : f32
    %138 = vector.broadcast %cst_74 : f32 to vector<8x512xf32>
    %139 = arith.mulf %138, %135 : vector<8x512xf32>
    %140 = arith.select %137, %135, %139 : vector<8x512xi1>, vector<8x512xf32>
    %c17_i32_75 = arith.constant 17 : i32
    %141 = tpu.dynamic_rotate %140 by %c17_i32_75 dim 1 : vector<8x512xf32>, i32 -> vector<8x512xf32>
    %142 = vector.extract_strided_slice %16 {offsets = [0, 0], sizes = [1, 512], strides = [1, 1]} : vector<9x512xf32> to vector<1x512xf32>
    %143 = vector.broadcast %142 : vector<1x512xf32> to vector<8x512xf32>
    %144 = arith.mulf %143, %141 : vector<8x512xf32>
    %c0_76 = arith.constant 0 : index
    %c0_77 = arith.constant 0 : index
    %c0_78 = arith.constant 0 : index
    %145 = vector.load %arg5[%c0_76, %c0_77, %c0_78] : memref<9x8x8xf32, #tpu.memory_space<vmem>>, vector<1x8x8xf32>
    %146 = vector.shape_cast %145 : vector<1x8x8xf32> to vector<8x8xf32>
    %cst_79 = arith.constant dense<0.000000e+00> : vector<8x512xf32>
    %147 = tpu.matmul %146, %144, %cst_79 {dimension_numbers = #tpu.dot_dimension_numbers<[1], [0], [0], [1], [0, 0, 1, 1], [], []>} : vector<8x8xf32>, vector<8x512xf32>, vector<8x512xf32> -> vector<8x512xf32>
    %c16_i32_80 = arith.constant 16 : i32
    %148 = tpu.dynamic_rotate %140 by %c16_i32_80 dim 1 : vector<8x512xf32>, i32 -> vector<8x512xf32>
    %149 = vector.extract_strided_slice %16 {offsets = [1, 0], sizes = [1, 512], strides = [1, 1]} : vector<9x512xf32> to vector<1x512xf32>
    %150 = vector.broadcast %149 : vector<1x512xf32> to vector<8x512xf32>
    %151 = arith.mulf %150, %148 : vector<8x512xf32>
    %c1_81 = arith.constant 1 : index
    %c0_82 = arith.constant 0 : index
    %c0_83 = arith.constant 0 : index
    %152 = vector.load %arg5[%c1_81, %c0_82, %c0_83] : memref<9x8x8xf32, #tpu.memory_space<vmem>>, vector<1x8x8xf32>
    %153 = vector.shape_cast %152 : vector<1x8x8xf32> to vector<8x8xf32>
    %cst_84 = arith.constant dense<0.000000e+00> : vector<8x512xf32>
    %154 = tpu.matmul %153, %151, %cst_84 {dimension_numbers = #tpu.dot_dimension_numbers<[1], [0], [0], [1], [0, 0, 1, 1], [], []>} : vector<8x8xf32>, vector<8x512xf32>, vector<8x512xf32> -> vector<8x512xf32>
    %155 = arith.addf %147, %154 : vector<8x512xf32>
    %c15_i32_85 = arith.constant 15 : i32
    %156 = tpu.dynamic_rotate %140 by %c15_i32_85 dim 1 : vector<8x512xf32>, i32 -> vector<8x512xf32>
    %157 = vector.extract_strided_slice %16 {offsets = [2, 0], sizes = [1, 512], strides = [1, 1]} : vector<9x512xf32> to vector<1x512xf32>
    %158 = vector.broadcast %157 : vector<1x512xf32> to vector<8x512xf32>
    %159 = arith.mulf %158, %156 : vector<8x512xf32>
    %c2_86 = arith.constant 2 : index
    %c0_87 = arith.constant 0 : index
    %c0_88 = arith.constant 0 : index
    %160 = vector.load %arg5[%c2_86, %c0_87, %c0_88] : memref<9x8x8xf32, #tpu.memory_space<vmem>>, vector<1x8x8xf32>
    %161 = vector.shape_cast %160 : vector<1x8x8xf32> to vector<8x8xf32>
    %cst_89 = arith.constant dense<0.000000e+00> : vector<8x512xf32>
    %162 = tpu.matmul %161, %159, %cst_89 {dimension_numbers = #tpu.dot_dimension_numbers<[1], [0], [0], [1], [0, 0, 1, 1], [], []>} : vector<8x8xf32>, vector<8x512xf32>, vector<8x512xf32> -> vector<8x512xf32>
    %163 = arith.addf %155, %162 : vector<8x512xf32>
    %c1_i32_90 = arith.constant 1 : i32
    %164 = tpu.dynamic_rotate %140 by %c1_i32_90 dim 1 : vector<8x512xf32>, i32 -> vector<8x512xf32>
    %165 = vector.extract_strided_slice %16 {offsets = [3, 0], sizes = [1, 512], strides = [1, 1]} : vector<9x512xf32> to vector<1x512xf32>
    %166 = vector.broadcast %165 : vector<1x512xf32> to vector<8x512xf32>
    %167 = arith.mulf %166, %164 : vector<8x512xf32>
    %c3_91 = arith.constant 3 : index
    %c0_92 = arith.constant 0 : index
    %c0_93 = arith.constant 0 : index
    %168 = vector.load %arg5[%c3_91, %c0_92, %c0_93] : memref<9x8x8xf32, #tpu.memory_space<vmem>>, vector<1x8x8xf32>
    %169 = vector.shape_cast %168 : vector<1x8x8xf32> to vector<8x8xf32>
    %cst_94 = arith.constant dense<0.000000e+00> : vector<8x512xf32>
    %170 = tpu.matmul %169, %167, %cst_94 {dimension_numbers = #tpu.dot_dimension_numbers<[1], [0], [0], [1], [0, 0, 1, 1], [], []>} : vector<8x8xf32>, vector<8x512xf32>, vector<8x512xf32> -> vector<8x512xf32>
    %171 = arith.addf %163, %170 : vector<8x512xf32>
    %172 = vector.extract_strided_slice %16 {offsets = [4, 0], sizes = [1, 512], strides = [1, 1]} : vector<9x512xf32> to vector<1x512xf32>
    %173 = vector.broadcast %172 : vector<1x512xf32> to vector<8x512xf32>
    %174 = arith.mulf %173, %140 : vector<8x512xf32>
    %c4_95 = arith.constant 4 : index
    %c0_96 = arith.constant 0 : index
    %c0_97 = arith.constant 0 : index
    %175 = vector.load %arg5[%c4_95, %c0_96, %c0_97] : memref<9x8x8xf32, #tpu.memory_space<vmem>>, vector<1x8x8xf32>
    %176 = vector.shape_cast %175 : vector<1x8x8xf32> to vector<8x8xf32>
    %cst_98 = arith.constant dense<0.000000e+00> : vector<8x512xf32>
    %177 = tpu.matmul %176, %174, %cst_98 {dimension_numbers = #tpu.dot_dimension_numbers<[1], [0], [0], [1], [0, 0, 1, 1], [], []>} : vector<8x8xf32>, vector<8x512xf32>, vector<8x512xf32> -> vector<8x512xf32>
    %178 = arith.addf %171, %177 : vector<8x512xf32>
    %c511_i32_99 = arith.constant 511 : i32
    %179 = tpu.dynamic_rotate %140 by %c511_i32_99 dim 1 : vector<8x512xf32>, i32 -> vector<8x512xf32>
    %180 = vector.extract_strided_slice %16 {offsets = [5, 0], sizes = [1, 512], strides = [1, 1]} : vector<9x512xf32> to vector<1x512xf32>
    %181 = vector.broadcast %180 : vector<1x512xf32> to vector<8x512xf32>
    %182 = arith.mulf %181, %179 : vector<8x512xf32>
    %c5_100 = arith.constant 5 : index
    %c0_101 = arith.constant 0 : index
    %c0_102 = arith.constant 0 : index
    %183 = vector.load %arg5[%c5_100, %c0_101, %c0_102] : memref<9x8x8xf32, #tpu.memory_space<vmem>>, vector<1x8x8xf32>
    %184 = vector.shape_cast %183 : vector<1x8x8xf32> to vector<8x8xf32>
    %cst_103 = arith.constant dense<0.000000e+00> : vector<8x512xf32>
    %185 = tpu.matmul %184, %182, %cst_103 {dimension_numbers = #tpu.dot_dimension_numbers<[1], [0], [0], [1], [0, 0, 1, 1], [], []>} : vector<8x8xf32>, vector<8x512xf32>, vector<8x512xf32> -> vector<8x512xf32>
    %186 = arith.addf %178, %185 : vector<8x512xf32>
    %c497_i32_104 = arith.constant 497 : i32
    %187 = tpu.dynamic_rotate %140 by %c497_i32_104 dim 1 : vector<8x512xf32>, i32 -> vector<8x512xf32>
    %188 = vector.extract_strided_slice %16 {offsets = [6, 0], sizes = [1, 512], strides = [1, 1]} : vector<9x512xf32> to vector<1x512xf32>
    %189 = vector.broadcast %188 : vector<1x512xf32> to vector<8x512xf32>
    %190 = arith.mulf %189, %187 : vector<8x512xf32>
    %c6_105 = arith.constant 6 : index
    %c0_106 = arith.constant 0 : index
    %c0_107 = arith.constant 0 : index
    %191 = vector.load %arg5[%c6_105, %c0_106, %c0_107] : memref<9x8x8xf32, #tpu.memory_space<vmem>>, vector<1x8x8xf32>
    %192 = vector.shape_cast %191 : vector<1x8x8xf32> to vector<8x8xf32>
    %cst_108 = arith.constant dense<0.000000e+00> : vector<8x512xf32>
    %193 = tpu.matmul %192, %190, %cst_108 {dimension_numbers = #tpu.dot_dimension_numbers<[1], [0], [0], [1], [0, 0, 1, 1], [], []>} : vector<8x8xf32>, vector<8x512xf32>, vector<8x512xf32> -> vector<8x512xf32>
    %194 = arith.addf %186, %193 : vector<8x512xf32>
    %c496_i32_109 = arith.constant 496 : i32
    %195 = tpu.dynamic_rotate %140 by %c496_i32_109 dim 1 : vector<8x512xf32>, i32 -> vector<8x512xf32>
    %196 = vector.extract_strided_slice %16 {offsets = [7, 0], sizes = [1, 512], strides = [1, 1]} : vector<9x512xf32> to vector<1x512xf32>
    %197 = vector.broadcast %196 : vector<1x512xf32> to vector<8x512xf32>
    %198 = arith.mulf %197, %195 : vector<8x512xf32>
    %c7_110 = arith.constant 7 : index
    %c0_111 = arith.constant 0 : index
    %c0_112 = arith.constant 0 : index
    %199 = vector.load %arg5[%c7_110, %c0_111, %c0_112] : memref<9x8x8xf32, #tpu.memory_space<vmem>>, vector<1x8x8xf32>
    %200 = vector.shape_cast %199 : vector<1x8x8xf32> to vector<8x8xf32>
    %cst_113 = arith.constant dense<0.000000e+00> : vector<8x512xf32>
    %201 = tpu.matmul %200, %198, %cst_113 {dimension_numbers = #tpu.dot_dimension_numbers<[1], [0], [0], [1], [0, 0, 1, 1], [], []>} : vector<8x8xf32>, vector<8x512xf32>, vector<8x512xf32> -> vector<8x512xf32>
    %202 = arith.addf %194, %201 : vector<8x512xf32>
    %c495_i32_114 = arith.constant 495 : i32
    %203 = tpu.dynamic_rotate %140 by %c495_i32_114 dim 1 : vector<8x512xf32>, i32 -> vector<8x512xf32>
    %204 = vector.extract_strided_slice %16 {offsets = [8, 0], sizes = [1, 512], strides = [1, 1]} : vector<9x512xf32> to vector<1x512xf32>
    %205 = vector.broadcast %204 : vector<1x512xf32> to vector<8x512xf32>
    %206 = arith.mulf %205, %203 : vector<8x512xf32>
    %c8_115 = arith.constant 8 : index
    %c0_116 = arith.constant 0 : index
    %c0_117 = arith.constant 0 : index
    %207 = vector.load %arg5[%c8_115, %c0_116, %c0_117] : memref<9x8x8xf32, #tpu.memory_space<vmem>>, vector<1x8x8xf32>
    %208 = vector.shape_cast %207 : vector<1x8x8xf32> to vector<8x8xf32>
    %cst_118 = arith.constant dense<0.000000e+00> : vector<8x512xf32>
    %209 = tpu.matmul %208, %206, %cst_118 {dimension_numbers = #tpu.dot_dimension_numbers<[1], [0], [0], [1], [0, 0, 1, 1], [], []>} : vector<8x8xf32>, vector<8x512xf32>, vector<8x512xf32> -> vector<8x512xf32>
    %210 = arith.addf %202, %209 : vector<8x512xf32>
    %211 = vector.extract_strided_slice %210 {offsets = [0, 0], sizes = [8, 256], strides = [1, 1]} : vector<8x512xf32> to vector<8x256xf32>
    %cst_119 = arith.constant dense<0.000000e+00> : vector<8xf32>
    %212 = vector.multi_reduction <add>, %211, %cst_119 [1] : vector<8x256xf32> to vector<8xf32>
    %213 = vector.shape_cast %212 : vector<8xf32> to vector<8x1xf32>
    %cst_120 = arith.constant 2.560000e+02 : f32
    %214 = vector.broadcast %cst_120 : f32 to vector<8x1xf32>
    %215 = arith.divf %213, %214 : vector<8x1xf32>
    %216 = vector.broadcast %215 : vector<8x1xf32> to vector<8x256xf32>
    %217 = arith.subf %211, %216 : vector<8x256xf32>
    %218 = arith.mulf %217, %217 : vector<8x256xf32>
    %cst_121 = arith.constant dense<0.000000e+00> : vector<8xf32>
    %219 = vector.multi_reduction <add>, %218, %cst_121 [1] : vector<8x256xf32> to vector<8xf32>
    %220 = vector.shape_cast %219 : vector<8xf32> to vector<8x1xf32>
    %cst_122 = arith.constant 2.560000e+02 : f32
    %221 = vector.broadcast %cst_122 : f32 to vector<8x1xf32>
    %222 = arith.divf %220, %221 : vector<8x1xf32>
    %cst_123 = arith.constant 9.99999974E-6 : f32
    %223 = vector.broadcast %cst_123 : f32 to vector<8x1xf32>
    %224 = arith.addf %222, %223 : vector<8x1xf32>
    %225 = math.rsqrt %224 : vector<8x1xf32>
    %226 = vector.broadcast %225 : vector<8x1xf32> to vector<8x256xf32>
    %227 = arith.mulf %217, %226 : vector<8x256xf32>
    %228 = vector.extract_strided_slice %210 {offsets = [0, 256], sizes = [8, 256], strides = [1, 1]} : vector<8x512xf32> to vector<8x256xf32>
    %cst_124 = arith.constant dense<0.000000e+00> : vector<8xf32>
    %229 = vector.multi_reduction <add>, %228, %cst_124 [1] : vector<8x256xf32> to vector<8xf32>
    %230 = vector.shape_cast %229 : vector<8xf32> to vector<8x1xf32>
    %cst_125 = arith.constant 2.560000e+02 : f32
    %231 = vector.broadcast %cst_125 : f32 to vector<8x1xf32>
    %232 = arith.divf %230, %231 : vector<8x1xf32>
    %233 = vector.broadcast %232 : vector<8x1xf32> to vector<8x256xf32>
    %234 = arith.subf %228, %233 : vector<8x256xf32>
    %235 = arith.mulf %234, %234 : vector<8x256xf32>
    %cst_126 = arith.constant dense<0.000000e+00> : vector<8xf32>
    %236 = vector.multi_reduction <add>, %235, %cst_126 [1] : vector<8x256xf32> to vector<8xf32>
    %237 = vector.shape_cast %236 : vector<8xf32> to vector<8x1xf32>
    %cst_127 = arith.constant 2.560000e+02 : f32
    %238 = vector.broadcast %cst_127 : f32 to vector<8x1xf32>
    %239 = arith.divf %237, %238 : vector<8x1xf32>
    %cst_128 = arith.constant 9.99999974E-6 : f32
    %240 = vector.broadcast %cst_128 : f32 to vector<8x1xf32>
    %241 = arith.addf %239, %240 : vector<8x1xf32>
    %242 = math.rsqrt %241 : vector<8x1xf32>
    %243 = vector.broadcast %242 : vector<8x1xf32> to vector<8x256xf32>
    %244 = arith.mulf %234, %243 : vector<8x256xf32>
    %245 = tpu.concatenate %227, %244 in 1 : vector<8x256xf32>, vector<8x256xf32> -> vector<8x512xf32>
    %cst_129 = arith.constant 0.000000e+00 : f32
    %246 = vector.broadcast %cst_129 : f32 to vector<8x512xf32>
    %247 = arith.cmpf oge, %245, %246 : vector<8x512xf32>
    %cst_130 = arith.constant 0.00999999977 : f32
    %248 = vector.broadcast %cst_130 : f32 to vector<8x512xf32>
    %249 = arith.mulf %248, %245 : vector<8x512xf32>
    %250 = arith.select %247, %245, %249 : vector<8x512xi1>, vector<8x512xf32>
    %cst_131 = arith.constant dense<0.000000e+00> : vector<2x512xf32>
    %251 = tpu.matmul %14, %25, %cst_131 {dimension_numbers = #tpu.dot_dimension_numbers<[1], [0], [0], [1], [0, 0, 1, 1], [], []>} : vector<2x8xf32>, vector<8x512xf32>, vector<2x512xf32> -> vector<2x512xf32>
    %cst_132 = arith.constant dense<0.000000e+00> : vector<2x512xf32>
    %252 = tpu.matmul %15, %250, %cst_132 {dimension_numbers = #tpu.dot_dimension_numbers<[1], [0], [0], [1], [0, 0, 1, 1], [], []>} : vector<2x8xf32>, vector<8x512xf32>, vector<2x512xf32> -> vector<2x512xf32>
    %253 = arith.addf %251, %252 : vector<2x512xf32>
    %cst_133 = arith.constant 0.000000e+00 : f32
    %254 = vector.broadcast %cst_133 : f32 to vector<2x512xf32>
    %255 = arith.subf %254, %253 : vector<2x512xf32>
    %256 = math.exp %255 : vector<2x512xf32>
    %cst_134 = arith.constant 1.000000e+00 : f32
    %257 = vector.broadcast %cst_134 : f32 to vector<2x512xf32>
    %258 = arith.addf %257, %256 : vector<2x512xf32>
    %259 = tpu.reciprocal %258 {approx = true} : vector<2x512xf32> -> vector<2x512xf32>
    %260 = vector.extract_strided_slice %259 {offsets = [0, 0], sizes = [1, 512], strides = [1, 1]} : vector<2x512xf32> to vector<1x512xf32>
    %261 = vector.broadcast %260 : vector<1x512xf32> to vector<8x512xf32>
    %262 = arith.mulf %25, %261 : vector<8x512xf32>
    %263 = vector.extract_strided_slice %259 {offsets = [1, 0], sizes = [1, 512], strides = [1, 1]} : vector<2x512xf32> to vector<1x512xf32>
    %264 = vector.broadcast %263 : vector<1x512xf32> to vector<8x512xf32>
    %265 = arith.mulf %250, %264 : vector<8x512xf32>
    %266 = arith.addf %262, %265 : vector<8x512xf32>
    %267 = tpu.iota {dimensions = array<i32: 1>} : vector<1x256xi32>
    %268 = arith.sitofp %267 : vector<1x256xi32> to vector<1x256xf32>
    %cst_135 = arith.constant 1.600000e+01 : f32
    %269 = vector.broadcast %cst_135 : f32 to vector<1x256xf32>
    %270 = arith.divf %268, %269 : vector<1x256xf32>
    %271 = math.floor %270 : vector<1x256xf32>
    %cst_136 = arith.constant 1.600000e+01 : f32
    %272 = vector.broadcast %cst_136 : f32 to vector<1x256xf32>
    %273 = arith.mulf %271, %272 : vector<1x256xf32>
    %274 = arith.subf %268, %273 : vector<1x256xf32>
    %275 = vector.extract_strided_slice %266 {offsets = [0, 0], sizes = [8, 256], strides = [1, 1]} : vector<8x512xf32> to vector<8x256xf32>
    %cst_137 = arith.constant dense<0.000000e+00> : vector<256xf32>
    %276 = vector.multi_reduction <add>, %275, %cst_137 [0] : vector<8x256xf32> to vector<256xf32>
    %277 = vector.shape_cast %276 : vector<256xf32> to vector<1x256xf32>
    %cst_138 = arith.constant dense<0xFF800000> : vector<1xf32>
    %278 = vector.multi_reduction <maximumf>, %277, %cst_138 [1] : vector<1x256xf32> to vector<1xf32>
    %279 = vector.shape_cast %278 : vector<1xf32> to vector<1x1xf32>
    %280 = vector.broadcast %279 : vector<1x1xf32> to vector<1x256xf32>
    %281 = arith.cmpf oeq, %277, %280 : vector<1x256xf32>
    %cst_139 = arith.constant 2.560000e+02 : f32
    %282 = vector.broadcast %cst_139 : f32 to vector<1x256xf32>
    %283 = arith.select %281, %268, %282 : vector<1x256xi1>, vector<1x256xf32>
    %cst_140 = arith.constant dense<0x7F800000> : vector<1xf32>
    %284 = vector.multi_reduction <minimumf>, %283, %cst_140 [1] : vector<1x256xf32> to vector<1xf32>
    %285 = vector.shape_cast %284 : vector<1xf32> to vector<1x1xf32>
    %cst_141 = arith.constant 1.600000e+01 : f32
    %286 = vector.broadcast %cst_141 : f32 to vector<1x1xf32>
    %287 = arith.divf %285, %286 : vector<1x1xf32>
    %288 = math.floor %287 : vector<1x1xf32>
    %cst_142 = arith.constant 1.600000e+01 : f32
    %289 = vector.broadcast %cst_142 : f32 to vector<1x1xf32>
    %290 = arith.divf %285, %289 : vector<1x1xf32>
    %291 = math.floor %290 : vector<1x1xf32>
    %cst_143 = arith.constant 1.600000e+01 : f32
    %292 = vector.broadcast %cst_143 : f32 to vector<1x1xf32>
    %293 = arith.mulf %288, %292 : vector<1x1xf32>
    %294 = arith.addf %293, %291 : vector<1x1xf32>
    %295 = vector.broadcast %294 : vector<1x1xf32> to vector<1x256xf32>
    %296 = arith.cmpf oeq, %268, %295 : vector<1x256xf32>
    %297 = arith.extui %296 : vector<1x256xi1> to vector<1x256xi32>
    %298 = arith.sitofp %297 : vector<1x256xi32> to vector<1x256xf32>
    %299 = vector.broadcast %298 : vector<1x256xf32> to vector<8x256xf32>
    %300 = arith.mulf %275, %299 : vector<8x256xf32>
    %cst_144 = arith.constant dense<0.000000e+00> : vector<8xf32>
    %301 = vector.multi_reduction <add>, %300, %cst_144 [1] : vector<8x256xf32> to vector<8xf32>
    %302 = vector.shape_cast %301 : vector<8xf32> to vector<8x1xf32>
    %303 = vector.broadcast %302 : vector<8x1xf32> to vector<8x256xf32>
    %304 = arith.mulf %303, %275 : vector<8x256xf32>
    %cst_145 = arith.constant dense<0.000000e+00> : vector<256xf32>
    %305 = vector.multi_reduction <add>, %304, %cst_145 [0] : vector<8x256xf32> to vector<256xf32>
    %306 = vector.shape_cast %305 : vector<256xf32> to vector<1x256xf32>
    %cst_146 = arith.constant dense<0.000000e+00> : vector<8xf32>
    %307 = vector.multi_reduction <add>, %275, %cst_146 [1] : vector<8x256xf32> to vector<8xf32>
    %308 = vector.shape_cast %307 : vector<8xf32> to vector<8x1xf32>
    %cst_147 = arith.constant 2.560000e+02 : f32
    %309 = vector.broadcast %cst_147 : f32 to vector<8x1xf32>
    %310 = arith.divf %308, %309 : vector<8x1xf32>
    %311 = vector.broadcast %310 : vector<8x1xf32> to vector<8x256xf32>
    %312 = arith.mulf %311, %275 : vector<8x256xf32>
    %cst_148 = arith.constant dense<0.000000e+00> : vector<256xf32>
    %313 = vector.multi_reduction <add>, %312, %cst_148 [0] : vector<8x256xf32> to vector<256xf32>
    %314 = vector.shape_cast %313 : vector<256xf32> to vector<1x256xf32>
    %315 = vector.broadcast %288 : vector<1x1xf32> to vector<1x256xf32>
    %316 = arith.subf %271, %315 : vector<1x256xf32>
    %317 = math.absf %316 : vector<1x256xf32>
    %318 = vector.broadcast %0 : f32 to vector<1x256xf32>
    %319 = arith.mulf %317, %318 : vector<1x256xf32>
    %320 = vector.broadcast %291 : vector<1x1xf32> to vector<1x256xf32>
    %321 = arith.subf %274, %320 : vector<1x256xf32>
    %322 = math.absf %321 : vector<1x256xf32>
    %323 = vector.broadcast %1 : f32 to vector<1x256xf32>
    %324 = arith.mulf %322, %323 : vector<1x256xf32>
    %325 = arith.mulf %319, %319 : vector<1x256xf32>
    %cst_149 = arith.constant 0.000000e+00 : f32
    %326 = vector.broadcast %cst_149 : f32 to vector<1x256xf32>
    %327 = arith.subf %326, %325 : vector<1x256xf32>
    %328 = vector.broadcast %9 : f32 to vector<1x256xf32>
    %329 = arith.mulf %327, %328 : vector<1x256xf32>
    %330 = math.exp %329 : vector<1x256xf32>
    %331 = vector.broadcast %11 : f32 to vector<1x256xf32>
    %332 = arith.mulf %330, %331 : vector<1x256xf32>
    %333 = arith.mulf %324, %324 : vector<1x256xf32>
    %cst_150 = arith.constant 0.000000e+00 : f32
    %334 = vector.broadcast %cst_150 : f32 to vector<1x256xf32>
    %335 = arith.subf %334, %333 : vector<1x256xf32>
    %336 = vector.broadcast %9 : f32 to vector<1x256xf32>
    %337 = arith.mulf %335, %336 : vector<1x256xf32>
    %338 = math.exp %337 : vector<1x256xf32>
    %339 = vector.broadcast %11 : f32 to vector<1x256xf32>
    %340 = arith.mulf %338, %339 : vector<1x256xf32>
    %341 = arith.addf %332, %340 : vector<1x256xf32>
    %cst_151 = arith.constant 5.000000e-01 : f32
    %342 = vector.broadcast %cst_151 : f32 to vector<1x256xf32>
    %343 = arith.mulf %342, %341 : vector<1x256xf32>
    %344 = arith.mulf %306, %343 : vector<1x256xf32>
    %345 = vector.broadcast %6 : f32 to vector<1x256xf32>
    %346 = arith.mulf %344, %345 : vector<1x256xf32>
    %347 = vector.broadcast %5 : f32 to vector<1x256xf32>
    %348 = arith.mulf %314, %347 : vector<1x256xf32>
    %349 = arith.addf %346, %348 : vector<1x256xf32>
    %cst_152 = arith.constant dense<0.000000e+00> : vector<1xf32>
    %350 = vector.multi_reduction <add>, %349, %cst_152 [1] : vector<1x256xf32> to vector<1xf32>
    %351 = vector.shape_cast %350 : vector<1xf32> to vector<1x1xf32>
    %cst_153 = arith.constant 2.560000e+02 : f32
    %352 = vector.broadcast %cst_153 : f32 to vector<1x1xf32>
    %353 = arith.divf %351, %352 : vector<1x1xf32>
    %354 = vector.broadcast %353 : vector<1x1xf32> to vector<1x256xf32>
    %355 = arith.subf %349, %354 : vector<1x256xf32>
    %cst_154 = arith.constant dense<0.000000e+00> : vector<1xf32>
    %356 = vector.multi_reduction <add>, %355, %cst_154 [1] : vector<1x256xf32> to vector<1xf32>
    %357 = vector.shape_cast %356 : vector<1xf32> to vector<1x1xf32>
    %cst_155 = arith.constant 2.560000e+02 : f32
    %358 = vector.broadcast %cst_155 : f32 to vector<1x1xf32>
    %359 = arith.divf %357, %358 : vector<1x1xf32>
    %360 = vector.broadcast %359 : vector<1x1xf32> to vector<1x256xf32>
    %361 = arith.subf %355, %360 : vector<1x256xf32>
    %362 = arith.mulf %361, %361 : vector<1x256xf32>
    %cst_156 = arith.constant dense<0.000000e+00> : vector<1xf32>
    %363 = vector.multi_reduction <add>, %362, %cst_156 [1] : vector<1x256xf32> to vector<1xf32>
    %364 = vector.shape_cast %363 : vector<1xf32> to vector<1x1xf32>
    %cst_157 = arith.constant 0.00392156886 : f32
    %365 = vector.broadcast %cst_157 : f32 to vector<1x1xf32>
    %366 = arith.mulf %364, %365 : vector<1x1xf32>
    %367 = math.sqrt %366 : vector<1x1xf32>
    %cst_158 = arith.constant 9.99999974E-6 : f32
    %368 = vector.broadcast %cst_158 : f32 to vector<1x1xf32>
    %369 = arith.addf %367, %368 : vector<1x1xf32>
    %370 = tpu.reciprocal %369 {approx = true} : vector<1x1xf32> -> vector<1x1xf32>
    %371 = vector.broadcast %370 : vector<1x1xf32> to vector<1x256xf32>
    %372 = arith.mulf %355, %371 : vector<1x256xf32>
    %373 = vector.broadcast %3 : f32 to vector<1x256xf32>
    %374 = arith.mulf %372, %373 : vector<1x256xf32>
    %375 = vector.broadcast %4 : f32 to vector<1x256xf32>
    %376 = arith.addf %374, %375 : vector<1x256xf32>
    %cst_159 = arith.constant 0.000000e+00 : f32
    %377 = vector.broadcast %cst_159 : f32 to vector<1x256xf32>
    %378 = arith.subf %377, %376 : vector<1x256xf32>
    %379 = math.exp %378 : vector<1x256xf32>
    %cst_160 = arith.constant 1.000000e+00 : f32
    %380 = vector.broadcast %cst_160 : f32 to vector<1x256xf32>
    %381 = arith.addf %380, %379 : vector<1x256xf32>
    %382 = tpu.reciprocal %381 {approx = true} : vector<1x256xf32> -> vector<1x256xf32>
    %383 = vector.broadcast %382 : vector<1x256xf32> to vector<8x256xf32>
    %384 = arith.mulf %275, %383 : vector<8x256xf32>
    %c0_161 = arith.constant 0 : index
    %c0_162 = arith.constant 0 : index
    %c0_163 = arith.constant 0 : index
    %385 = vector.load %arg10[%c0_161, %c0_162, %c0_163] : memref<2x8x256xf32, #tpu.memory_space<vmem>>, vector<1x8x256xf32>
    %386 = vector.shape_cast %385 : vector<1x8x256xf32> to vector<8x256xf32>
    %387 = vector.shape_cast %384 : vector<8x256xf32> to vector<1x8x256xf32>
    tpu.vector_store %arg10[%c0_161, %c0_162, %c0_163], %387 {strides = array<i32>} : memref<2x8x256xf32, #tpu.memory_space<vmem>>, vector<1x8x256xf32>,
    %c0_164 = arith.constant 0 : index
    %c0_165 = arith.constant 0 : index
    %c0_166 = arith.constant 0 : index
    %388 = vector.load %arg11[%c0_164, %c0_165, %c0_166] : memref<2x1x256xf32, #tpu.memory_space<vmem>>, vector<1x1x256xf32>
    %389 = vector.shape_cast %388 : vector<1x1x256xf32> to vector<1x256xf32>
    %390 = vector.shape_cast %382 : vector<1x256xf32> to vector<1x1x256xf32>
    tpu.vector_store %arg11[%c0_164, %c0_165, %c0_166], %390 {strides = array<i32>} : memref<2x1x256xf32, #tpu.memory_space<vmem>>, vector<1x1x256xf32>,
    %391 = vector.extract_strided_slice %266 {offsets = [0, 256], sizes = [8, 256], strides = [1, 1]} : vector<8x512xf32> to vector<8x256xf32>
    %cst_167 = arith.constant dense<0.000000e+00> : vector<256xf32>
    %392 = vector.multi_reduction <add>, %391, %cst_167 [0] : vector<8x256xf32> to vector<256xf32>
    %393 = vector.shape_cast %392 : vector<256xf32> to vector<1x256xf32>
    %cst_168 = arith.constant dense<0xFF800000> : vector<1xf32>
    %394 = vector.multi_reduction <maximumf>, %393, %cst_168 [1] : vector<1x256xf32> to vector<1xf32>
    %395 = vector.shape_cast %394 : vector<1xf32> to vector<1x1xf32>
    %396 = vector.broadcast %395 : vector<1x1xf32> to vector<1x256xf32>
    %397 = arith.cmpf oeq, %393, %396 : vector<1x256xf32>
    %cst_169 = arith.constant 2.560000e+02 : f32
    %398 = vector.broadcast %cst_169 : f32 to vector<1x256xf32>
    %399 = arith.select %397, %268, %398 : vector<1x256xi1>, vector<1x256xf32>
    %cst_170 = arith.constant dense<0x7F800000> : vector<1xf32>
    %400 = vector.multi_reduction <minimumf>, %399, %cst_170 [1] : vector<1x256xf32> to vector<1xf32>
    %401 = vector.shape_cast %400 : vector<1xf32> to vector<1x1xf32>
    %cst_171 = arith.constant 1.600000e+01 : f32
    %402 = vector.broadcast %cst_171 : f32 to vector<1x1xf32>
    %403 = arith.divf %401, %402 : vector<1x1xf32>
    %404 = math.floor %403 : vector<1x1xf32>
    %cst_172 = arith.constant 1.600000e+01 : f32
    %405 = vector.broadcast %cst_172 : f32 to vector<1x1xf32>
    %406 = arith.divf %401, %405 : vector<1x1xf32>
    %407 = math.floor %406 : vector<1x1xf32>
    %cst_173 = arith.constant 1.600000e+01 : f32
    %408 = vector.broadcast %cst_173 : f32 to vector<1x1xf32>
    %409 = arith.mulf %404, %408 : vector<1x1xf32>
    %410 = arith.addf %409, %407 : vector<1x1xf32>
    %411 = vector.broadcast %410 : vector<1x1xf32> to vector<1x256xf32>
    %412 = arith.cmpf oeq, %268, %411 : vector<1x256xf32>
    %413 = arith.extui %412 : vector<1x256xi1> to vector<1x256xi32>
    %414 = arith.sitofp %413 : vector<1x256xi32> to vector<1x256xf32>
    %415 = vector.broadcast %414 : vector<1x256xf32> to vector<8x256xf32>
    %416 = arith.mulf %391, %415 : vector<8x256xf32>
    %cst_174 = arith.constant dense<0.000000e+00> : vector<8xf32>
    %417 = vector.multi_reduction <add>, %416, %cst_174 [1] : vector<8x256xf32> to vector<8xf32>
    %418 = vector.shape_cast %417 : vector<8xf32> to vector<8x1xf32>
    %419 = vector.broadcast %418 : vector<8x1xf32> to vector<8x256xf32>
    %420 = arith.mulf %419, %391 : vector<8x256xf32>
    %cst_175 = arith.constant dense<0.000000e+00> : vector<256xf32>
    %421 = vector.multi_reduction <add>, %420, %cst_175 [0] : vector<8x256xf32> to vector<256xf32>
    %422 = vector.shape_cast %421 : vector<256xf32> to vector<1x256xf32>
    %cst_176 = arith.constant dense<0.000000e+00> : vector<8xf32>
    %423 = vector.multi_reduction <add>, %391, %cst_176 [1] : vector<8x256xf32> to vector<8xf32>
    %424 = vector.shape_cast %423 : vector<8xf32> to vector<8x1xf32>
    %cst_177 = arith.constant 2.560000e+02 : f32
    %425 = vector.broadcast %cst_177 : f32 to vector<8x1xf32>
    %426 = arith.divf %424, %425 : vector<8x1xf32>
    %427 = vector.broadcast %426 : vector<8x1xf32> to vector<8x256xf32>
    %428 = arith.mulf %427, %391 : vector<8x256xf32>
    %cst_178 = arith.constant dense<0.000000e+00> : vector<256xf32>
    %429 = vector.multi_reduction <add>, %428, %cst_178 [0] : vector<8x256xf32> to vector<256xf32>
    %430 = vector.shape_cast %429 : vector<256xf32> to vector<1x256xf32>
    %431 = vector.broadcast %404 : vector<1x1xf32> to vector<1x256xf32>
    %432 = arith.subf %271, %431 : vector<1x256xf32>
    %433 = math.absf %432 : vector<1x256xf32>
    %434 = vector.broadcast %0 : f32 to vector<1x256xf32>
    %435 = arith.mulf %433, %434 : vector<1x256xf32>
    %436 = vector.broadcast %407 : vector<1x1xf32> to vector<1x256xf32>
    %437 = arith.subf %274, %436 : vector<1x256xf32>
    %438 = math.absf %437 : vector<1x256xf32>
    %439 = vector.broadcast %1 : f32 to vector<1x256xf32>
    %440 = arith.mulf %438, %439 : vector<1x256xf32>
    %441 = arith.mulf %435, %435 : vector<1x256xf32>
    %cst_179 = arith.constant 0.000000e+00 : f32
    %442 = vector.broadcast %cst_179 : f32 to vector<1x256xf32>
    %443 = arith.subf %442, %441 : vector<1x256xf32>
    %444 = vector.broadcast %9 : f32 to vector<1x256xf32>
    %445 = arith.mulf %443, %444 : vector<1x256xf32>
    %446 = math.exp %445 : vector<1x256xf32>
    %447 = vector.broadcast %11 : f32 to vector<1x256xf32>
    %448 = arith.mulf %446, %447 : vector<1x256xf32>
    %449 = arith.mulf %440, %440 : vector<1x256xf32>
    %cst_180 = arith.constant 0.000000e+00 : f32
    %450 = vector.broadcast %cst_180 : f32 to vector<1x256xf32>
    %451 = arith.subf %450, %449 : vector<1x256xf32>
    %452 = vector.broadcast %9 : f32 to vector<1x256xf32>
    %453 = arith.mulf %451, %452 : vector<1x256xf32>
    %454 = math.exp %453 : vector<1x256xf32>
    %455 = vector.broadcast %11 : f32 to vector<1x256xf32>
    %456 = arith.mulf %454, %455 : vector<1x256xf32>
    %457 = arith.addf %448, %456 : vector<1x256xf32>
    %cst_181 = arith.constant 5.000000e-01 : f32
    %458 = vector.broadcast %cst_181 : f32 to vector<1x256xf32>
    %459 = arith.mulf %458, %457 : vector<1x256xf32>
    %460 = arith.mulf %422, %459 : vector<1x256xf32>
    %461 = vector.broadcast %6 : f32 to vector<1x256xf32>
    %462 = arith.mulf %460, %461 : vector<1x256xf32>
    %463 = vector.broadcast %5 : f32 to vector<1x256xf32>
    %464 = arith.mulf %430, %463 : vector<1x256xf32>
    %465 = arith.addf %462, %464 : vector<1x256xf32>
    %cst_182 = arith.constant dense<0.000000e+00> : vector<1xf32>
    %466 = vector.multi_reduction <add>, %465, %cst_182 [1] : vector<1x256xf32> to vector<1xf32>
    %467 = vector.shape_cast %466 : vector<1xf32> to vector<1x1xf32>
    %cst_183 = arith.constant 2.560000e+02 : f32
    %468 = vector.broadcast %cst_183 : f32 to vector<1x1xf32>
    %469 = arith.divf %467, %468 : vector<1x1xf32>
    %470 = vector.broadcast %469 : vector<1x1xf32> to vector<1x256xf32>
    %471 = arith.subf %465, %470 : vector<1x256xf32>
    %cst_184 = arith.constant dense<0.000000e+00> : vector<1xf32>
    %472 = vector.multi_reduction <add>, %471, %cst_184 [1] : vector<1x256xf32> to vector<1xf32>
    %473 = vector.shape_cast %472 : vector<1xf32> to vector<1x1xf32>
    %cst_185 = arith.constant 2.560000e+02 : f32
    %474 = vector.broadcast %cst_185 : f32 to vector<1x1xf32>
    %475 = arith.divf %473, %474 : vector<1x1xf32>
    %476 = vector.broadcast %475 : vector<1x1xf32> to vector<1x256xf32>
    %477 = arith.subf %471, %476 : vector<1x256xf32>
    %478 = arith.mulf %477, %477 : vector<1x256xf32>
    %cst_186 = arith.constant dense<0.000000e+00> : vector<1xf32>
    %479 = vector.multi_reduction <add>, %478, %cst_186 [1] : vector<1x256xf32> to vector<1xf32>
    %480 = vector.shape_cast %479 : vector<1xf32> to vector<1x1xf32>
    %cst_187 = arith.constant 0.00392156886 : f32
    %481 = vector.broadcast %cst_187 : f32 to vector<1x1xf32>
    %482 = arith.mulf %480, %481 : vector<1x1xf32>
    %483 = math.sqrt %482 : vector<1x1xf32>
    %cst_188 = arith.constant 9.99999974E-6 : f32
    %484 = vector.broadcast %cst_188 : f32 to vector<1x1xf32>
    %485 = arith.addf %483, %484 : vector<1x1xf32>
    %486 = tpu.reciprocal %485 {approx = true} : vector<1x1xf32> -> vector<1x1xf32>
    %487 = vector.broadcast %486 : vector<1x1xf32> to vector<1x256xf32>
    %488 = arith.mulf %471, %487 : vector<1x256xf32>
    %489 = vector.broadcast %3 : f32 to vector<1x256xf32>
    %490 = arith.mulf %488, %489 : vector<1x256xf32>
    %491 = vector.broadcast %4 : f32 to vector<1x256xf32>
    %492 = arith.addf %490, %491 : vector<1x256xf32>
    %cst_189 = arith.constant 0.000000e+00 : f32
    %493 = vector.broadcast %cst_189 : f32 to vector<1x256xf32>
    %494 = arith.subf %493, %492 : vector<1x256xf32>
    %495 = math.exp %494 : vector<1x256xf32>
    %cst_190 = arith.constant 1.000000e+00 : f32
    %496 = vector.broadcast %cst_190 : f32 to vector<1x256xf32>
    %497 = arith.addf %496, %495 : vector<1x256xf32>
    %498 = tpu.reciprocal %497 {approx = true} : vector<1x256xf32> -> vector<1x256xf32>
    %499 = vector.broadcast %498 : vector<1x256xf32> to vector<8x256xf32>
    %500 = arith.mulf %391, %499 : vector<8x256xf32>
    %c1_191 = arith.constant 1 : index
    %c0_192 = arith.constant 0 : index
    %c0_193 = arith.constant 0 : index
    %501 = vector.load %arg10[%c1_191, %c0_192, %c0_193] : memref<2x8x256xf32, #tpu.memory_space<vmem>>, vector<1x8x256xf32>
    %502 = vector.shape_cast %501 : vector<1x8x256xf32> to vector<8x256xf32>
    %503 = vector.shape_cast %500 : vector<8x256xf32> to vector<1x8x256xf32>
    tpu.vector_store %arg10[%c1_191, %c0_192, %c0_193], %503 {strides = array<i32>} : memref<2x8x256xf32, #tpu.memory_space<vmem>>, vector<1x8x256xf32>,
    %c1_194 = arith.constant 1 : index
    %c0_195 = arith.constant 0 : index
    %c0_196 = arith.constant 0 : index
    %504 = vector.load %arg11[%c1_194, %c0_195, %c0_196] : memref<2x1x256xf32, #tpu.memory_space<vmem>>, vector<1x1x256xf32>
    %505 = vector.shape_cast %504 : vector<1x1x256xf32> to vector<1x256xf32>
    %506 = vector.shape_cast %498 : vector<1x256xf32> to vector<1x1x256xf32>
    tpu.vector_store %arg11[%c1_194, %c0_195, %c0_196], %506 {strides = array<i32>} : memref<2x1x256xf32, #tpu.memory_space<vmem>>, vector<1x1x256xf32>,
    return
  }
}

</mosaic_0001>

<llo_original>
// kernel: tpu_custom_call.1
$region0: #{tpu_custom_call.1}
  #allocation0 [shape = 'u32[]', space=smem, size = 0x4, offset = 0x4, fixed_abs, tag = 'smem constant byte address 0x4 - core index']
  #allocation1 [shape = 'u32[144,128]{1,0:T(1,128)}', space=vmem, size = 0x12000, scoped, tag = 'internal scratch']
  %s0 = inlined_call_operand.hbm [shape: f32[2,8,64], index: 0, kind: input, shape index: {}]
  %s1 = inlined_call_operand.hbm [shape: f32[2,4,256], index: 1, kind: input, shape index: {}]
  %s2 = inlined_call_operand.vmem [shape: f32[64,256], index: 2, kind: input, shape index: {}]
  %s3 = inlined_call_operand.hbm [shape: f32[8,8], index: 3, kind: input, shape index: {}]
  %s4 = inlined_call_operand.vmem [shape: f32[9,8,4], index: 4, kind: input, shape index: {}]
  %s5 = inlined_call_operand.vmem [shape: f32[9,8,8], index: 5, kind: input, shape index: {}]
  %s6 = inlined_call_operand.vmem [shape: f32[9,512], index: 6, kind: input, shape index: {}]
  %s7 = inlined_call_operand.vmem [shape: f32[2,8], index: 7, kind: input, shape index: {}]
  %s8 = inlined_call_operand.vmem [shape: f32[2,8], index: 8, kind: input, shape index: {}]
  %s9 = inlined_call_operand.vmem [shape: f32[8], index: 9, kind: input, shape index: {}]
  %s10 = inlined_call_operand.hbm [shape: f32[2,8,256], index: 10, kind: output, shape index: {0}]
  %s11 = inlined_call_operand.hbm [shape: f32[2,1,256], index: 11, kind: output, shape index: {1}]
  %12 = xla_tuple %s10, %s11
  %s13 = sld [smem:[#allocation0]]
  $region74: #{tpu_custom_call.1} parent=0
    _
  %s15 = ssub.s32 1, %s13
  %s16 = scalar_select 0, %s15, %s13
  $region1: #{tpu_custom_call.1} parent=0
    #allocation2 [shape = 'u8[8192]{0}', space=vmem, size = 0x2000, scoped, tag = 'input window, operand 0, single buffered']
    #allocation3 [shape = 's32[1]{0}', space=sflag, size = 0x4, scoped, tag = 'scoped memory for tpu_custom_call.1']
    #allocation4 [shape = 's32[1]{0}', space=sflag, size = 0x4, scoped, tag = 'scoped memory for tpu_custom_call.1']
    #allocation5 [shape = 's32[1]{0}', space=sflag, size = 0x4, scoped, tag = 'scoped memory for tpu_custom_call.1']
    #allocation6 [shape = 'u8[8192]{0}', space=vmem, size = 0x2000, scoped, tag = 'input window, operand 1, single buffered']
    #allocation7 [shape = 's32[1]{0}', space=sflag, size = 0x4, scoped, tag = 'scoped memory for tpu_custom_call.1']
    #allocation8 [shape = 'u8[4096]{0}', space=vmem, size = 0x1000, scoped, tag = 'input window, operand 3, single buffered']
    #allocation9 [shape = 'u8[512]{0}', space=smem, size = 0x200, scoped, tag = 'input window, operand 9, single buffered']
    #allocation10 [shape = 'u8[16384]{0}', space=vmem, size = 0x4000, scoped, tag = 'output window, operand 0, single buffered']
    #allocation11 [shape = 'u8[2048]{0}', space=vmem, size = 0x800, scoped, tag = 'output window, operand 1, single buffered']
    #allocation12 [shape = 's32[1]{0}', space=sflag, size = 0x4, scoped, tag = 'scoped memory for tpu_custom_call.1']
    %17 = vsyncpa [#allocation3], 0
    %18 = vsyncpa [#allocation7], 0
    %19 = vsyncpa [#allocation5], 0
    %20 = vsyncpa [#allocation4], 0
    %21 = vsyncpa [#allocation12], 0
    // Predicated region
    $region2: #{tpu_custom_call.1} parent=1 // pred_check
      _
    $region3: #{tpu_custom_call.1} parent=1 // pred_check_branch
      %23 = sbr.rel (0) target = $region5
    $region4: #{tpu_custom_call.1} parent=1 // pred_region
      %s25 = ssub.s32 256, 256
      %26 = vsyncadd [#allocation3], %s25
      %s27 = sshll.u32 [#allocation2], 4
      %s28 = int_to_ptr.vmem [resolvable:$true] %s27
      %33 = dma.hbm_to_vmem [thread:$0]  %s0, 256, %s28, [#allocation3], 128, 128, 8
    $region5: #{tpu_custom_call.1} parent=1 // pred_fallthru
      _
    // Predicated region
    $region6: #{tpu_custom_call.1} parent=1 // pred_check
      _
    $region7: #{tpu_custom_call.1} parent=1 // pred_check_branch
      %35 = sbr.rel (0) target = $region9
    $region8: #{tpu_custom_call.1} parent=1 // pred_region
      %s37 = ssub.s32 256, 256
      %38 = vsyncadd [#allocation7], %s37
      %s39 = sshll.u32 [#allocation6], 4
      %s40 = int_to_ptr.vmem [resolvable:$true] %s39
      %45 = dma.hbm_to_vmem [thread:$0]  %s1, 256, %s40, [#allocation7], 128, 128, 8
    $region9: #{tpu_custom_call.1} parent=1 // pred_fallthru
      _
    // Predicated region
    $region10: #{tpu_custom_call.1} parent=1 // pred_check
      _
    $region11: #{tpu_custom_call.1} parent=1 // pred_check_branch
      %47 = sbr.rel (0) target = $region13
    $region12: #{tpu_custom_call.1} parent=1 // pred_region
      _
    $region13: #{tpu_custom_call.1} parent=1 // pred_fallthru
      _
    // Predicated region
    $region14: #{tpu_custom_call.1} parent=1 // pred_check
      _
    $region15: #{tpu_custom_call.1} parent=1 // pred_check_branch
      %49 = sbr.rel (0) target = $region17
    $region16: #{tpu_custom_call.1} parent=1 // pred_region
      %s51 = ssub.s32 128, 128
      %52 = vsyncadd [#allocation7], %s51
      %s54 = sshll.u32 [#allocation8], 4
      %s55 = int_to_ptr.vmem [resolvable:$true] %s54
      %57 = dma.hbm_to_vmem [thread:$0]  %s3, 128, %s55, [#allocation7]
    $region17: #{tpu_custom_call.1} parent=1 // pred_fallthru
      _
    // Predicated region
    $region18: #{tpu_custom_call.1} parent=1 // pred_check
      _
    $region19: #{tpu_custom_call.1} parent=1 // pred_check_branch
      %59 = sbr.rel (0) target = $region21
    $region20: #{tpu_custom_call.1} parent=1 // pred_region
      _
    $region21: #{tpu_custom_call.1} parent=1 // pred_fallthru
      _
    // Predicated region
    $region22: #{tpu_custom_call.1} parent=1 // pred_check
      _
    $region23: #{tpu_custom_call.1} parent=1 // pred_check_branch
      %61 = sbr.rel (0) target = $region25
    $region24: #{tpu_custom_call.1} parent=1 // pred_region
      _
    $region25: #{tpu_custom_call.1} parent=1 // pred_fallthru
      _
    // Predicated region
    $region26: #{tpu_custom_call.1} parent=1 // pred_check
      _
    $region27: #{tpu_custom_call.1} parent=1 // pred_check_branch
      %63 = sbr.rel (0) target = $region29
    $region28: #{tpu_custom_call.1} parent=1 // pred_region
      _
    $region29: #{tpu_custom_call.1} parent=1 // pred_fallthru
      _
    // Predicated region
    $region30: #{tpu_custom_call.1} parent=1 // pred_check
      _
    $region31: #{tpu_custom_call.1} parent=1 // pred_check_branch
      %65 = sbr.rel (0) target = $region33
    $region32: #{tpu_custom_call.1} parent=1 // pred_region
      _
    $region33: #{tpu_custom_call.1} parent=1 // pred_fallthru
      _
    // Predicated region
    $region34: #{tpu_custom_call.1} parent=1 // pred_check
      _
    $region35: #{tpu_custom_call.1} parent=1 // pred_check_branch
      %67 = sbr.rel (0) target = $region37
    $region36: #{tpu_custom_call.1} parent=1 // pred_region
      _
    $region37: #{tpu_custom_call.1} parent=1 // pred_fallthru
      _
    // Predicated region
    $region38: #{tpu_custom_call.1} parent=1 // pred_check
      _
    $region39: #{tpu_custom_call.1} parent=1 // pred_check_branch
      %69 = sbr.rel (0) target = $region41
    $region40: #{tpu_custom_call.1} parent=1 // pred_region
      %s71 = ssub.s32 16, 16
      %72 = vsyncadd [#allocation5], %s71
      %s74 = sshll.u32 %s9, 4
      %s75 = int_to_ptr.vmem [resolvable:$true] %s74
      %77 = dma.vmem_to_smem %s75, 16, [#allocation9], [#allocation5]
    $region41: #{tpu_custom_call.1} parent=1 // pred_fallthru
      _
    // Predicated region
    $region42: #{tpu_custom_call.1} parent=1 // pred_check
      _
    $region43: #{tpu_custom_call.1} parent=1 // pred_check_branch
      %79 = sbr.rel (0) target = $region45
    $region44: #{tpu_custom_call.1} parent=1 // pred_region
      %80 = dma.done [#allocation3], 256
    $region45: #{tpu_custom_call.1} parent=1 // pred_fallthru
      _
    // Predicated region
    $region46: #{tpu_custom_call.1} parent=1 // pred_check
      _
    $region47: #{tpu_custom_call.1} parent=1 // pred_check_branch
      %82 = sbr.rel (0) target = $region49
    $region48: #{tpu_custom_call.1} parent=1 // pred_region
      %83 = dma.done [#allocation7], 256
    $region49: #{tpu_custom_call.1} parent=1 // pred_fallthru
      _
    // Predicated region
    $region50: #{tpu_custom_call.1} parent=1 // pred_check
      _
    $region51: #{tpu_custom_call.1} parent=1 // pred_check_branch
      %85 = sbr.rel (0) target = $region53
    $region52: #{tpu_custom_call.1} parent=1 // pred_region
      %86 = dma.done [#allocation7], 128
    $region53: #{tpu_custom_call.1} parent=1 // pred_fallthru
      _
    // Predicated region
    $region54: #{tpu_custom_call.1} parent=1 // pred_check
      _
    $region55: #{tpu_custom_call.1} parent=1 // pred_check_branch
      %88 = sbr.rel (0) target = $region57
    $region56: #{tpu_custom_call.1} parent=1 // pred_region
      %89 = dma.done [#allocation5], 16
    $region57: #{tpu_custom_call.1} parent=1 // pred_fallthru
      _
    %90 = sfence
    %s91 = sld [smem:[#allocation9]]
    %s92 = sld [smem:[#allocation9 + $0x1]]
    %s93 = sld [smem:[#allocation9 + $0x2]]
    %s94 = sld [smem:[#allocation9 + $0x3]]
    %s95 = sld [smem:[#allocation9 + $0x4]]
    %s96 = sld [smem:[#allocation9 + $0x5]]
    %s97 = sld [smem:[#allocation9 + $0x6]]
    %s98 = smul.f32 %s93, 2.0
    %s99 = smul.f32 %s98, %s93
    %v100 = vstv %s99
    %v101 = vrcp.pop %v100
    %s102 = vtos %v101
    %s103 = smul.f32 %s93, 2.5066283
    %v104 = vstv %s103
    %v105 = vrcp.pop %v104
    %s106 = vtos %v105
    %v107 = vld [vmem:[%s2] sm:$0xff]
    %v108 = vld [vmem:[%s2 + $0x8] sm:$0xff]
    %v109 = vld [vmem:[%s2 + $0x10] sm:$0xff]
    %v110 = vld [vmem:[%s2 + $0x18] sm:$0xff]
    %v111 = vld [vmem:[%s2 + $0x20] sm:$0xff]
    %v112 = vld [vmem:[%s2 + $0x28] sm:$0xff]
    %v113 = vld [vmem:[%s2 + $0x30] sm:$0xff]
    %v114 = vld [vmem:[%s2 + $0x38] sm:$0xff]
    %v115 = vld [vmem:[%s2 + $0x40] sm:$0xff]
    %v116 = vld [vmem:[%s2 + $0x48] sm:$0xff]
    %v117 = vld [vmem:[%s2 + $0x50] sm:$0xff]
    %v118 = vld [vmem:[%s2 + $0x58] sm:$0xff]
    %v119 = vld [vmem:[%s2 + $0x60] sm:$0xff]
    %v120 = vld [vmem:[%s2 + $0x68] sm:$0xff]
    %v121 = vld [vmem:[%s2 + $0x70] sm:$0xff]
    %v122 = vld [vmem:[%s2 + $0x78] sm:$0xff]
    %v123 = vld [vmem:[#allocation8] sm:$0xff]
    %v124 = vld [vmem:[%s7] sm:$0x3]
    %v125 = vld [vmem:[%s8] sm:$0x3]
    %v126 = vld [vmem:[%s6] sm:$0xff]
    %v127 = vld [vmem:[%s6 + $0x8] sm:$0xff]
    %v128 = vld [vmem:[%s6 + $0x10] sm:$0xff]
    %v129 = vld [vmem:[%s6 + $0x18] sm:$0xff]
    %v130 = vld [vmem:[%s6 + $0x20] sm:$0x1]
    %v131 = vld [vmem:[%s6 + $0x28] sm:$0x1]
    %v132 = vld [vmem:[%s6 + $0x30] sm:$0x1]
    %v133 = vld [vmem:[%s6 + $0x38] sm:$0x1]
    %v134 = vld [vmem:[#allocation2] sm:$0xff]
    %vm135 = vcmask 64512
    %v137 = vsel %vm135, %v123, 0
    %139 = vmatprep.subr.mxu0 0.0
    %140 = vmatpush1.msra.mxu0 %v134
    %141 = vmatprep.subr.mxu0 0.0
    %142 = vmatpush1.msra.mxu0 0.0
    %143 = vmatprep.subr.mxu0 0.0
    %144 = vmatpush1.msra.mxu0 0.0
    %145 = vmatprep.subr.mxu0 0.0
    %146 = vmatpush1.msra.mxu0 0.0
    %147 = vmatprep.subr.mxu0 0.0
    %148 = vmatpush1.msra.mxu0 0.0
    %149 = vmatprep.subr.mxu0 0.0
    %150 = vmatpush1.msra.mxu0 0.0
    %151 = vmatprep.subr.mxu0 0.0
    %152 = vmatpush1.msra.mxu0 0.0
    %153 = vmatprep.subr.mxu0 0.0
    %154 = vmatpush1.msra.mxu0 0.0
    %155 = vmatprep.subr.mxu0 0.0
    %156 = vmatpush1.msra.mxu0 0.0
    %157 = vmatprep.subr.mxu0 0.0
    %158 = vmatpush1.msra.mxu0 0.0
    %159 = vmatprep.subr.mxu0 0.0
    %160 = vmatpush1.msra.mxu0 0.0
    %161 = vmatprep.subr.mxu0 0.0
    %162 = vmatpush1.msra.mxu0 0.0
    %163 = vmatprep.subr.mxu0 0.0
    %164 = vmatpush1.msra.mxu0 0.0
    %165 = vmatprep.subr.mxu0 0.0
    %166 = vmatpush1.msra.mxu0 0.0
    %167 = vmatprep.subr.mxu0 0.0
    %168 = vmatpush1.msra.mxu0 0.0
    %169 = vmatprep.subr.mxu0 0.0
    %170 = vmatpush1.msra.mxu0 0.0
    %171 = vmatprep.subr.mxu0 0.0
    %172 = vmatpush1.msra.mxu0 0.0
    %173 = vmatprep.subr.mxu0 0.0
    %174 = vmatpush1.msra.mxu0 0.0
    %175 = vmatprep.subr.mxu0 0.0
    %176 = vmatpush1.msra.mxu0 0.0
    %177 = vmatprep.subr.mxu0 0.0
    %178 = vmatpush1.msra.mxu0 0.0
    %179 = vmatprep.subr.mxu0 0.0
    %180 = vmatpush1.msra.mxu0 0.0
    %181 = vmatprep.subr.mxu0 0.0
    %182 = vmatpush1.msra.mxu0 0.0
    %183 = vmatprep.subr.mxu0 0.0
    %184 = vmatpush1.msra.mxu0 0.0
    %185 = vmatprep.subr.mxu0 0.0
    %186 = vmatpush1.msra.mxu0 0.0
    %187 = vmatprep.subr.mxu0 0.0
    %188 = vmatpush1.msra.mxu0 0.0
    %189 = vmatprep.subr.mxu0 0.0
    %190 = vmatpush1.msra.mxu0 0.0
    %191 = vmatprep.subr.mxu0 0.0
    %192 = vmatpush1.msra.mxu0 0.0
    %193 = vmatprep.subr.mxu0 0.0
    %194 = vmatpush1.msra.mxu0 0.0
    %195 = vmatprep.subr.mxu0 0.0
    %196 = vmatpush1.msra.mxu0 0.0
    %197 = vmatprep.subr.mxu0 0.0
    %198 = vmatpush1.msra.mxu0 0.0
    %199 = vmatprep.subr.mxu0 0.0
    %200 = vmatpush1.msra.mxu0 0.0
    %201 = vmatprep.subr.mxu0 0.0
    %202 = vmatpush1.msra.mxu0 0.0
    %203 = vmatprep.mubr.f32.mxu0 0.0
    %204 = vmatmul.mubr.f32.gmra.mrb[0].mxu0 %v137
    %v205 = vpop.f32.mrb[0].mxu0
    %v206 = vadd.f32 0.0, %v205
    %v207 = vpop.f32.mrb[0].mxu0
    %208 = vdwg.mxu0
    %vm209 = vcmask 523264
    %v211 = vsel %vm209, %v206, 0
    %213 = vmatprep.subr.mxu0 %v108
    %214 = vmatpush1.msra.mxu0 %v107
    %215 = vmatprep.subr.mxu0 %v110
    %216 = vmatpush1.msra.mxu0 %v109
    %217 = vmatprep.subr.mxu0 %v112
    %218 = vmatpush1.msra.mxu0 %v111
    %219 = vmatprep.subr.mxu0 %v114
    %220 = vmatpush1.msra.mxu0 %v113
    %221 = vmatprep.subr.mxu0 %v116
    %222 = vmatpush1.msra.mxu0 %v115
    %223 = vmatprep.subr.mxu0 %v118
    %224 = vmatpush1.msra.mxu0 %v117
    %225 = vmatprep.subr.mxu0 %v120
    %226 = vmatpush1.msra.mxu0 %v119
    %227 = vmatprep.subr.mxu0 %v122
    %228 = vmatpush1.msra.mxu0 %v121
    %229 = vmatprep.subr.mxu0 0.0
    %230 = vmatpush1.msra.mxu0 0.0
    %231 = vmatprep.subr.mxu0 0.0
    %232 = vmatpush1.msra.mxu0 0.0
    %233 = vmatprep.subr.mxu0 0.0
    %234 = vmatpush1.msra.mxu0 0.0
    %235 = vmatprep.subr.mxu0 0.0
    %236 = vmatpush1.msra.mxu0 0.0
    %237 = vmatprep.subr.mxu0 0.0
    %238 = vmatpush1.msra.mxu0 0.0
    %239 = vmatprep.subr.mxu0 0.0
    %240 = vmatpush1.msra.mxu0 0.0
    %241 = vmatprep.subr.mxu0 0.0
    %242 = vmatpush1.msra.mxu0 0.0
    %243 = vmatprep.subr.mxu0 0.0
    %244 = vmatpush1.msra.mxu0 0.0
    %245 = vmatprep.subr.mxu0 0.0
    %246 = vmatpush1.msra.mxu0 0.0
    %247 = vmatprep.subr.mxu0 0.0
    %248 = vmatpush1.msra.mxu0 0.0
    %249 = vmatprep.subr.mxu0 0.0
    %250 = vmatpush1.msra.mxu0 0.0
    %251 = vmatprep.subr.mxu0 0.0
    %252 = vmatpush1.msra.mxu0 0.0
    %253 = vmatprep.subr.mxu0 0.0
    %254 = vmatpush1.msra.mxu0 0.0
    %255 = vmatprep.subr.mxu0 0.0
    %256 = vmatpush1.msra.mxu0 0.0
    %257 = vmatprep.subr.mxu0 0.0
    %258 = vmatpush1.msra.mxu0 0.0
    %259 = vmatprep.subr.mxu0 0.0
    %260 = vmatpush1.msra.mxu0 0.0
    %261 = vmatprep.subr.mxu0 0.0
    %262 = vmatpush1.msra.mxu0 0.0
    %263 = vmatprep.subr.mxu0 0.0
    %264 = vmatpush1.msra.mxu0 0.0
    %265 = vmatprep.subr.mxu0 0.0
    %266 = vmatpush1.msra.mxu0 0.0
    %267 = vmatprep.subr.mxu0 0.0
    %268 = vmatpush1.msra.mxu0 0.0
    %269 = vmatprep.subr.mxu0 0.0
    %270 = vmatpush1.msra.mxu0 0.0
    %271 = vmatprep.subr.mxu0 0.0
    %272 = vmatpush1.msra.mxu0 0.0
    %273 = vmatprep.subr.mxu0 0.0
    %274 = vmatpush1.msra.mxu0 0.0
    %275 = vmatprep.subr.mxu0 0.0
    %276 = vmatpush1.msra.mxu0 0.0
    %277 = vmatprep.mubr.f32.mxu0 0.0
    %278 = vmatmul.mubr.f32.gmra.mrb[0].mxu0 %v211
    %v279 = vpop.f32.mrb[0].mxu0
    %v280 = vadd.f32 0.0, %v279
    %v281 = vpop.f32.mrb[0].mxu0
    %v282 = vadd.f32 0.0, %v281
    %283 = vdwg.mxu0
    %s284 = scalar_lea.vmem [#allocation2], 8
    %v285 = vld [vmem:[%s284] sm:$0xff]
    %286 = vmatprep.subr.mxu0 0.0
    %287 = vmatpush1.msra.mxu0 %v285
    %288 = vmatprep.subr.mxu0 0.0
    %289 = vmatpush1.msra.mxu0 0.0
    %290 = vmatprep.subr.mxu0 0.0
    %291 = vmatpush1.msra.mxu0 0.0
    %292 = vmatprep.subr.mxu0 0.0
    %293 = vmatpush1.msra.mxu0 0.0
    %294 = vmatprep.subr.mxu0 0.0
    %295 = vmatpush1.msra.mxu0 0.0
    %296 = vmatprep.subr.mxu0 0.0
    %297 = vmatpush1.msra.mxu0 0.0
    %298 = vmatprep.subr.mxu0 0.0
    %299 = vmatpush1.msra.mxu0 0.0
    %300 = vmatprep.subr.mxu0 0.0
    %301 = vmatpush1.msra.mxu0 0.0
    %302 = vmatprep.subr.mxu0 0.0
    %303 = vmatpush1.msra.mxu0 0.0
    %304 = vmatprep.subr.mxu0 0.0
    %305 = vmatpush1.msra.mxu0 0.0
    %306 = vmatprep.subr.mxu0 0.0
    %307 = vmatpush1.msra.mxu0 0.0
    %308 = vmatprep.subr.mxu0 0.0
    %309 = vmatpush1.msra.mxu0 0.0
    %310 = vmatprep.subr.mxu0 0.0
    %311 = vmatpush1.msra.mxu0 0.0
    %312 = vmatprep.subr.mxu0 0.0
    %313 = vmatpush1.msra.mxu0 0.0
    %314 = vmatprep.subr.mxu0 0.0
    %315 = vmatpush1.msra.mxu0 0.0
    %316 = vmatprep.subr.mxu0 0.0
    %317 = vmatpush1.msra.mxu0 0.0
    %318 = vmatprep.subr.mxu0 0.0
    %319 = vmatpush1.msra.mxu0 0.0
    %320 = vmatprep.subr.mxu0 0.0
    %321 = vmatpush1.msra.mxu0 0.0
    %322 = vmatprep.subr.mxu0 0.0
    %323 = vmatpush1.msra.mxu0 0.0
    %324 = vmatprep.subr.mxu0 0.0
    %325 = vmatpush1.msra.mxu0 0.0
    %326 = vmatprep.subr.mxu0 0.0
    %327 = vmatpush1.msra.mxu0 0.0
    %328 = vmatprep.subr.mxu0 0.0
    %329 = vmatpush1.msra.mxu0 0.0
    %330 = vmatprep.subr.mxu0 0.0
    %331 = vmatpush1.msra.mxu0 0.0
    %332 = vmatprep.subr.mxu0 0.0
    %333 = vmatpush1.msra.mxu0 0.0
    %334 = vmatprep.subr.mxu0 0.0
    %335 = vmatpush1.msra.mxu0 0.0
    %336 = vmatprep.subr.mxu0 0.0
    %337 = vmatpush1.msra.mxu0 0.0
    %338 = vmatprep.subr.mxu0 0.0
    %339 = vmatpush1.msra.mxu0 0.0
    %340 = vmatprep.subr.mxu0 0.0
    %341 = vmatpush1.msra.mxu0 0.0
    %342 = vmatprep.subr.mxu0 0.0
    %343 = vmatpush1.msra.mxu0 0.0
    %344 = vmatprep.subr.mxu0 0.0
    %345 = vmatpush1.msra.mxu0 0.0
    %346 = vmatprep.subr.mxu0 0.0
    %347 = vmatpush1.msra.mxu0 0.0
    %348 = vmatprep.subr.mxu0 0.0
    %349 = vmatpush1.msra.mxu0 0.0
    %350 = vmatprep.mubr.f32.mxu0 0.0
    %351 = vmatmul.mubr.f32.gmra.mrb[0].mxu0 %v137
    %v352 = vpop.f32.mrb[0].mxu0
    %v353 = vadd.f32 0.0, %v352
    %v354 = vpop.f32.mrb[0].mxu0
    %355 = vdwg.mxu0
    %v357 = vsel %vm209, %v353, 0
    %359 = vmatprep.subr.mxu0 %v108
    %360 = vmatpush1.msra.mxu0 %v107
    %361 = vmatprep.subr.mxu0 %v110
    %362 = vmatpush1.msra.mxu0 %v109
    %363 = vmatprep.subr.mxu0 %v112
    %364 = vmatpush1.msra.mxu0 %v111
    %365 = vmatprep.subr.mxu0 %v114
    %366 = vmatpush1.msra.mxu0 %v113
    %367 = vmatprep.subr.mxu0 %v116
    %368 = vmatpush1.msra.mxu0 %v115
    %369 = vmatprep.subr.mxu0 %v118
    %370 = vmatpush1.msra.mxu0 %v117
    %371 = vmatprep.subr.mxu0 %v120
    %372 = vmatpush1.msra.mxu0 %v119
    %373 = vmatprep.subr.mxu0 %v122
    %374 = vmatpush1.msra.mxu0 %v121
    %375 = vmatprep.subr.mxu0 0.0
    %376 = vmatpush1.msra.mxu0 0.0
    %377 = vmatprep.subr.mxu0 0.0
    %378 = vmatpush1.msra.mxu0 0.0
    %379 = vmatprep.subr.mxu0 0.0
    %380 = vmatpush1.msra.mxu0 0.0
    %381 = vmatprep.subr.mxu0 0.0
    %382 = vmatpush1.msra.mxu0 0.0
    %383 = vmatprep.subr.mxu0 0.0
    %384 = vmatpush1.msra.mxu0 0.0
    %385 = vmatprep.subr.mxu0 0.0
    %386 = vmatpush1.msra.mxu0 0.0
    %387 = vmatprep.subr.mxu0 0.0
    %388 = vmatpush1.msra.mxu0 0.0
    %389 = vmatprep.subr.mxu0 0.0
    %390 = vmatpush1.msra.mxu0 0.0
    %391 = vmatprep.subr.mxu0 0.0
    %392 = vmatpush1.msra.mxu0 0.0
    %393 = vmatprep.subr.mxu0 0.0
    %394 = vmatpush1.msra.mxu0 0.0
    %395 = vmatprep.subr.mxu0 0.0
    %396 = vmatpush1.msra.mxu0 0.0
    %397 = vmatprep.subr.mxu0 0.0
    %398 = vmatpush1.msra.mxu0 0.0
    %399 = vmatprep.subr.mxu0 0.0
    %400 = vmatpush1.msra.mxu0 0.0
    %401 = vmatprep.subr.mxu0 0.0
    %402 = vmatpush1.msra.mxu0 0.0
    %403 = vmatprep.subr.mxu0 0.0
    %404 = vmatpush1.msra.mxu0 0.0
    %405 = vmatprep.subr.mxu0 0.0
    %406 = vmatpush1.msra.mxu0 0.0
    %407 = vmatprep.subr.mxu0 0.0
    %408 = vmatpush1.msra.mxu0 0.0
    %409 = vmatprep.subr.mxu0 0.0
    %410 = vmatpush1.msra.mxu0 0.0
    %411 = vmatprep.subr.mxu0 0.0
    %412 = vmatpush1.msra.mxu0 0.0
    %413 = vmatprep.subr.mxu0 0.0
    %414 = vmatpush1.msra.mxu0 0.0
    %415 = vmatprep.subr.mxu0 0.0
    %416 = vmatpush1.msra.mxu0 0.0
    %417 = vmatprep.subr.mxu0 0.0
    %418 = vmatpush1.msra.mxu0 0.0
    %419 = vmatprep.subr.mxu0 0.0
    %420 = vmatpush1.msra.mxu0 0.0
    %421 = vmatprep.subr.mxu0 0.0
    %422 = vmatpush1.msra.mxu0 0.0
    %423 = vmatprep.mubr.f32.mxu0 0.0
    %424 = vmatmul.mubr.f32.gmra.mrb[0].mxu0 %v357
    %v425 = vpop.f32.mrb[0].mxu0
    %v426 = vadd.f32 0.0, %v425
    %v427 = vpop.f32.mrb[0].mxu0
    %v428 = vadd.f32 0.0, %v427
    %429 = vdwg.mxu0
    %v430 = vld [vmem:[#allocation6] sm:$0xff]
    %s431 = scalar_lea.vmem [#allocation6], 8
    %v432 = vld [vmem:[%s431] sm:$0xff]
    %v434 = vcombine.high %v430, %v430
    %v437 = vcombine.high %v432, %v432
    %439 = vrot.lane.b32.xlu0 %v430, 17
    %v440 = vpop.permute.xlu0 %439
    %441 = vrot.lane.b32.xlu0 %v434, 17
    %v442 = vpop.permute.xlu0 %441
    %443 = vrot.lane.b32.xlu0 %v432, 17
    %v444 = vpop.permute.xlu0 %443
    %445 = vrot.lane.b32.xlu0 %v437, 17
    %v446 = vpop.permute.xlu0 %445
    %v447 = vlaneseq
    %v448 = vand.u32 %v447, 127
    %vm449 = vcmp.lt.s32.totalorder %v448, 17
    %v450 = vsel %vm449, %v444, %v446
    %v451 = vsel %vm449, %v442, %v444
    %v452 = vsel %vm449, %v440, %v442
    %v453 = vsel %vm449, %v446, %v440
    %v454 = vlaneseq
    %v455 = vshrl.u32 %v454, 7
    %v456 = vsub.s32 0, %v455
    %v457 = vrot.slane %v126, %v456
    %v458 = vlaneseq
    %v459 = vshrl.u32 %v458, 7
    %v460 = vsub.s32 0, %v459
    %v461 = vrot.slane %v127, %v460
    %v462 = vlaneseq
    %v463 = vshrl.u32 %v462, 7
    %v464 = vsub.s32 0, %v463
    %v465 = vrot.slane %v128, %v464
    %v466 = vlaneseq
    %v467 = vshrl.u32 %v466, 7
    %v468 = vsub.s32 0, %v467
    %v469 = vrot.slane %v129, %v468
    %v470 = vmul.f32 %v457, %v453
    %v471 = vmul.f32 %v461, %v452
    %v472 = vmul.f32 %v465, %v451
    %v473 = vmul.f32 %v469, %v450
    %v474 = vld [vmem:[%s4] sm:$0xff]
    %475 = vrot.lane.b32.xlu0 %v430, 16
    %v476 = vpop.permute.xlu0 %475
    %477 = vrot.lane.b32.xlu0 %v434, 16
    %v478 = vpop.permute.xlu0 %477
    %479 = vrot.lane.b32.xlu0 %v432, 16
    %v480 = vpop.permute.xlu0 %479
    %481 = vrot.lane.b32.xlu0 %v437, 16
    %v482 = vpop.permute.xlu0 %481
    %vm483 = vcmp.lt.s32.totalorder %v448, 16
    %v484 = vsel %vm483, %v480, %v482
    %v485 = vsel %vm483, %v478, %v480
    %v486 = vsel %vm483, %v476, %v478
    %v487 = vsel %vm483, %v482, %v476
    %v488 = vlaneseq
    %v489 = vshrl.u32 %v488, 7
    %v490 = vsub.s32 1, %v489
    %v491 = vrot.slane %v126, %v490
    %v492 = vlaneseq
    %v493 = vshrl.u32 %v492, 7
    %v494 = vsub.s32 1, %v493
    %v495 = vrot.slane %v127, %v494
    %v496 = vlaneseq
    %v497 = vshrl.u32 %v496, 7
    %v498 = vsub.s32 1, %v497
    %v499 = vrot.slane %v128, %v498
    %v500 = vlaneseq
    %v501 = vshrl.u32 %v500, 7
    %v502 = vsub.s32 1, %v501
    %v503 = vrot.slane %v129, %v502
    %v504 = vmul.f32 %v491, %v487
    %v505 = vmul.f32 %v495, %v486
    %v506 = vmul.f32 %v499, %v485
    %v507 = vmul.f32 %v503, %v484
    %s508 = scalar_lea.vmem %s4, 8
    %v509 = vld [vmem:[%s508] sm:$0xff]
    %vm510 = vcmask 31744
    %v512 = vsel %vm510, %v509, 0
    %vm514 = vcmask 1043456
    %v516 = vsel %vm514, %v504, 0
    %v519 = vsel %vm514, %v505, 0
    %v522 = vsel %vm514, %v506, 0
    %v525 = vsel %vm514, %v507, 0
    %527 = vmatprep.subr.mxu0 %v519
    %528 = vmatpush1.msra.mxu0 %v516
    %529 = vmatprep.subr.mxu0 0.0
    %530 = vmatpush1.msra.mxu0 0.0
    %531 = vmatprep.subr.mxu0 0.0
    %532 = vmatpush1.msra.mxu0 0.0
    %533 = vmatprep.subr.mxu0 0.0
    %534 = vmatpush1.msra.mxu0 0.0
    %535 = vmatprep.subr.mxu0 0.0
    %536 = vmatpush1.msra.mxu0 0.0
    %537 = vmatprep.subr.mxu0 0.0
    %538 = vmatpush1.msra.mxu0 0.0
    %539 = vmatprep.subr.mxu0 0.0
    %540 = vmatpush1.msra.mxu0 0.0
    %541 = vmatprep.subr.mxu0 0.0
    %542 = vmatpush1.msra.mxu0 0.0
    %543 = vmatprep.subr.mxu0 0.0
    %544 = vmatpush1.msra.mxu0 0.0
    %545 = vmatprep.subr.mxu0 0.0
    %546 = vmatpush1.msra.mxu0 0.0
    %547 = vmatprep.subr.mxu0 0.0
    %548 = vmatpush1.msra.mxu0 0.0
    %549 = vmatprep.subr.mxu0 0.0
    %550 = vmatpush1.msra.mxu0 0.0
    %551 = vmatprep.subr.mxu0 0.0
    %552 = vmatpush1.msra.mxu0 0.0
    %553 = vmatprep.subr.mxu0 0.0
    %554 = vmatpush1.msra.mxu0 0.0
    %555 = vmatprep.subr.mxu0 0.0
    %556 = vmatpush1.msra.mxu0 0.0
    %557 = vmatprep.subr.mxu0 0.0
    %558 = vmatpush1.msra.mxu0 0.0
    %559 = vmatprep.subr.mxu0 0.0
    %560 = vmatpush1.msra.mxu0 0.0
    %561 = vmatprep.subr.mxu0 0.0
    %562 = vmatpush1.msra.mxu0 0.0
    %563 = vmatprep.subr.mxu0 0.0
    %564 = vmatpush1.msra.mxu0 0.0
    %565 = vmatprep.subr.mxu0 0.0
    %566 = vmatpush1.msra.mxu0 0.0
    %567 = vmatprep.subr.mxu0 0.0
    %568 = vmatpush1.msra.mxu0 0.0
    %569 = vmatprep.subr.mxu0 0.0
    %570 = vmatpush1.msra.mxu0 0.0
    %571 = vmatprep.subr.mxu0 0.0
    %572 = vmatpush1.msra.mxu0 0.0
    %573 = vmatprep.subr.mxu0 0.0
    %574 = vmatpush1.msra.mxu0 0.0
    %575 = vmatprep.subr.mxu0 0.0
    %576 = vmatpush1.msra.mxu0 0.0
    %577 = vmatprep.subr.mxu0 0.0
    %578 = vmatpush1.msra.mxu0 0.0
    %579 = vmatprep.subr.mxu0 0.0
    %580 = vmatpush1.msra.mxu0 0.0
    %581 = vmatprep.subr.mxu0 0.0
    %582 = vmatpush1.msra.mxu0 0.0
    %583 = vmatprep.subr.mxu0 0.0
    %584 = vmatpush1.msra.mxu0 0.0
    %585 = vmatprep.subr.mxu0 0.0
    %586 = vmatpush1.msra.mxu0 0.0
    %587 = vmatprep.subr.mxu0 0.0
    %588 = vmatpush1.msra.mxu0 0.0
    %589 = vmatprep.subr.mxu0 0.0
    %590 = vmatpush1.msra.mxu0 0.0
    %591 = vmatprep.mubr.f32.mxu0 0.0
    %592 = vmatmul.mubr.f32.gmra.mrb[0].mxu0 %v512
    %v593 = vpop.f32.mrb[0].mxu0
    %v594 = vadd.f32 0.0, %v593
    %v595 = vpop.f32.mrb[0].mxu0
    %v596 = vadd.f32 0.0, %v595
    %597 = vdwg.mxu0
    %598 = vmatprep.subr.mxu0 %v525
    %599 = vmatpush1.msra.mxu0 %v522
    %600 = vmatprep.subr.mxu0 0.0
    %601 = vmatpush1.msra.mxu0 0.0
    %602 = vmatprep.subr.mxu0 0.0
    %603 = vmatpush1.msra.mxu0 0.0
    %604 = vmatprep.subr.mxu0 0.0
    %605 = vmatpush1.msra.mxu0 0.0
    %606 = vmatprep.subr.mxu0 0.0
    %607 = vmatpush1.msra.mxu0 0.0
    %608 = vmatprep.subr.mxu0 0.0
    %609 = vmatpush1.msra.mxu0 0.0
    %610 = vmatprep.subr.mxu0 0.0
    %611 = vmatpush1.msra.mxu0 0.0
    %612 = vmatprep.subr.mxu0 0.0
    %613 = vmatpush1.msra.mxu0 0.0
    %614 = vmatprep.subr.mxu0 0.0
    %615 = vmatpush1.msra.mxu0 0.0
    %616 = vmatprep.subr.mxu0 0.0
    %617 = vmatpush1.msra.mxu0 0.0
    %618 = vmatprep.subr.mxu0 0.0
    %619 = vmatpush1.msra.mxu0 0.0
    %620 = vmatprep.subr.mxu0 0.0
    %621 = vmatpush1.msra.mxu0 0.0
    %622 = vmatprep.subr.mxu0 0.0
    %623 = vmatpush1.msra.mxu0 0.0
    %624 = vmatprep.subr.mxu0 0.0
    %625 = vmatpush1.msra.mxu0 0.0
    %626 = vmatprep.subr.mxu0 0.0
    %627 = vmatpush1.msra.mxu0 0.0
    %628 = vmatprep.subr.mxu0 0.0
    %629 = vmatpush1.msra.mxu0 0.0
    %630 = vmatprep.subr.mxu0 0.0
    %631 = vmatpush1.msra.mxu0 0.0
    %632 = vmatprep.subr.mxu0 0.0
    %633 = vmatpush1.msra.mxu0 0.0
    %634 = vmatprep.subr.mxu0 0.0
    %635 = vmatpush1.msra.mxu0 0.0
    %636 = vmatprep.subr.mxu0 0.0
    %637 = vmatpush1.msra.mxu0 0.0
    %638 = vmatprep.subr.mxu0 0.0
    %639 = vmatpush1.msra.mxu0 0.0
    %640 = vmatprep.subr.mxu0 0.0
    %641 = vmatpush1.msra.mxu0 0.0
    %642 = vmatprep.subr.mxu0 0.0
    %643 = vmatpush1.msra.mxu0 0.0
    %644 = vmatprep.subr.mxu0 0.0
    %645 = vmatpush1.msra.mxu0 0.0
    %646 = vmatprep.subr.mxu0 0.0
    %647 = vmatpush1.msra.mxu0 0.0
    %648 = vmatprep.subr.mxu0 0.0
    %649 = vmatpush1.msra.mxu0 0.0
    %650 = vmatprep.subr.mxu0 0.0
    %651 = vmatpush1.msra.mxu0 0.0
    %652 = vmatprep.subr.mxu0 0.0
    %653 = vmatpush1.msra.mxu0 0.0
    %654 = vmatprep.subr.mxu0 0.0
    %655 = vmatpush1.msra.mxu0 0.0
    %656 = vmatprep.subr.mxu0 0.0
    %657 = vmatpush1.msra.mxu0 0.0
    %658 = vmatprep.subr.mxu0 0.0
    %659 = vmatpush1.msra.mxu0 0.0
    %660 = vmatprep.subr.mxu0 0.0
    %661 = vmatpush1.msra.mxu0 0.0
    %662 = vmatprep.mubr.f32.mxu0 0.0
    %663 = vmatmul.mubr.f32.gmra.mrb[0].mxu0 %v512
    %v664 = vpop.f32.mrb[0].mxu0
    %v665 = vadd.f32 0.0, %v664
    %v666 = vpop.f32.mrb[0].mxu0
    %v667 = vadd.f32 0.0, %v666
    %668 = vdwg.mxu0
    %v670 = vsel %vm510, %v474, 0
    %v673 = vsel %vm514, %v470, 0
    %v676 = vsel %vm514, %v471, 0
    %v679 = vsel %vm514, %v472, 0
    %v682 = vsel %vm514, %v473, 0
    %684 = vmatprep.subr.mxu0 %v676
    %685 = vmatpush1.msra.mxu0 %v673
    %686 = vmatprep.subr.mxu0 0.0
    %687 = vmatpush1.msra.mxu0 0.0
    %688 = vmatprep.subr.mxu0 0.0
    %689 = vmatpush1.msra.mxu0 0.0
    %690 = vmatprep.subr.mxu0 0.0
    %691 = vmatpush1.msra.mxu0 0.0
    %692 = vmatprep.subr.mxu0 0.0
    %693 = vmatpush1.msra.mxu0 0.0
    %694 = vmatprep.subr.mxu0 0.0
    %695 = vmatpush1.msra.mxu0 0.0
    %696 = vmatprep.subr.mxu0 0.0
    %697 = vmatpush1.msra.mxu0 0.0
    %698 = vmatprep.subr.mxu0 0.0
    %699 = vmatpush1.msra.mxu0 0.0
    %700 = vmatprep.subr.mxu0 0.0
    %701 = vmatpush1.msra.mxu0 0.0
    %702 = vmatprep.subr.mxu0 0.0
    %703 = vmatpush1.msra.mxu0 0.0
    %704 = vmatprep.subr.mxu0 0.0
    %705 = vmatpush1.msra.mxu0 0.0
    %706 = vmatprep.subr.mxu0 0.0
    %707 = vmatpush1.msra.mxu0 0.0
    %708 = vmatprep.subr.mxu0 0.0
    %709 = vmatpush1.msra.mxu0 0.0
    %710 = vmatprep.subr.mxu0 0.0
    %711 = vmatpush1.msra.mxu0 0.0
    %712 = vmatprep.subr.mxu0 0.0
    %713 = vmatpush1.msra.mxu0 0.0
    %714 = vmatprep.subr.mxu0 0.0
    %715 = vmatpush1.msra.mxu0 0.0
    %716 = vmatprep.subr.mxu0 0.0
    %717 = vmatpush1.msra.mxu0 0.0
    %718 = vmatprep.subr.mxu0 0.0
    %719 = vmatpush1.msra.mxu0 0.0
    %720 = vmatprep.subr.mxu0 0.0
    %721 = vmatpush1.msra.mxu0 0.0
    %722 = vmatprep.subr.mxu0 0.0
    %723 = vmatpush1.msra.mxu0 0.0
    %724 = vmatprep.subr.mxu0 0.0
    %725 = vmatpush1.msra.mxu0 0.0
    %726 = vmatprep.subr.mxu0 0.0
    %727 = vmatpush1.msra.mxu0 0.0
    %728 = vmatprep.subr.mxu0 0.0
    %729 = vmatpush1.msra.mxu0 0.0
    %730 = vmatprep.subr.mxu0 0.0
    %731 = vmatpush1.msra.mxu0 0.0
    %732 = vmatprep.subr.mxu0 0.0
    %733 = vmatpush1.msra.mxu0 0.0
    %734 = vmatprep.subr.mxu0 0.0
    %735 = vmatpush1.msra.mxu0 0.0
    %736 = vmatprep.subr.mxu0 0.0
    %737 = vmatpush1.msra.mxu0 0.0
    %738 = vmatprep.subr.mxu0 0.0
    %739 = vmatpush1.msra.mxu0 0.0
    %740 = vmatprep.subr.mxu0 0.0
    %741 = vmatpush1.msra.mxu0 0.0
    %742 = vmatprep.subr.mxu0 0.0
    %743 = vmatpush1.msra.mxu0 0.0
    %744 = vmatprep.subr.mxu0 0.0
    %745 = vmatpush1.msra.mxu0 0.0
    %746 = vmatprep.subr.mxu0 0.0
    %747 = vmatpush1.msra.mxu0 0.0
    %748 = vmatprep.mubr.f32.mxu0 0.0
    %749 = vmatmul.mubr.f32.gmra.mrb[0].mxu0 %v670
    %v750 = vpop.f32.mrb[0].mxu0
    %v751 = vadd.f32 %v594, %v750
    %v752 = vpop.f32.mrb[0].mxu0
    %v753 = vadd.f32 %v596, %v752
    %754 = vdwg.mxu0
    %755 = vmatprep.subr.mxu0 %v682
    %756 = vmatpush1.msra.mxu0 %v679
    %757 = vmatprep.subr.mxu0 0.0
    %758 = vmatpush1.msra.mxu0 0.0
    %759 = vmatprep.subr.mxu0 0.0
    %760 = vmatpush1.msra.mxu0 0.0
    %761 = vmatprep.subr.mxu0 0.0
    %762 = vmatpush1.msra.mxu0 0.0
    %763 = vmatprep.subr.mxu0 0.0
    %764 = vmatpush1.msra.mxu0 0.0
    %765 = vmatprep.subr.mxu0 0.0
    %766 = vmatpush1.msra.mxu0 0.0
    %767 = vmatprep.subr.mxu0 0.0
    %768 = vmatpush1.msra.mxu0 0.0
    %769 = vmatprep.subr.mxu0 0.0
    %770 = vmatpush1.msra.mxu0 0.0
    %771 = vmatprep.subr.mxu0 0.0
    %772 = vmatpush1.msra.mxu0 0.0
    %773 = vmatprep.subr.mxu0 0.0
    %774 = vmatpush1.msra.mxu0 0.0
    %775 = vmatprep.subr.mxu0 0.0
    %776 = vmatpush1.msra.mxu0 0.0
    %777 = vmatprep.subr.mxu0 0.0
    %778 = vmatpush1.msra.mxu0 0.0
    %779 = vmatprep.subr.mxu0 0.0
    %780 = vmatpush1.msra.mxu0 0.0
    %781 = vmatprep.subr.mxu0 0.0
    %782 = vmatpush1.msra.mxu0 0.0
    %783 = vmatprep.subr.mxu0 0.0
    %784 = vmatpush1.msra.mxu0 0.0
    %785 = vmatprep.subr.mxu0 0.0
    %786 = vmatpush1.msra.mxu0 0.0
    %787 = vmatprep.subr.mxu0 0.0
    %788 = vmatpush1.msra.mxu0 0.0
    %789 = vmatprep.subr.mxu0 0.0
    %790 = vmatpush1.msra.mxu0 0.0
    %791 = vmatprep.subr.mxu0 0.0
    %792 = vmatpush1.msra.mxu0 0.0
    %793 = vmatprep.subr.mxu0 0.0
    %794 = vmatpush1.msra.mxu0 0.0
    %795 = vmatprep.subr.mxu0 0.0
    %796 = vmatpush1.msra.mxu0 0.0
    %797 = vmatprep.subr.mxu0 0.0
    %798 = vmatpush1.msra.mxu0 0.0
    %799 = vmatprep.subr.mxu0 0.0
    %800 = vmatpush1.msra.mxu0 0.0
    %801 = vmatprep.subr.mxu0 0.0
    %802 = vmatpush1.msra.mxu0 0.0
    %803 = vmatprep.subr.mxu0 0.0
    %804 = vmatpush1.msra.mxu0 0.0
    %805 = vmatprep.subr.mxu0 0.0
    %806 = vmatpush1.msra.mxu0 0.0
    %807 = vmatprep.subr.mxu0 0.0
    %808 = vmatpush1.msra.mxu0 0.0
    %809 = vmatprep.subr.mxu0 0.0
    %810 = vmatpush1.msra.mxu0 0.0
    %811 = vmatprep.subr.mxu0 0.0
    %812 = vmatpush1.msra.mxu0 0.0
    %813 = vmatprep.subr.mxu0 0.0
    %814 = vmatpush1.msra.mxu0 0.0
    %815 = vmatprep.subr.mxu0 0.0
    %816 = vmatpush1.msra.mxu0 0.0
    %817 = vmatprep.subr.mxu0 0.0
    %818 = vmatpush1.msra.mxu0 0.0
    %819 = vmatprep.mubr.f32.mxu0 0.0
    %820 = vmatmul.mubr.f32.gmra.mrb[0].mxu0 %v670
    %v821 = vpop.f32.mrb[0].mxu0
    %v822 = vadd.f32 %v665, %v821
    %v823 = vpop.f32.mrb[0].mxu0
    %v824 = vadd.f32 %v667, %v823
    %825 = vdwg.mxu0
    %826 = vrot.lane.b32.xlu0 %v430, 15
    %v827 = vpop.permute.xlu0 %826
    %828 = vrot.lane.b32.xlu0 %v434, 15
    %v829 = vpop.permute.xlu0 %828
    %830 = vrot.lane.b32.xlu0 %v432, 15
    %v831 = vpop.permute.xlu0 %830
    %832 = vrot.lane.b32.xlu0 %v437, 15
    %v833 = vpop.permute.xlu0 %832
    %vm834 = vcmp.lt.s32.totalorder %v448, 15
    %v835 = vsel %vm834, %v831, %v833
    %v836 = vsel %vm834, %v829, %v831
    %v837 = vsel %vm834, %v827, %v829
    %v838 = vsel %vm834, %v833, %v827
    %v839 = vlaneseq
    %v840 = vshrl.u32 %v839, 7
    %v841 = vsub.s32 2, %v840
    %v842 = vrot.slane %v126, %v841
    %v843 = vlaneseq
    %v844 = vshrl.u32 %v843, 7
    %v845 = vsub.s32 2, %v844
    %v846 = vrot.slane %v127, %v845
    %v847 = vlaneseq
    %v848 = vshrl.u32 %v847, 7
    %v849 = vsub.s32 2, %v848
    %v850 = vrot.slane %v128, %v849
    %v851 = vlaneseq
    %v852 = vshrl.u32 %v851, 7
    %v853 = vsub.s32 2, %v852
    %v854 = vrot.slane %v129, %v853
    %v855 = vmul.f32 %v842, %v838
    %v856 = vmul.f32 %v846, %v837
    %v857 = vmul.f32 %v850, %v836
    %v858 = vmul.f32 %v854, %v835
    %s859 = scalar_lea.vmem %s4, 16
    %v860 = vld [vmem:[%s859] sm:$0xff]
    %v862 = vsel %vm510, %v860, 0
    %v865 = vsel %vm514, %v855, 0
    %v868 = vsel %vm514, %v856, 0
    %v871 = vsel %vm514, %v857, 0
    %v874 = vsel %vm514, %v858, 0
    %876 = vmatprep.subr.mxu0 %v868
    %877 = vmatpush1.msra.mxu0 %v865
    %878 = vmatprep.subr.mxu0 0.0
    %879 = vmatpush1.msra.mxu0 0.0
    %880 = vmatprep.subr.mxu0 0.0
    %881 = vmatpush1.msra.mxu0 0.0
    %882 = vmatprep.subr.mxu0 0.0
    %883 = vmatpush1.msra.mxu0 0.0
    %884 = vmatprep.subr.mxu0 0.0
    %885 = vmatpush1.msra.mxu0 0.0
    %886 = vmatprep.subr.mxu0 0.0
    %887 = vmatpush1.msra.mxu0 0.0
    %888 = vmatprep.subr.mxu0 0.0
    %889 = vmatpush1.msra.mxu0 0.0
    %890 = vmatprep.subr.mxu0 0.0
    %891 = vmatpush1.msra.mxu0 0.0
    %892 = vmatprep.subr.mxu0 0.0
    %893 = vmatpush1.msra.mxu0 0.0
    %894 = vmatprep.subr.mxu0 0.0
    %895 = vmatpush1.msra.mxu0 0.0
    %896 = vmatprep.subr.mxu0 0.0
    %897 = vmatpush1.msra.mxu0 0.0
    %898 = vmatprep.subr.mxu0 0.0
    %899 = vmatpush1.msra.mxu0 0.0
    %900 = vmatprep.subr.mxu0 0.0
    %901 = vmatpush1.msra.mxu0 0.0
    %902 = vmatprep.subr.mxu0 0.0
    %903 = vmatpush1.msra.mxu0 0.0
    %904 = vmatprep.subr.mxu0 0.0
    %905 = vmatpush1.msra.mxu0 0.0
    %906 = vmatprep.subr.mxu0 0.0
    %907 = vmatpush1.msra.mxu0 0.0
    %908 = vmatprep.subr.mxu0 0.0
    %909 = vmatpush1.msra.mxu0 0.0
    %910 = vmatprep.subr.mxu0 0.0
    %911 = vmatpush1.msra.mxu0 0.0
    %912 = vmatprep.subr.mxu0 0.0
    %913 = vmatpush1.msra.mxu0 0.0
    %914 = vmatprep.subr.mxu0 0.0
    %915 = vmatpush1.msra.mxu0 0.0
    %916 = vmatprep.subr.mxu0 0.0
    %917 = vmatpush1.msra.mxu0 0.0
    %918 = vmatprep.subr.mxu0 0.0
    %919 = vmatpush1.msra.mxu0 0.0
    %920 = vmatprep.subr.mxu0 0.0
    %921 = vmatpush1.msra.mxu0 0.0
    %922 = vmatprep.subr.mxu0 0.0
    %923 = vmatpush1.msra.mxu0 0.0
    %924 = vmatprep.subr.mxu0 0.0
    %925 = vmatpush1.msra.mxu0 0.0
    %926 = vmatprep.subr.mxu0 0.0
    %927 = vmatpush1.msra.mxu0 0.0
    %928 = vmatprep.subr.mxu0 0.0
    %929 = vmatpush1.msra.mxu0 0.0
    %930 = vmatprep.subr.mxu0 0.0
    %931 = vmatpush1.msra.mxu0 0.0
    %932 = vmatprep.subr.mxu0 0.0
    %933 = vmatpush1.msra.mxu0 0.0
    %934 = vmatprep.subr.mxu0 0.0
    %935 = vmatpush1.msra.mxu0 0.0
    %936 = vmatprep.subr.mxu0 0.0
    %937 = vmatpush1.msra.mxu0 0.0
    %938 = vmatprep.subr.mxu0 0.0
    %939 = vmatpush1.msra.mxu0 0.0
    %940 = vmatprep.mubr.f32.mxu0 0.0
    %941 = vmatmul.mubr.f32.gmra.mrb[0].mxu0 %v862
    %v942 = vpop.f32.mrb[0].mxu0
    %v943 = vadd.f32 0.0, %v942
    %v944 = vpop.f32.mrb[0].mxu0
    %v945 = vadd.f32 0.0, %v944
    %946 = vdwg.mxu0
    %947 = vmatprep.subr.mxu0 %v874
    %948 = vmatpush1.msra.mxu0 %v871
    %949 = vmatprep.subr.mxu0 0.0
    %950 = vmatpush1.msra.mxu0 0.0
    %951 = vmatprep.subr.mxu0 0.0
    %952 = vmatpush1.msra.mxu0 0.0
    %953 = vmatprep.subr.mxu0 0.0
    %954 = vmatpush1.msra.mxu0 0.0
    %955 = vmatprep.subr.mxu0 0.0
    %956 = vmatpush1.msra.mxu0 0.0
    %957 = vmatprep.subr.mxu0 0.0
    %958 = vmatpush1.msra.mxu0 0.0
    %959 = vmatprep.subr.mxu0 0.0
    %960 = vmatpush1.msra.mxu0 0.0
    %961 = vmatprep.subr.mxu0 0.0
    %962 = vmatpush1.msra.mxu0 0.0
    %963 = vmatprep.subr.mxu0 0.0
    %964 = vmatpush1.msra.mxu0 0.0
    %965 = vmatprep.subr.mxu0 0.0
    %966 = vmatpush1.msra.mxu0 0.0
    %967 = vmatprep.subr.mxu0 0.0
    %968 = vmatpush1.msra.mxu0 0.0
    %969 = vmatprep.subr.mxu0 0.0
    %970 = vmatpush1.msra.mxu0 0.0
    %971 = vmatprep.subr.mxu0 0.0
    %972 = vmatpush1.msra.mxu0 0.0
    %973 = vmatprep.subr.mxu0 0.0
    %974 = vmatpush1.msra.mxu0 0.0
    %975 = vmatprep.subr.mxu0 0.0
    %976 = vmatpush1.msra.mxu0 0.0
    %977 = vmatprep.subr.mxu0 0.0
    %978 = vmatpush1.msra.mxu0 0.0
    %979 = vmatprep.subr.mxu0 0.0
    %980 = vmatpush1.msra.mxu0 0.0
    %981 = vmatprep.subr.mxu0 0.0
    %982 = vmatpush1.msra.mxu0 0.0
    %983 = vmatprep.subr.mxu0 0.0
    %984 = vmatpush1.msra.mxu0 0.0
    %985 = vmatprep.subr.mxu0 0.0
    %986 = vmatpush1.msra.mxu0 0.0
    %987 = vmatprep.subr.mxu0 0.0
    %988 = vmatpush1.msra.mxu0 0.0
    %989 = vmatprep.subr.mxu0 0.0
    %990 = vmatpush1.msra.mxu0 0.0
    %991 = vmatprep.subr.mxu0 0.0
    %992 = vmatpush1.msra.mxu0 0.0
    %993 = vmatprep.subr.mxu0 0.0
    %994 = vmatpush1.msra.mxu0 0.0
    %995 = vmatprep.subr.mxu0 0.0
    %996 = vmatpush1.msra.mxu0 0.0
    %997 = vmatprep.subr.mxu0 0.0
    %998 = vmatpush1.msra.mxu0 0.0
    %999 = vmatprep.subr.mxu0 0.0
    %1000 = vmatpush1.msra.mxu0 0.0
    %1001 = vmatprep.subr.mxu0 0.0
    %1002 = vmatpush1.msra.mxu0 0.0
    %1003 = vmatprep.subr.mxu0 0.0
    %1004 = vmatpush1.msra.mxu0 0.0
    %1005 = vmatprep.subr.mxu0 0.0
    %1006 = vmatpush1.msra.mxu0 0.0
    %1007 = vmatprep.subr.mxu0 0.0
    %1008 = vmatpush1.msra.mxu0 0.0
    %1009 = vmatprep.subr.mxu0 0.0
    %1010 = vmatpush1.msra.mxu0 0.0
    %1011 = vmatprep.mubr.f32.mxu0 0.0
    %1012 = vmatmul.mubr.f32.gmra.mrb[0].mxu0 %v862
    %v1013 = vpop.f32.mrb[0].mxu0
    %v1014 = vadd.f32 0.0, %v1013
    %v1015 = vpop.f32.mrb[0].mxu0
    %v1016 = vadd.f32 0.0, %v1015
    %1017 = vdwg.mxu0
    %v1018 = vadd.f32 %v751, %v943
    %v1019 = vadd.f32 %v753, %v945
    %v1020 = vadd.f32 %v822, %v1014
    %v1021 = vadd.f32 %v824, %v1016
    %1022 = vrot.lane.b32.xlu0 %v430, 1
    %v1023 = vpop.permute.xlu0 %1022
    %1024 = vrot.lane.b32.xlu0 %v434, 1
    %v1025 = vpop.permute.xlu0 %1024
    %1026 = vrot.lane.b32.xlu0 %v432, 1
    %v1027 = vpop.permute.xlu0 %1026
    %1028 = vrot.lane.b32.xlu0 %v437, 1
    %v1029 = vpop.permute.xlu0 %1028
    %vm1030 = vcmp.lt.s32.totalorder %v448, 1
    %v1031 = vsel %vm1030, %v1027, %v1029
    %v1032 = vsel %vm1030, %v1025, %v1027
    %v1033 = vsel %vm1030, %v1023, %v1025
    %v1034 = vsel %vm1030, %v1029, %v1023
    %v1035 = vlaneseq
    %v1036 = vshrl.u32 %v1035, 7
    %v1037 = vsub.s32 3, %v1036
    %v1038 = vrot.slane %v126, %v1037
    %v1039 = vlaneseq
    %v1040 = vshrl.u32 %v1039, 7
    %v1041 = vsub.s32 3, %v1040
    %v1042 = vrot.slane %v127, %v1041
    %v1043 = vlaneseq
    %v1044 = vshrl.u32 %v1043, 7
    %v1045 = vsub.s32 3, %v1044
    %v1046 = vrot.slane %v128, %v1045
    %v1047 = vlaneseq
    %v1048 = vshrl.u32 %v1047, 7
    %v1049 = vsub.s32 3, %v1048
    %v1050 = vrot.slane %v129, %v1049
    %v1051 = vmul.f32 %v1038, %v1034
    %v1052 = vmul.f32 %v1042, %v1033
    %v1053 = vmul.f32 %v1046, %v1032
    %v1054 = vmul.f32 %v1050, %v1031
    %s1055 = scalar_lea.vmem %s4, 24
    %v1056 = vld [vmem:[%s1055] sm:$0xff]
    %v1058 = vsel %vm510, %v1056, 0
    %v1061 = vsel %vm514, %v1051, 0
    %v1064 = vsel %vm514, %v1052, 0
    %v1067 = vsel %vm514, %v1053, 0
    %v1070 = vsel %vm514, %v1054, 0
    %1072 = vmatprep.subr.mxu0 %v1064
    %1073 = vmatpush1.msra.mxu0 %v1061
    %1074 = vmatprep.subr.mxu0 0.0
    %1075 = vmatpush1.msra.mxu0 0.0
    %1076 = vmatprep.subr.mxu0 0.0
    %1077 = vmatpush1.msra.mxu0 0.0
    %1078 = vmatprep.subr.mxu0 0.0
    %1079 = vmatpush1.msra.mxu0 0.0
    %1080 = vmatprep.subr.mxu0 0.0
    %1081 = vmatpush1.msra.mxu0 0.0
    %1082 = vmatprep.subr.mxu0 0.0
    %1083 = vmatpush1.msra.mxu0 0.0
    %1084 = vmatprep.subr.mxu0 0.0
    %1085 = vmatpush1.msra.mxu0 0.0
    %1086 = vmatprep.subr.mxu0 0.0
    %1087 = vmatpush1.msra.mxu0 0.0
    %1088 = vmatprep.subr.mxu0 0.0
    %1089 = vmatpush1.msra.mxu0 0.0
    %1090 = vmatprep.subr.mxu0 0.0
    %1091 = vmatpush1.msra.mxu0 0.0
    %1092 = vmatprep.subr.mxu0 0.0
    %1093 = vmatpush1.msra.mxu0 0.0
    %1094 = vmatprep.subr.mxu0 0.0
    %1095 = vmatpush1.msra.mxu0 0.0
    %1096 = vmatprep.subr.mxu0 0.0
    %1097 = vmatpush1.msra.mxu0 0.0
    %1098 = vmatprep.subr.mxu0 0.0
    %1099 = vmatpush1.msra.mxu0 0.0
    %1100 = vmatprep.subr.mxu0 0.0
    %1101 = vmatpush1.msra.mxu0 0.0
    %1102 = vmatprep.subr.mxu0 0.0
    %1103 = vmatpush1.msra.mxu0 0.0
    %1104 = vmatprep.subr.mxu0 0.0
    %1105 = vmatpush1.msra.mxu0 0.0
    %1106 = vmatprep.subr.mxu0 0.0
    %1107 = vmatpush1.msra.mxu0 0.0
    %1108 = vmatprep.subr.mxu0 0.0
    %1109 = vmatpush1.msra.mxu0 0.0
    %1110 = vmatprep.subr.mxu0 0.0
    %1111 = vmatpush1.msra.mxu0 0.0
    %1112 = vmatprep.subr.mxu0 0.0
    %1113 = vmatpush1.msra.mxu0 0.0
    %1114 = vmatprep.subr.mxu0 0.0
    %1115 = vmatpush1.msra.mxu0 0.0
    %1116 = vmatprep.subr.mxu0 0.0
    %1117 = vmatpush1.msra.mxu0 0.0
    %1118 = vmatprep.subr.mxu0 0.0
    %1119 = vmatpush1.msra.mxu0 0.0
    %1120 = vmatprep.subr.mxu0 0.0
    %1121 = vmatpush1.msra.mxu0 0.0
    %1122 = vmatprep.subr.mxu0 0.0
    %1123 = vmatpush1.msra.mxu0 0.0
    %1124 = vmatprep.subr.mxu0 0.0
    %1125 = vmatpush1.msra.mxu0 0.0
    %1126 = vmatprep.subr.mxu0 0.0
    %1127 = vmatpush1.msra.mxu0 0.0
    %1128 = vmatprep.subr.mxu0 0.0
    %1129 = vmatpush1.msra.mxu0 0.0
    %1130 = vmatprep.subr.mxu0 0.0
    %1131 = vmatpush1.msra.mxu0 0.0
    %1132 = vmatprep.subr.mxu0 0.0
    %1133 = vmatpush1.msra.mxu0 0.0
    %1134 = vmatprep.subr.mxu0 0.0
    %1135 = vmatpush1.msra.mxu0 0.0
    %1136 = vmatprep.mubr.f32.mxu0 0.0
    %1137 = vmatmul.mubr.f32.gmra.mrb[0].mxu0 %v1058
    %v1138 = vpop.f32.mrb[0].mxu0
    %v1139 = vadd.f32 0.0, %v1138
    %v1140 = vpop.f32.mrb[0].mxu0
    %v1141 = vadd.f32 0.0, %v1140
    %1142 = vdwg.mxu0
    %1143 = vmatprep.subr.mxu0 %v1070
    %1144 = vmatpush1.msra.mxu0 %v1067
    %1145 = vmatprep.subr.mxu0 0.0
    %1146 = vmatpush1.msra.mxu0 0.0
    %1147 = vmatprep.subr.mxu0 0.0
    %1148 = vmatpush1.msra.mxu0 0.0
    %1149 = vmatprep.subr.mxu0 0.0
    %1150 = vmatpush1.msra.mxu0 0.0
    %1151 = vmatprep.subr.mxu0 0.0
    %1152 = vmatpush1.msra.mxu0 0.0
    %1153 = vmatprep.subr.mxu0 0.0
    %1154 = vmatpush1.msra.mxu0 0.0
    %1155 = vmatprep.subr.mxu0 0.0
    %1156 = vmatpush1.msra.mxu0 0.0
    %1157 = vmatprep.subr.mxu0 0.0
    %1158 = vmatpush1.msra.mxu0 0.0
    %1159 = vmatprep.subr.mxu0 0.0
    %1160 = vmatpush1.msra.mxu0 0.0
    %1161 = vmatprep.subr.mxu0 0.0
    %1162 = vmatpush1.msra.mxu0 0.0
    %1163 = vmatprep.subr.mxu0 0.0
    %1164 = vmatpush1.msra.mxu0 0.0
    %1165 = vmatprep.subr.mxu0 0.0
    %1166 = vmatpush1.msra.mxu0 0.0
    %1167 = vmatprep.subr.mxu0 0.0
    %1168 = vmatpush1.msra.mxu0 0.0
    %1169 = vmatprep.subr.mxu0 0.0
    %1170 = vmatpush1.msra.mxu0 0.0
    %1171 = vmatprep.subr.mxu0 0.0
    %1172 = vmatpush1.msra.mxu0 0.0
    %1173 = vmatprep.subr.mxu0 0.0
    %1174 = vmatpush1.msra.mxu0 0.0
    %1175 = vmatprep.subr.mxu0 0.0
    %1176 = vmatpush1.msra.mxu0 0.0
    %1177 = vmatprep.subr.mxu0 0.0
    %1178 = vmatpush1.msra.mxu0 0.0
    %1179 = vmatprep.subr.mxu0 0.0
    %1180 = vmatpush1.msra.mxu0 0.0
    %1181 = vmatprep.subr.mxu0 0.0
    %1182 = vmatpush1.msra.mxu0 0.0
    %1183 = vmatprep.subr.mxu0 0.0
    %1184 = vmatpush1.msra.mxu0 0.0
    %1185 = vmatprep.subr.mxu0 0.0
    %1186 = vmatpush1.msra.mxu0 0.0
    %1187 = vmatprep.subr.mxu0 0.0
    %1188 = vmatpush1.msra.mxu0 0.0
    %1189 = vmatprep.subr.mxu0 0.0
    %1190 = vmatpush1.msra.mxu0 0.0
    %1191 = vmatprep.subr.mxu0 0.0
    %1192 = vmatpush1.msra.mxu0 0.0
    %1193 = vmatprep.subr.mxu0 0.0
    %1194 = vmatpush1.msra.mxu0 0.0
    %1195 = vmatprep.subr.mxu0 0.0
    %1196 = vmatpush1.msra.mxu0 0.0
    %1197 = vmatprep.subr.mxu0 0.0
    %1198 = vmatpush1.msra.mxu0 0.0
    %1199 = vmatprep.subr.mxu0 0.0
    %1200 = vmatpush1.msra.mxu0 0.0
    %1201 = vmatprep.subr.mxu0 0.0
    %1202 = vmatpush1.msra.mxu0 0.0
    %1203 = vmatprep.subr.mxu0 0.0
    %1204 = vmatpush1.msra.mxu0 0.0
    %1205 = vmatprep.subr.mxu0 0.0
    %1206 = vmatpush1.msra.mxu0 0.0
    %1207 = vmatprep.mubr.f32.mxu0 0.0
    %1208 = vmatmul.mubr.f32.gmra.mrb[0].mxu0 %v1058
    %v1209 = vpop.f32.mrb[0].mxu0
    %v1210 = vadd.f32 0.0, %v1209
    %v1211 = vpop.f32.mrb[0].mxu0
    %v1212 = vadd.f32 0.0, %v1211
    %1213 = vdwg.mxu0
    %v1214 = vadd.f32 %v1018, %v1139
    %v1215 = vadd.f32 %v1019, %v1141
    %v1216 = vadd.f32 %v1020, %v1210
    %v1217 = vadd.f32 %v1021, %v1212
    %v1218 = vlaneseq
    %v1219 = vshrl.u32 %v1218, 7
    %v1220 = vsub.s32 4, %v1219
    %v1221 = vrot.slane %v126, %v1220
    %v1222 = vlaneseq
    %v1223 = vshrl.u32 %v1222, 7
    %v1224 = vsub.s32 4, %v1223
    %v1225 = vrot.slane %v127, %v1224
    %v1226 = vlaneseq
    %v1227 = vshrl.u32 %v1226, 7
    %v1228 = vsub.s32 4, %v1227
    %v1229 = vrot.slane %v128, %v1228
    %v1230 = vlaneseq
    %v1231 = vshrl.u32 %v1230, 7
    %v1232 = vsub.s32 4, %v1231
    %v1233 = vrot.slane %v129, %v1232
    %v1234 = vmul.f32 %v1221, %v430
    %v1235 = vmul.f32 %v1225, %v434
    %v1236 = vmul.f32 %v1229, %v432
    %v1237 = vmul.f32 %v1233, %v437
    %s1238 = scalar_lea.vmem %s4, 32
    %v1239 = vld [vmem:[%s1238] sm:$0xff]
    %v1241 = vsel %vm510, %v1239, 0
    %v1244 = vsel %vm514, %v1234, 0
    %v1247 = vsel %vm514, %v1235, 0
    %v1250 = vsel %vm514, %v1236, 0
    %v1253 = vsel %vm514, %v1237, 0
    %1255 = vmatprep.subr.mxu0 %v1247
    %1256 = vmatpush1.msra.mxu0 %v1244
    %1257 = vmatprep.subr.mxu0 0.0
    %1258 = vmatpush1.msra.mxu0 0.0
    %1259 = vmatprep.subr.mxu0 0.0
    %1260 = vmatpush1.msra.mxu0 0.0
    %1261 = vmatprep.subr.mxu0 0.0
    %1262 = vmatpush1.msra.mxu0 0.0
    %1263 = vmatprep.subr.mxu0 0.0
    %1264 = vmatpush1.msra.mxu0 0.0
    %1265 = vmatprep.subr.mxu0 0.0
    %1266 = vmatpush1.msra.mxu0 0.0
    %1267 = vmatprep.subr.mxu0 0.0
    %1268 = vmatpush1.msra.mxu0 0.0
    %1269 = vmatprep.subr.mxu0 0.0
    %1270 = vmatpush1.msra.mxu0 0.0
    %1271 = vmatprep.subr.mxu0 0.0
    %1272 = vmatpush1.msra.mxu0 0.0
    %1273 = vmatprep.subr.mxu0 0.0
    %1274 = vmatpush1.msra.mxu0 0.0
    %1275 = vmatprep.subr.mxu0 0.0
    %1276 = vmatpush1.msra.mxu0 0.0
    %1277 = vmatprep.subr.mxu0 0.0
    %1278 = vmatpush1.msra.mxu0 0.0
    %1279 = vmatprep.subr.mxu0 0.0
    %1280 = vmatpush1.msra.mxu0 0.0
    %1281 = vmatprep.subr.mxu0 0.0
    %1282 = vmatpush1.msra.mxu0 0.0
    %1283 = vmatprep.subr.mxu0 0.0
    %1284 = vmatpush1.msra.mxu0 0.0
    %1285 = vmatprep.subr.mxu0 0.0
    %1286 = vmatpush1.msra.mxu0 0.0
    %1287 = vmatprep.subr.mxu0 0.0
    %1288 = vmatpush1.msra.mxu0 0.0
    %1289 = vmatprep.subr.mxu0 0.0
    %1290 = vmatpush1.msra.mxu0 0.0
    %1291 = vmatprep.subr.mxu0 0.0
    %1292 = vmatpush1.msra.mxu0 0.0
    %1293 = vmatprep.subr.mxu0 0.0
    %1294 = vmatpush1.msra.mxu0 0.0
    %1295 = vmatprep.subr.mxu0 0.0
    %1296 = vmatpush1.msra.mxu0 0.0
    %1297 = vmatprep.subr.mxu0 0.0
    %1298 = vmatpush1.msra.mxu0 0.0
    %1299 = vmatprep.subr.mxu0 0.0
    %1300 = vmatpush1.msra.mxu0 0.0
    %1301 = vmatprep.subr.mxu0 0.0
    %1302 = vmatpush1.msra.mxu0 0.0
    %1303 = vmatprep.subr.mxu0 0.0
    %1304 = vmatpush1.msra.mxu0 0.0
    %1305 = vmatprep.subr.mxu0 0.0
    %1306 = vmatpush1.msra.mxu0 0.0
    %1307 = vmatprep.subr.mxu0 0.0
    %1308 = vmatpush1.msra.mxu0 0.0
    %1309 = vmatprep.subr.mxu0 0.0
    %1310 = vmatpush1.msra.mxu0 0.0
    %1311 = vmatprep.subr.mxu0 0.0
    %1312 = vmatpush1.msra.mxu0 0.0
    %1313 = vmatprep.subr.mxu0 0.0
    %1314 = vmatpush1.msra.mxu0 0.0
    %1315 = vmatprep.subr.mxu0 0.0
    %1316 = vmatpush1.msra.mxu0 0.0
    %1317 = vmatprep.subr.mxu0 0.0
    %1318 = vmatpush1.msra.mxu0 0.0
    %1319 = vmatprep.mubr.f32.mxu0 0.0
    %1320 = vmatmul.mubr.f32.gmra.mrb[0].mxu0 %v1241
    %v1321 = vpop.f32.mrb[0].mxu0
    %v1322 = vadd.f32 0.0, %v1321
    %v1323 = vpop.f32.mrb[0].mxu0
    %v1324 = vadd.f32 0.0, %v1323
    %1325 = vdwg.mxu0
    %1326 = vmatprep.subr.mxu0 %v1253
    %1327 = vmatpush1.msra.mxu0 %v1250
    %1328 = vmatprep.subr.mxu0 0.0
    %1329 = vmatpush1.msra.mxu0 0.0
    %1330 = vmatprep.subr.mxu0 0.0
    %1331 = vmatpush1.msra.mxu0 0.0
    %1332 = vmatprep.subr.mxu0 0.0
    %1333 = vmatpush1.msra.mxu0 0.0
    %1334 = vmatprep.subr.mxu0 0.0
    %1335 = vmatpush1.msra.mxu0 0.0
    %1336 = vmatprep.subr.mxu0 0.0
    %1337 = vmatpush1.msra.mxu0 0.0
    %1338 = vmatprep.subr.mxu0 0.0
    %1339 = vmatpush1.msra.mxu0 0.0
    %1340 = vmatprep.subr.mxu0 0.0
    %1341 = vmatpush1.msra.mxu0 0.0
    %1342 = vmatprep.subr.mxu0 0.0
    %1343 = vmatpush1.msra.mxu0 0.0
    %1344 = vmatprep.subr.mxu0 0.0
    %1345 = vmatpush1.msra.mxu0 0.0
    %1346 = vmatprep.subr.mxu0 0.0
    %1347 = vmatpush1.msra.mxu0 0.0
    %1348 = vmatprep.subr.mxu0 0.0
    %1349 = vmatpush1.msra.mxu0 0.0
    %1350 = vmatprep.subr.mxu0 0.0
    %1351 = vmatpush1.msra.mxu0 0.0
    %1352 = vmatprep.subr.mxu0 0.0
    %1353 = vmatpush1.msra.mxu0 0.0
    %1354 = vmatprep.subr.mxu0 0.0
    %1355 = vmatpush1.msra.mxu0 0.0
    %1356 = vmatprep.subr.mxu0 0.0
    %1357 = vmatpush1.msra.mxu0 0.0
    %1358 = vmatprep.subr.mxu0 0.0
    %1359 = vmatpush1.msra.mxu0 0.0
    %1360 = vmatprep.subr.mxu0 0.0
    %1361 = vmatpush1.msra.mxu0 0.0
    %1362 = vmatprep.subr.mxu0 0.0
    %1363 = vmatpush1.msra.mxu0 0.0
    %1364 = vmatprep.subr.mxu0 0.0
    %1365 = vmatpush1.msra.mxu0 0.0
    %1366 = vmatprep.subr.mxu0 0.0
    %1367 = vmatpush1.msra.mxu0 0.0
    %1368 = vmatprep.subr.mxu0 0.0
    %1369 = vmatpush1.msra.mxu0 0.0
    %1370 = vmatprep.subr.mxu0 0.0
    %1371 = vmatpush1.msra.mxu0 0.0
    %1372 = vmatprep.subr.mxu0 0.0
    %1373 = vmatpush1.msra.mxu0 0.0
    %1374 = vmatprep.subr.mxu0 0.0
    %1375 = vmatpush1.msra.mxu0 0.0
    %1376 = vmatprep.subr.mxu0 0.0
    %1377 = vmatpush1.msra.mxu0 0.0
    %1378 = vmatprep.subr.mxu0 0.0
    %1379 = vmatpush1.msra.mxu0 0.0
    %1380 = vmatprep.subr.mxu0 0.0
    %1381 = vmatpush1.msra.mxu0 0.0
    %1382 = vmatprep.subr.mxu0 0.0
    %1383 = vmatpush1.msra.mxu0 0.0
    %1384 = vmatprep.subr.mxu0 0.0
    %1385 = vmatpush1.msra.mxu0 0.0
    %1386 = vmatprep.subr.mxu0 0.0
    %1387 = vmatpush1.msra.mxu0 0.0
    %1388 = vmatprep.subr.mxu0 0.0
    %1389 = vmatpush1.msra.mxu0 0.0
    %1390 = vmatprep.mubr.f32.mxu0 0.0
    %1391 = vmatmul.mubr.f32.gmra.mrb[0].mxu0 %v1241
    %v1392 = vpop.f32.mrb[0].mxu0
    %v1393 = vadd.f32 0.0, %v1392
    %v1394 = vpop.f32.mrb[0].mxu0
    %v1395 = vadd.f32 0.0, %v1394
    %1396 = vdwg.mxu0
    %v1397 = vadd.f32 %v1214, %v1322
    %v1398 = vadd.f32 %v1215, %v1324
    %v1399 = vadd.f32 %v1216, %v1393
    %v1400 = vadd.f32 %v1217, %v1395
    %1401 = vrot.lane.b32.xlu0 %v430, 127
    %v1402 = vpop.permute.xlu0 %1401
    %1403 = vrot.lane.b32.xlu0 %v434, 127
    %v1404 = vpop.permute.xlu0 %1403
    %1405 = vrot.lane.b32.xlu0 %v432, 127
    %v1406 = vpop.permute.xlu0 %1405
    %1407 = vrot.lane.b32.xlu0 %v437, 127
    %v1408 = vpop.permute.xlu0 %1407
    %vm1409 = vcmp.lt.s32.totalorder %v448, 127
    %v1410 = vsel %vm1409, %v1406, %v1408
    %v1411 = vsel %vm1409, %v1404, %v1406
    %v1412 = vsel %vm1409, %v1402, %v1404
    %v1413 = vsel %vm1409, %v1408, %v1402
    %v1414 = vlaneseq
    %v1415 = vshrl.u32 %v1414, 7
    %v1416 = vsub.s32 5, %v1415
    %v1417 = vrot.slane %v126, %v1416
    %v1418 = vlaneseq
    %v1419 = vshrl.u32 %v1418, 7
    %v1420 = vsub.s32 5, %v1419
    %v1421 = vrot.slane %v127, %v1420
    %v1422 = vlaneseq
    %v1423 = vshrl.u32 %v1422, 7
    %v1424 = vsub.s32 5, %v1423
    %v1425 = vrot.slane %v128, %v1424
    %v1426 = vlaneseq
    %v1427 = vshrl.u32 %v1426, 7
    %v1428 = vsub.s32 5, %v1427
    %v1429 = vrot.slane %v129, %v1428
    %v1430 = vmul.f32 %v1417, %v1412
    %v1431 = vmul.f32 %v1421, %v1411
    %v1432 = vmul.f32 %v1425, %v1410
    %v1433 = vmul.f32 %v1429, %v1413
    %s1434 = scalar_lea.vmem %s4, 40
    %v1435 = vld [vmem:[%s1434] sm:$0xff]
    %v1437 = vsel %vm510, %v1435, 0
    %v1440 = vsel %vm514, %v1430, 0
    %v1443 = vsel %vm514, %v1431, 0
    %v1446 = vsel %vm514, %v1432, 0
    %v1449 = vsel %vm514, %v1433, 0
    %1451 = vmatprep.subr.mxu0 %v1443
    %1452 = vmatpush1.msra.mxu0 %v1440
    %1453 = vmatprep.subr.mxu0 0.0
    %1454 = vmatpush1.msra.mxu0 0.0
    %1455 = vmatprep.subr.mxu0 0.0
    %1456 = vmatpush1.msra.mxu0 0.0
    %1457 = vmatprep.subr.mxu0 0.0
    %1458 = vmatpush1.msra.mxu0 0.0
    %1459 = vmatprep.subr.mxu0 0.0
    %1460 = vmatpush1.msra.mxu0 0.0
    %1461 = vmatprep.subr.mxu0 0.0
    %1462 = vmatpush1.msra.mxu0 0.0
    %1463 = vmatprep.subr.mxu0 0.0
    %1464 = vmatpush1.msra.mxu0 0.0
    %1465 = vmatprep.subr.mxu0 0.0
    %1466 = vmatpush1.msra.mxu0 0.0
    %1467 = vmatprep.subr.mxu0 0.0
    %1468 = vmatpush1.msra.mxu0 0.0
    %1469 = vmatprep.subr.mxu0 0.0
    %1470 = vmatpush1.msra.mxu0 0.0
    %1471 = vmatprep.subr.mxu0 0.0
    %1472 = vmatpush1.msra.mxu0 0.0
    %1473 = vmatprep.subr.mxu0 0.0
    %1474 = vmatpush1.msra.mxu0 0.0
    %1475 = vmatprep.subr.mxu0 0.0
    %1476 = vmatpush1.msra.mxu0 0.0
    %1477 = vmatprep.subr.mxu0 0.0
    %1478 = vmatpush1.msra.mxu0 0.0
    %1479 = vmatprep.subr.mxu0 0.0
    %1480 = vmatpush1.msra.mxu0 0.0
    %1481 = vmatprep.subr.mxu0 0.0
    %1482 = vmatpush1.msra.mxu0 0.0
    %1483 = vmatprep.subr.mxu0 0.0
    %1484 = vmatpush1.msra.mxu0 0.0
    %1485 = vmatprep.subr.mxu0 0.0
    %1486 = vmatpush1.msra.mxu0 0.0
    %1487 = vmatprep.subr.mxu0 0.0
    %1488 = vmatpush1.msra.mxu0 0.0
    %1489 = vmatprep.subr.mxu0 0.0
    %1490 = vmatpush1.msra.mxu0 0.0
    %1491 = vmatprep.subr.mxu0 0.0
    %1492 = vmatpush1.msra.mxu0 0.0
    %1493 = vmatprep.subr.mxu0 0.0
    %1494 = vmatpush1.msra.mxu0 0.0
    %1495 = vmatprep.subr.mxu0 0.0
    %1496 = vmatpush1.msra.mxu0 0.0
    %1497 = vmatprep.subr.mxu0 0.0
    %1498 = vmatpush1.msra.mxu0 0.0
    %1499 = vmatprep.subr.mxu0 0.0
    %1500 = vmatpush1.msra.mxu0 0.0
    %1501 = vmatprep.subr.mxu0 0.0
    %1502 = vmatpush1.msra.mxu0 0.0
    %1503 = vmatprep.subr.mxu0 0.0
    %1504 = vmatpush1.msra.mxu0 0.0
    %1505 = vmatprep.subr.mxu0 0.0
    %1506 = vmatpush1.msra.mxu0 0.0
    %1507 = vmatprep.subr.mxu0 0.0
    %1508 = vmatpush1.msra.mxu0 0.0
    %1509 = vmatprep.subr.mxu0 0.0
    %1510 = vmatpush1.msra.mxu0 0.0
    %1511 = vmatprep.subr.mxu0 0.0
    %1512 = vmatpush1.msra.mxu0 0.0
    %1513 = vmatprep.subr.mxu0 0.0
    %1514 = vmatpush1.msra.mxu0 0.0
    %1515 = vmatprep.mubr.f32.mxu0 0.0
    %1516 = vmatmul.mubr.f32.gmra.mrb[0].mxu0 %v1437
    %v1517 = vpop.f32.mrb[0].mxu0
    %v1518 = vadd.f32 0.0, %v1517
    %v1519 = vpop.f32.mrb[0].mxu0
    %v1520 = vadd.f32 0.0, %v1519
    %1521 = vdwg.mxu0
    %1522 = vmatprep.subr.mxu0 %v1449
    %1523 = vmatpush1.msra.mxu0 %v1446
    %1524 = vmatprep.subr.mxu0 0.0
    %1525 = vmatpush1.msra.mxu0 0.0
    %1526 = vmatprep.subr.mxu0 0.0
    %1527 = vmatpush1.msra.mxu0 0.0
    %1528 = vmatprep.subr.mxu0 0.0
    %1529 = vmatpush1.msra.mxu0 0.0
    %1530 = vmatprep.subr.mxu0 0.0
    %1531 = vmatpush1.msra.mxu0 0.0
    %1532 = vmatprep.subr.mxu0 0.0
    %1533 = vmatpush1.msra.mxu0 0.0
    %1534 = vmatprep.subr.mxu0 0.0
    %1535 = vmatpush1.msra.mxu0 0.0
    %1536 = vmatprep.subr.mxu0 0.0
    %1537 = vmatpush1.msra.mxu0 0.0
    %1538 = vmatprep.subr.mxu0 0.0
    %1539 = vmatpush1.msra.mxu0 0.0
    %1540 = vmatprep.subr.mxu0 0.0
    %1541 = vmatpush1.msra.mxu0 0.0
    %1542 = vmatprep.subr.mxu0 0.0
    %1543 = vmatpush1.msra.mxu0 0.0
    %1544 = vmatprep.subr.mxu0 0.0
    %1545 = vmatpush1.msra.mxu0 0.0
    %1546 = vmatprep.subr.mxu0 0.0
    %1547 = vmatpush1.msra.mxu0 0.0
    %1548 = vmatprep.subr.mxu0 0.0
    %1549 = vmatpush1.msra.mxu0 0.0
    %1550 = vmatprep.subr.mxu0 0.0
    %1551 = vmatpush1.msra.mxu0 0.0
    %1552 = vmatprep.subr.mxu0 0.0
    %1553 = vmatpush1.msra.mxu0 0.0
    %1554 = vmatprep.subr.mxu0 0.0
    %1555 = vmatpush1.msra.mxu0 0.0
    %1556 = vmatprep.subr.mxu0 0.0
    %1557 = vmatpush1.msra.mxu0 0.0
    %1558 = vmatprep.subr.mxu0 0.0
    %1559 = vmatpush1.msra.mxu0 0.0
    %1560 = vmatprep.subr.mxu0 0.0
    %1561 = vmatpush1.msra.mxu0 0.0
    %1562 = vmatprep.subr.mxu0 0.0
    %1563 = vmatpush1.msra.mxu0 0.0
    %1564 = vmatprep.subr.mxu0 0.0
    %1565 = vmatpush1.msra.mxu0 0.0
    %1566 = vmatprep.subr.mxu0 0.0
    %1567 = vmatpush1.msra.mxu0 0.0
    %1568 = vmatprep.subr.mxu0 0.0
    %1569 = vmatpush1.msra.mxu0 0.0
    %1570 = vmatprep.subr.mxu0 0.0
    %1571 = vmatpush1.msra.mxu0 0.0
    %1572 = vmatprep.subr.mxu0 0.0
    %1573 = vmatpush1.msra.mxu0 0.0
    %1574 = vmatprep.subr.mxu0 0.0
    %1575 = vmatpush1.msra.mxu0 0.0
    %1576 = vmatprep.subr.mxu0 0.0
    %1577 = vmatpush1.msra.mxu0 0.0
    %1578 = vmatprep.subr.mxu0 0.0
    %1579 = vmatpush1.msra.mxu0 0.0
    %1580 = vmatprep.subr.mxu0 0.0
    %1581 = vmatpush1.msra.mxu0 0.0
    %1582 = vmatprep.subr.mxu0 0.0
    %1583 = vmatpush1.msra.mxu0 0.0
    %1584 = vmatprep.subr.mxu0 0.0
    %1585 = vmatpush1.msra.mxu0 0.0
    %1586 = vmatprep.mubr.f32.mxu0 0.0
    %1587 = vmatmul.mubr.f32.gmra.mrb[0].mxu0 %v1437
    %v1588 = vpop.f32.mrb[0].mxu0
    %v1589 = vadd.f32 0.0, %v1588
    %v1590 = vpop.f32.mrb[0].mxu0
    %v1591 = vadd.f32 0.0, %v1590
    %1592 = vdwg.mxu0
    %v1593 = vadd.f32 %v1397, %v1518
    %v1594 = vadd.f32 %v1398, %v1520
    %v1595 = vadd.f32 %v1399, %v1589
    %v1596 = vadd.f32 %v1400, %v1591
    %1597 = vrot.lane.b32.xlu0 %v430, 113
    %v1598 = vpop.permute.xlu0 %1597
    %1599 = vrot.lane.b32.xlu0 %v434, 113
    %v1600 = vpop.permute.xlu0 %1599
    %1601 = vrot.lane.b32.xlu0 %v432, 113
    %v1602 = vpop.permute.xlu0 %1601
    %1603 = vrot.lane.b32.xlu0 %v437, 113
    %v1604 = vpop.permute.xlu0 %1603
    %vm1605 = vcmp.lt.s32.totalorder %v448, 113
    %v1606 = vsel %vm1605, %v1602, %v1604
    %v1607 = vsel %vm1605, %v1600, %v1602
    %v1608 = vsel %vm1605, %v1598, %v1600
    %v1609 = vsel %vm1605, %v1604, %v1598
    %v1610 = vlaneseq
    %v1611 = vshrl.u32 %v1610, 7
    %v1612 = vsub.s32 6, %v1611
    %v1613 = vrot.slane %v126, %v1612
    %v1614 = vlaneseq
    %v1615 = vshrl.u32 %v1614, 7
    %v1616 = vsub.s32 6, %v1615
    %v1617 = vrot.slane %v127, %v1616
    %v1618 = vlaneseq
    %v1619 = vshrl.u32 %v1618, 7
    %v1620 = vsub.s32 6, %v1619
    %v1621 = vrot.slane %v128, %v1620
    %v1622 = vlaneseq
    %v1623 = vshrl.u32 %v1622, 7
    %v1624 = vsub.s32 6, %v1623
    %v1625 = vrot.slane %v129, %v1624
    %v1626 = vmul.f32 %v1613, %v1608
    %v1627 = vmul.f32 %v1617, %v1607
    %v1628 = vmul.f32 %v1621, %v1606
    %v1629 = vmul.f32 %v1625, %v1609
    %s1630 = scalar_lea.vmem %s4, 48
    %v1631 = vld [vmem:[%s1630] sm:$0xff]
    %v1633 = vsel %vm510, %v1631, 0
    %v1636 = vsel %vm514, %v1626, 0
    %v1639 = vsel %vm514, %v1627, 0
    %v1642 = vsel %vm514, %v1628, 0
    %v1645 = vsel %vm514, %v1629, 0
    %1647 = vmatprep.subr.mxu0 %v1639
    %1648 = vmatpush1.msra.mxu0 %v1636
    %1649 = vmatprep.subr.mxu0 0.0
    %1650 = vmatpush1.msra.mxu0 0.0
    %1651 = vmatprep.subr.mxu0 0.0
    %1652 = vmatpush1.msra.mxu0 0.0
    %1653 = vmatprep.subr.mxu0 0.0
    %1654 = vmatpush1.msra.mxu0 0.0
    %1655 = vmatprep.subr.mxu0 0.0
    %1656 = vmatpush1.msra.mxu0 0.0
    %1657 = vmatprep.subr.mxu0 0.0
    %1658 = vmatpush1.msra.mxu0 0.0
    %1659 = vmatprep.subr.mxu0 0.0
    %1660 = vmatpush1.msra.mxu0 0.0
    %1661 = vmatprep.subr.mxu0 0.0
    %1662 = vmatpush1.msra.mxu0 0.0
    %1663 = vmatprep.subr.mxu0 0.0
    %1664 = vmatpush1.msra.mxu0 0.0
    %1665 = vmatprep.subr.mxu0 0.0
    %1666 = vmatpush1.msra.mxu0 0.0
    %1667 = vmatprep.subr.mxu0 0.0
    %1668 = vmatpush1.msra.mxu0 0.0
    %1669 = vmatprep.subr.mxu0 0.0
    %1670 = vmatpush1.msra.mxu0 0.0
    %1671 = vmatprep.subr.mxu0 0.0
    %1672 = vmatpush1.msra.mxu0 0.0
    %1673 = vmatprep.subr.mxu0 0.0
    %1674 = vmatpush1.msra.mxu0 0.0
    %1675 = vmatprep.subr.mxu0 0.0
    %1676 = vmatpush1.msra.mxu0 0.0
    %1677 = vmatprep.subr.mxu0 0.0
    %1678 = vmatpush1.msra.mxu0 0.0
    %1679 = vmatprep.subr.mxu0 0.0
    %1680 = vmatpush1.msra.mxu0 0.0
    %1681 = vmatprep.subr.mxu0 0.0
    %1682 = vmatpush1.msra.mxu0 0.0
    %1683 = vmatprep.subr.mxu0 0.0
    %1684 = vmatpush1.msra.mxu0 0.0
    %1685 = vmatprep.subr.mxu0 0.0
    %1686 = vmatpush1.msra.mxu0 0.0
    %1687 = vmatprep.subr.mxu0 0.0
    %1688 = vmatpush1.msra.mxu0 0.0
    %1689 = vmatprep.subr.mxu0 0.0
    %1690 = vmatpush1.msra.mxu0 0.0
    %1691 = vmatprep.subr.mxu0 0.0
    %1692 = vmatpush1.msra.mxu0 0.0
    %1693 = vmatprep.subr.mxu0 0.0
    %1694 = vmatpush1.msra.mxu0 0.0
    %1695 = vmatprep.subr.mxu0 0.0
    %1696 = vmatpush1.msra.mxu0 0.0
    %1697 = vmatprep.subr.mxu0 0.0
    %1698 = vmatpush1.msra.mxu0 0.0
    %1699 = vmatprep.subr.mxu0 0.0
    %1700 = vmatpush1.msra.mxu0 0.0
    %1701 = vmatprep.subr.mxu0 0.0
    %1702 = vmatpush1.msra.mxu0 0.0
    %1703 = vmatprep.subr.mxu0 0.0
    %1704 = vmatpush1.msra.mxu0 0.0
    %1705 = vmatprep.subr.mxu0 0.0
    %1706 = vmatpush1.msra.mxu0 0.0
    %1707 = vmatprep.subr.mxu0 0.0
    %1708 = vmatpush1.msra.mxu0 0.0
    %1709 = vmatprep.subr.mxu0 0.0
    %1710 = vmatpush1.msra.mxu0 0.0
    %1711 = vmatprep.mubr.f32.mxu0 0.0
    %1712 = vmatmul.mubr.f32.gmra.mrb[0].mxu0 %v1633
    %v1713 = vpop.f32.mrb[0].mxu0
    %v1714 = vadd.f32 0.0, %v1713
    %v1715 = vpop.f32.mrb[0].mxu0
    %v1716 = vadd.f32 0.0, %v1715
    %1717 = vdwg.mxu0
    %1718 = vmatprep.subr.mxu0 %v1645
    %1719 = vmatpush1.msra.mxu0 %v1642
    %1720 = vmatprep.subr.mxu0 0.0
    %1721 = vmatpush1.msra.mxu0 0.0
    %1722 = vmatprep.subr.mxu0 0.0
    %1723 = vmatpush1.msra.mxu0 0.0
    %1724 = vmatprep.subr.mxu0 0.0
    %1725 = vmatpush1.msra.mxu0 0.0
    %1726 = vmatprep.subr.mxu0 0.0
    %1727 = vmatpush1.msra.mxu0 0.0
    %1728 = vmatprep.subr.mxu0 0.0
    %1729 = vmatpush1.msra.mxu0 0.0
    %1730 = vmatprep.subr.mxu0 0.0
    %1731 = vmatpush1.msra.mxu0 0.0
    %1732 = vmatprep.subr.mxu0 0.0
    %1733 = vmatpush1.msra.mxu0 0.0
    %1734 = vmatprep.subr.mxu0 0.0
    %1735 = vmatpush1.msra.mxu0 0.0
    %1736 = vmatprep.subr.mxu0 0.0
    %1737 = vmatpush1.msra.mxu0 0.0
    %1738 = vmatprep.subr.mxu0 0.0
    %1739 = vmatpush1.msra.mxu0 0.0
    %1740 = vmatprep.subr.mxu0 0.0
    %1741 = vmatpush1.msra.mxu0 0.0
    %1742 = vmatprep.subr.mxu0 0.0
    %1743 = vmatpush1.msra.mxu0 0.0
    %1744 = vmatprep.subr.mxu0 0.0
    %1745 = vmatpush1.msra.mxu0 0.0
    %1746 = vmatprep.subr.mxu0 0.0
    %1747 = vmatpush1.msra.mxu0 0.0
    %1748 = vmatprep.subr.mxu0 0.0
    %1749 = vmatpush1.msra.mxu0 0.0
    %1750 = vmatprep.subr.mxu0 0.0
    %1751 = vmatpush1.msra.mxu0 0.0
    %1752 = vmatprep.subr.mxu0 0.0
    %1753 = vmatpush1.msra.mxu0 0.0
    %1754 = vmatprep.subr.mxu0 0.0
    %1755 = vmatpush1.msra.mxu0 0.0
    %1756 = vmatprep.subr.mxu0 0.0
    %1757 = vmatpush1.msra.mxu0 0.0
    %1758 = vmatprep.subr.mxu0 0.0
    %1759 = vmatpush1.msra.mxu0 0.0
    %1760 = vmatprep.subr.mxu0 0.0
    %1761 = vmatpush1.msra.mxu0 0.0
    %1762 = vmatprep.subr.mxu0 0.0
    %1763 = vmatpush1.msra.mxu0 0.0
    %1764 = vmatprep.subr.mxu0 0.0
    %1765 = vmatpush1.msra.mxu0 0.0
    %1766 = vmatprep.subr.mxu0 0.0
    %1767 = vmatpush1.msra.mxu0 0.0
    %1768 = vmatprep.subr.mxu0 0.0
    %1769 = vmatpush1.msra.mxu0 0.0
    %1770 = vmatprep.subr.mxu0 0.0
    %1771 = vmatpush1.msra.mxu0 0.0
    %1772 = vmatprep.subr.mxu0 0.0
    %1773 = vmatpush1.msra.mxu0 0.0
    %1774 = vmatprep.subr.mxu0 0.0
    %1775 = vmatpush1.msra.mxu0 0.0
    %1776 = vmatprep.subr.mxu0 0.0
    %1777 = vmatpush1.msra.mxu0 0.0
    %1778 = vmatprep.subr.mxu0 0.0
    %1779 = vmatpush1.msra.mxu0 0.0
    %1780 = vmatprep.subr.mxu0 0.0
    %1781 = vmatpush1.msra.mxu0 0.0
    %1782 = vmatprep.mubr.f32.mxu0 0.0
    %1783 = vmatmul.mubr.f32.gmra.mrb[0].mxu0 %v1633
    %v1784 = vpop.f32.mrb[0].mxu0
    %v1785 = vadd.f32 0.0, %v1784
    %v1786 = vpop.f32.mrb[0].mxu0
    %v1787 = vadd.f32 0.0, %v1786
    %1788 = vdwg.mxu0
    %v1789 = vadd.f32 %v1593, %v1714
    %v1790 = vadd.f32 %v1594, %v1716
    %v1791 = vadd.f32 %v1595, %v1785
    %v1792 = vadd.f32 %v1596, %v1787
    %1793 = vrot.lane.b32.xlu0 %v430, 112
    %v1794 = vpop.permute.xlu0 %1793
    %1795 = vrot.lane.b32.xlu0 %v434, 112
    %v1796 = vpop.permute.xlu0 %1795
    %1797 = vrot.lane.b32.xlu0 %v432, 112
    %v1798 = vpop.permute.xlu0 %1797
    %1799 = vrot.lane.b32.xlu0 %v437, 112
    %v1800 = vpop.permute.xlu0 %1799
    %vm1801 = vcmp.lt.s32.totalorder %v448, 112
    %v1802 = vsel %vm1801, %v1798, %v1800
    %v1803 = vsel %vm1801, %v1796, %v1798
    %v1804 = vsel %vm1801, %v1794, %v1796
    %v1805 = vsel %vm1801, %v1800, %v1794
    %v1806 = vlaneseq
    %v1807 = vshrl.u32 %v1806, 7
    %v1808 = vsub.s32 7, %v1807
    %v1809 = vrot.slane %v126, %v1808
    %v1810 = vlaneseq
    %v1811 = vshrl.u32 %v1810, 7
    %v1812 = vsub.s32 7, %v1811
    %v1813 = vrot.slane %v127, %v1812
    %v1814 = vlaneseq
    %v1815 = vshrl.u32 %v1814, 7
    %v1816 = vsub.s32 7, %v1815
    %v1817 = vrot.slane %v128, %v1816
    %v1818 = vlaneseq
    %v1819 = vshrl.u32 %v1818, 7
    %v1820 = vsub.s32 7, %v1819
    %v1821 = vrot.slane %v129, %v1820
    %v1822 = vmul.f32 %v1809, %v1804
    %v1823 = vmul.f32 %v1813, %v1803
    %v1824 = vmul.f32 %v1817, %v1802
    %v1825 = vmul.f32 %v1821, %v1805
    %s1826 = scalar_lea.vmem %s4, 56
    %v1827 = vld [vmem:[%s1826] sm:$0xff]
    %v1829 = vsel %vm510, %v1827, 0
    %v1832 = vsel %vm514, %v1822, 0
    %v1835 = vsel %vm514, %v1823, 0
    %v1838 = vsel %vm514, %v1824, 0
    %v1841 = vsel %vm514, %v1825, 0
    %1843 = vmatprep.subr.mxu0 %v1835
    %1844 = vmatpush1.msra.mxu0 %v1832
    %1845 = vmatprep.subr.mxu0 0.0
    %1846 = vmatpush1.msra.mxu0 0.0
    %1847 = vmatprep.subr.mxu0 0.0
    %1848 = vmatpush1.msra.mxu0 0.0
    %1849 = vmatprep.subr.mxu0 0.0
    %1850 = vmatpush1.msra.mxu0 0.0
    %1851 = vmatprep.subr.mxu0 0.0
    %1852 = vmatpush1.msra.mxu0 0.0
    %1853 = vmatprep.subr.mxu0 0.0
    %1854 = vmatpush1.msra.mxu0 0.0
    %1855 = vmatprep.subr.mxu0 0.0
    %1856 = vmatpush1.msra.mxu0 0.0
    %1857 = vmatprep.subr.mxu0 0.0
    %1858 = vmatpush1.msra.mxu0 0.0
    %1859 = vmatprep.subr.mxu0 0.0
    %1860 = vmatpush1.msra.mxu0 0.0
    %1861 = vmatprep.subr.mxu0 0.0
    %1862 = vmatpush1.msra.mxu0 0.0
    %1863 = vmatprep.subr.mxu0 0.0
    %1864 = vmatpush1.msra.mxu0 0.0
    %1865 = vmatprep.subr.mxu0 0.0
    %1866 = vmatpush1.msra.mxu0 0.0
    %1867 = vmatprep.subr.mxu0 0.0
    %1868 = vmatpush1.msra.mxu0 0.0
    %1869 = vmatprep.subr.mxu0 0.0
    %1870 = vmatpush1.msra.mxu0 0.0
    %1871 = vmatprep.subr.mxu0 0.0
    %1872 = vmatpush1.msra.mxu0 0.0
    %1873 = vmatprep.subr.mxu0 0.0
    %1874 = vmatpush1.msra.mxu0 0.0
    %1875 = vmatprep.subr.mxu0 0.0
    %1876 = vmatpush1.msra.mxu0 0.0
    %1877 = vmatprep.subr.mxu0 0.0
    %1878 = vmatpush1.msra.mxu0 0.0
    %1879 = vmatprep.subr.mxu0 0.0
    %1880 = vmatpush1.msra.mxu0 0.0
    %1881 = vmatprep.subr.mxu0 0.0
    %1882 = vmatpush1.msra.mxu0 0.0
    %1883 = vmatprep.subr.mxu0 0.0
    %1884 = vmatpush1.msra.mxu0 0.0
    %1885 = vmatprep.subr.mxu0 0.0
    %1886 = vmatpush1.msra.mxu0 0.0
    %1887 = vmatprep.subr.mxu0 0.0
    %1888 = vmatpush1.msra.mxu0 0.0
    %1889 = vmatprep.subr.mxu0 0.0
    %1890 = vmatpush1.msra.mxu0 0.0
    %1891 = vmatprep.subr.mxu0 0.0
    %1892 = vmatpush1.msra.mxu0 0.0
    %1893 = vmatprep.subr.mxu0 0.0
    %1894 = vmatpush1.msra.mxu0 0.0
    %1895 = vmatprep.subr.mxu0 0.0
    %1896 = vmatpush1.msra.mxu0 0.0
    %1897 = vmatprep.subr.mxu0 0.0
    %1898 = vmatpush1.msra.mxu0 0.0
    %1899 = vmatprep.subr.mxu0 0.0
    %1900 = vmatpush1.msra.mxu0 0.0
    %1901 = vmatprep.subr.mxu0 0.0
    %1902 = vmatpush1.msra.mxu0 0.0
    %1903 = vmatprep.subr.mxu0 0.0
    %1904 = vmatpush1.msra.mxu0 0.0
    %1905 = vmatprep.subr.mxu0 0.0
    %1906 = vmatpush1.msra.mxu0 0.0
    %1907 = vmatprep.mubr.f32.mxu0 0.0
    %1908 = vmatmul.mubr.f32.gmra.mrb[0].mxu0 %v1829
    %v1909 = vpop.f32.mrb[0].mxu0
    %v1910 = vadd.f32 0.0, %v1909
    %v1911 = vpop.f32.mrb[0].mxu0
    %v1912 = vadd.f32 0.0, %v1911
    %1913 = vdwg.mxu0
    %1914 = vmatprep.subr.mxu0 %v1841
    %1915 = vmatpush1.msra.mxu0 %v1838
    %1916 = vmatprep.subr.mxu0 0.0
    %1917 = vmatpush1.msra.mxu0 0.0
    %1918 = vmatprep.subr.mxu0 0.0
    %1919 = vmatpush1.msra.mxu0 0.0
    %1920 = vmatprep.subr.mxu0 0.0
    %1921 = vmatpush1.msra.mxu0 0.0
    %1922 = vmatprep.subr.mxu0 0.0
    %1923 = vmatpush1.msra.mxu0 0.0
    %1924 = vmatprep.subr.mxu0 0.0
    %1925 = vmatpush1.msra.mxu0 0.0
    %1926 = vmatprep.subr.mxu0 0.0
    %1927 = vmatpush1.msra.mxu0 0.0
    %1928 = vmatprep.subr.mxu0 0.0
    %1929 = vmatpush1.msra.mxu0 0.0
    %1930 = vmatprep.subr.mxu0 0.0
    %1931 = vmatpush1.msra.mxu0 0.0
    %1932 = vmatprep.subr.mxu0 0.0
    %1933 = vmatpush1.msra.mxu0 0.0
    %1934 = vmatprep.subr.mxu0 0.0
    %1935 = vmatpush1.msra.mxu0 0.0
    %1936 = vmatprep.subr.mxu0 0.0
    %1937 = vmatpush1.msra.mxu0 0.0
    %1938 = vmatprep.subr.mxu0 0.0
    %1939 = vmatpush1.msra.mxu0 0.0
    %1940 = vmatprep.subr.mxu0 0.0
    %1941 = vmatpush1.msra.mxu0 0.0
    %1942 = vmatprep.subr.mxu0 0.0
    %1943 = vmatpush1.msra.mxu0 0.0
    %1944 = vmatprep.subr.mxu0 0.0
    %1945 = vmatpush1.msra.mxu0 0.0
    %1946 = vmatprep.subr.mxu0 0.0
    %1947 = vmatpush1.msra.mxu0 0.0
    %1948 = vmatprep.subr.mxu0 0.0
    %1949 = vmatpush1.msra.mxu0 0.0
    %1950 = vmatprep.subr.mxu0 0.0
    %1951 = vmatpush1.msra.mxu0 0.0
    %1952 = vmatprep.subr.mxu0 0.0
    %1953 = vmatpush1.msra.mxu0 0.0
    %1954 = vmatprep.subr.mxu0 0.0
    %1955 = vmatpush1.msra.mxu0 0.0
    %1956 = vmatprep.subr.mxu0 0.0
    %1957 = vmatpush1.msra.mxu0 0.0
    %1958 = vmatprep.subr.mxu0 0.0
    %1959 = vmatpush1.msra.mxu0 0.0
    %1960 = vmatprep.subr.mxu0 0.0
    %1961 = vmatpush1.msra.mxu0 0.0
    %1962 = vmatprep.subr.mxu0 0.0
    %1963 = vmatpush1.msra.mxu0 0.0
    %1964 = vmatprep.subr.mxu0 0.0
    %1965 = vmatpush1.msra.mxu0 0.0
    %1966 = vmatprep.subr.mxu0 0.0
    %1967 = vmatpush1.msra.mxu0 0.0
    %1968 = vmatprep.subr.mxu0 0.0
    %1969 = vmatpush1.msra.mxu0 0.0
    %1970 = vmatprep.subr.mxu0 0.0
    %1971 = vmatpush1.msra.mxu0 0.0
    %1972 = vmatprep.subr.mxu0 0.0
    %1973 = vmatpush1.msra.mxu0 0.0
    %1974 = vmatprep.subr.mxu0 0.0
    %1975 = vmatpush1.msra.mxu0 0.0
    %1976 = vmatprep.subr.mxu0 0.0
    %1977 = vmatpush1.msra.mxu0 0.0
    %1978 = vmatprep.mubr.f32.mxu0 0.0
    %1979 = vmatmul.mubr.f32.gmra.mrb[0].mxu0 %v1829
    %v1980 = vpop.f32.mrb[0].mxu0
    %v1981 = vadd.f32 0.0, %v1980
    %v1982 = vpop.f32.mrb[0].mxu0
    %v1983 = vadd.f32 0.0, %v1982
    %1984 = vdwg.mxu0
    %v1985 = vadd.f32 %v1789, %v1910
    %v1986 = vadd.f32 %v1790, %v1912
    %v1987 = vadd.f32 %v1791, %v1981
    %v1988 = vadd.f32 %v1792, %v1983
    %1989 = vrot.lane.b32.xlu0 %v430, 111
    %v1990 = vpop.permute.xlu0 %1989
    %1991 = vrot.lane.b32.xlu0 %v434, 111
    %v1992 = vpop.permute.xlu0 %1991
    %1993 = vrot.lane.b32.xlu0 %v432, 111
    %v1994 = vpop.permute.xlu0 %1993
    %1995 = vrot.lane.b32.xlu0 %v437, 111
    %v1996 = vpop.permute.xlu0 %1995
    %vm1997 = vcmp.lt.s32.totalorder %v448, 111
    %v1998 = vsel %vm1997, %v1994, %v1996
    %v1999 = vsel %vm1997, %v1992, %v1994
    %v2000 = vsel %vm1997, %v1990, %v1992
    %v2001 = vsel %vm1997, %v1996, %v1990
    %v2002 = vlaneseq
    %v2003 = vshrl.u32 %v2002, 7
    %v2004 = vsub.s32 0, %v2003
    %v2005 = vrot.slane %v130, %v2004
    %v2006 = vlaneseq
    %v2007 = vshrl.u32 %v2006, 7
    %v2008 = vsub.s32 0, %v2007
    %v2009 = vrot.slane %v131, %v2008
    %v2010 = vlaneseq
    %v2011 = vshrl.u32 %v2010, 7
    %v2012 = vsub.s32 0, %v2011
    %v2013 = vrot.slane %v132, %v2012
    %v2014 = vlaneseq
    %v2015 = vshrl.u32 %v2014, 7
    %v2016 = vsub.s32 0, %v2015
    %v2017 = vrot.slane %v133, %v2016
    %v2018 = vmul.f32 %v2005, %v2000
    %v2019 = vmul.f32 %v2009, %v1999
    %v2020 = vmul.f32 %v2013, %v1998
    %v2021 = vmul.f32 %v2017, %v2001
    %s2022 = scalar_lea.vmem %s4, 64
    %v2023 = vld [vmem:[%s2022] sm:$0xff]
    %v2025 = vsel %vm510, %v2023, 0
    %v2028 = vsel %vm514, %v2018, 0
    %v2031 = vsel %vm514, %v2019, 0
    %v2034 = vsel %vm514, %v2020, 0
    %v2037 = vsel %vm514, %v2021, 0
    %2039 = vmatprep.subr.mxu0 %v2031
    %2040 = vmatpush1.msra.mxu0 %v2028
    %2041 = vmatprep.subr.mxu0 0.0
    %2042 = vmatpush1.msra.mxu0 0.0
    %2043 = vmatprep.subr.mxu0 0.0
    %2044 = vmatpush1.msra.mxu0 0.0
    %2045 = vmatprep.subr.mxu0 0.0
    %2046 = vmatpush1.msra.mxu0 0.0
    %2047 = vmatprep.subr.mxu0 0.0
    %2048 = vmatpush1.msra.mxu0 0.0
    %2049 = vmatprep.subr.mxu0 0.0
    %2050 = vmatpush1.msra.mxu0 0.0
    %2051 = vmatprep.subr.mxu0 0.0
    %2052 = vmatpush1.msra.mxu0 0.0
    %2053 = vmatprep.subr.mxu0 0.0
    %2054 = vmatpush1.msra.mxu0 0.0
    %2055 = vmatprep.subr.mxu0 0.0
    %2056 = vmatpush1.msra.mxu0 0.0
    %2057 = vmatprep.subr.mxu0 0.0
    %2058 = vmatpush1.msra.mxu0 0.0
    %2059 = vmatprep.subr.mxu0 0.0
    %2060 = vmatpush1.msra.mxu0 0.0
    %2061 = vmatprep.subr.mxu0 0.0
    %2062 = vmatpush1.msra.mxu0 0.0
    %2063 = vmatprep.subr.mxu0 0.0
    %2064 = vmatpush1.msra.mxu0 0.0
    %2065 = vmatprep.subr.mxu0 0.0
    %2066 = vmatpush1.msra.mxu0 0.0
    %2067 = vmatprep.subr.mxu0 0.0
    %2068 = vmatpush1.msra.mxu0 0.0
    %2069 = vmatprep.subr.mxu0 0.0
    %2070 = vmatpush1.msra.mxu0 0.0
    %2071 = vmatprep.subr.mxu0 0.0
    %2072 = vmatpush1.msra.mxu0 0.0
    %2073 = vmatprep.subr.mxu0 0.0
    %2074 = vmatpush1.msra.mxu0 0.0
    %2075 = vmatprep.subr.mxu0 0.0
    %2076 = vmatpush1.msra.mxu0 0.0
    %2077 = vmatprep.subr.mxu0 0.0
    %2078 = vmatpush1.msra.mxu0 0.0
    %2079 = vmatprep.subr.mxu0 0.0
    %2080 = vmatpush1.msra.mxu0 0.0
    %2081 = vmatprep.subr.mxu0 0.0
    %2082 = vmatpush1.msra.mxu0 0.0
    %2083 = vmatprep.subr.mxu0 0.0
    %2084 = vmatpush1.msra.mxu0 0.0
    %2085 = vmatprep.subr.mxu0 0.0
    %2086 = vmatpush1.msra.mxu0 0.0
    %2087 = vmatprep.subr.mxu0 0.0
    %2088 = vmatpush1.msra.mxu0 0.0
    %2089 = vmatprep.subr.mxu0 0.0
    %2090 = vmatpush1.msra.mxu0 0.0
    %2091 = vmatprep.subr.mxu0 0.0
    %2092 = vmatpush1.msra.mxu0 0.0
    %2093 = vmatprep.subr.mxu0 0.0
    %2094 = vmatpush1.msra.mxu0 0.0
    %2095 = vmatprep.subr.mxu0 0.0
    %2096 = vmatpush1.msra.mxu0 0.0
    %2097 = vmatprep.subr.mxu0 0.0
    %2098 = vmatpush1.msra.mxu0 0.0
    %2099 = vmatprep.subr.mxu0 0.0
    %2100 = vmatpush1.msra.mxu0 0.0
    %2101 = vmatprep.subr.mxu0 0.0
    %2102 = vmatpush1.msra.mxu0 0.0
    %2103 = vmatprep.mubr.f32.mxu0 0.0
    %2104 = vmatmul.mubr.f32.gmra.mrb[0].mxu0 %v2025
    %v2105 = vpop.f32.mrb[0].mxu0
    %v2106 = vadd.f32 0.0, %v2105
    %v2107 = vpop.f32.mrb[0].mxu0
    %v2108 = vadd.f32 0.0, %v2107
    %2109 = vdwg.mxu0
    %2110 = vmatprep.subr.mxu0 %v2037
    %2111 = vmatpush1.msra.mxu0 %v2034
    %2112 = vmatprep.subr.mxu0 0.0
    %2113 = vmatpush1.msra.mxu0 0.0
    %2114 = vmatprep.subr.mxu0 0.0
    %2115 = vmatpush1.msra.mxu0 0.0
    %2116 = vmatprep.subr.mxu0 0.0
    %2117 = vmatpush1.msra.mxu0 0.0
    %2118 = vmatprep.subr.mxu0 0.0
    %2119 = vmatpush1.msra.mxu0 0.0
    %2120 = vmatprep.subr.mxu0 0.0
    %2121 = vmatpush1.msra.mxu0 0.0
    %2122 = vmatprep.subr.mxu0 0.0
    %2123 = vmatpush1.msra.mxu0 0.0
    %2124 = vmatprep.subr.mxu0 0.0
    %2125 = vmatpush1.msra.mxu0 0.0
    %2126 = vmatprep.subr.mxu0 0.0
    %2127 = vmatpush1.msra.mxu0 0.0
    %2128 = vmatprep.subr.mxu0 0.0
    %2129 = vmatpush1.msra.mxu0 0.0
    %2130 = vmatprep.subr.mxu0 0.0
    %2131 = vmatpush1.msra.mxu0 0.0
    %2132 = vmatprep.subr.mxu0 0.0
    %2133 = vmatpush1.msra.mxu0 0.0
    %2134 = vmatprep.subr.mxu0 0.0
    %2135 = vmatpush1.msra.mxu0 0.0
    %2136 = vmatprep.subr.mxu0 0.0
    %2137 = vmatpush1.msra.mxu0 0.0
    %2138 = vmatprep.subr.mxu0 0.0
    %2139 = vmatpush1.msra.mxu0 0.0
    %2140 = vmatprep.subr.mxu0 0.0
    %2141 = vmatpush1.msra.mxu0 0.0
    %2142 = vmatprep.subr.mxu0 0.0
    %2143 = vmatpush1.msra.mxu0 0.0
    %2144 = vmatprep.subr.mxu0 0.0
    %2145 = vmatpush1.msra.mxu0 0.0
    %2146 = vmatprep.subr.mxu0 0.0
    %2147 = vmatpush1.msra.mxu0 0.0
    %2148 = vmatprep.subr.mxu0 0.0
    %2149 = vmatpush1.msra.mxu0 0.0
    %2150 = vmatprep.subr.mxu0 0.0
    %2151 = vmatpush1.msra.mxu0 0.0
    %2152 = vmatprep.subr.mxu0 0.0
    %2153 = vmatpush1.msra.mxu0 0.0
    %2154 = vmatprep.subr.mxu0 0.0
    %2155 = vmatpush1.msra.mxu0 0.0
    %2156 = vmatprep.subr.mxu0 0.0
    %2157 = vmatpush1.msra.mxu0 0.0
    %2158 = vmatprep.subr.mxu0 0.0
    %2159 = vmatpush1.msra.mxu0 0.0
    %2160 = vmatprep.subr.mxu0 0.0
    %2161 = vmatpush1.msra.mxu0 0.0
    %2162 = vmatprep.subr.mxu0 0.0
    %2163 = vmatpush1.msra.mxu0 0.0
    %2164 = vmatprep.subr.mxu0 0.0
    %2165 = vmatpush1.msra.mxu0 0.0
    %2166 = vmatprep.subr.mxu0 0.0
    %2167 = vmatpush1.msra.mxu0 0.0
    %2168 = vmatprep.subr.mxu0 0.0
    %2169 = vmatpush1.msra.mxu0 0.0
    %2170 = vmatprep.subr.mxu0 0.0
    %2171 = vmatpush1.msra.mxu0 0.0
    %2172 = vmatprep.subr.mxu0 0.0
    %2173 = vmatpush1.msra.mxu0 0.0
    %2174 = vmatprep.mubr.f32.mxu0 0.0
    %2175 = vmatmul.mubr.f32.gmra.mrb[0].mxu0 %v2025
    %v2176 = vpop.f32.mrb[0].mxu0
    %v2177 = vadd.f32 0.0, %v2176
    %v2178 = vpop.f32.mrb[0].mxu0
    %v2179 = vadd.f32 0.0, %v2178
    %2180 = vdwg.mxu0
    %v2181 = vadd.f32 %v1985, %v2106
    %v2182 = vadd.f32 %v1986, %v2108
    %v2183 = vadd.f32 %v1987, %v2177
    %v2184 = vadd.f32 %v1988, %v2179
    %v2185 = vadd.f32 %v2181, %v2182
    %2186 = vadd.xlane.f32.xlu0 %v2185
    %v2187 = vpop.xlane.xlu0 %2186
    %v2188 = vrcp.pop 256.0
    %v2189 = vmul.f32 %v2187, %v2188
    %v2190 = vsub.f32 %v2181, %v2189
    %v2191 = vsub.f32 %v2182, %v2189
    %v2192 = vmul.f32 %v2190, %v2190
    %v2193 = vmul.f32 %v2191, %v2191
    %v2194 = vadd.f32 %v2192, %v2193
    %2195 = vadd.xlane.f32.xlu0 %v2194
    %v2196 = vpop.xlane.xlu0 %2195
    %v2197 = vmul.f32 %v2196, %v2188
    %v2198 = vadd.f32 %v2197, 1e-05
    %v2199 = vrsqrt.pop %v2198
    %v2200 = vmul.f32 %v2190, %v2199
    %v2201 = vmul.f32 %v2191, %v2199
    %v2202 = vadd.f32 %v2183, %v2184
    %2203 = vadd.xlane.f32.xlu0 %v2202
    %v2204 = vpop.xlane.xlu0 %2203
    %v2205 = vmul.f32 %v2204, %v2188
    %v2206 = vsub.f32 %v2183, %v2205
    %v2207 = vsub.f32 %v2184, %v2205
    %v2208 = vmul.f32 %v2206, %v2206
    %v2209 = vmul.f32 %v2207, %v2207
    %v2210 = vadd.f32 %v2208, %v2209
    %2211 = vadd.xlane.f32.xlu0 %v2210
    %v2212 = vpop.xlane.xlu0 %2211
    %v2213 = vmul.f32 %v2212, %v2188
    %v2214 = vadd.f32 %v2213, 1e-05
    %v2215 = vrsqrt.pop %v2214
    %v2216 = vmul.f32 %v2206, %v2215
    %v2217 = vmul.f32 %v2207, %v2215
    %vm2218 = vcmp.ge.f32.partialorder %v2200, 0.0
    %vm2219 = vcmp.ge.f32.partialorder %v2201, 0.0
    %vm2220 = vcmp.ge.f32.partialorder %v2216, 0.0
    %vm2221 = vcmp.ge.f32.partialorder %v2217, 0.0
    %v2222 = vmul.f32 %v2200, 0.01
    %v2223 = vmul.f32 %v2201, 0.01
    %v2224 = vmul.f32 %v2216, 0.01
    %v2225 = vmul.f32 %v2217, 0.01
    %v2226 = vsel %vm2218, %v2200, %v2222
    %v2227 = vsel %vm2219, %v2201, %v2223
    %v2228 = vsel %vm2220, %v2216, %v2224
    %v2229 = vsel %vm2221, %v2217, %v2225
    %2230 = vrot.lane.b32.xlu0 %v2226, 17
    %v2231 = vpop.permute.xlu0 %2230
    %2232 = vrot.lane.b32.xlu0 %v2227, 17
    %v2233 = vpop.permute.xlu0 %2232
    %2234 = vrot.lane.b32.xlu0 %v2228, 17
    %v2235 = vpop.permute.xlu0 %2234
    %2236 = vrot.lane.b32.xlu0 %v2229, 17
    %v2237 = vpop.permute.xlu0 %2236
    %v2238 = vsel %vm449, %v2235, %v2237
    %v2239 = vsel %vm449, %v2233, %v2235
    %v2240 = vsel %vm449, %v2231, %v2233
    %v2241 = vsel %vm449, %v2237, %v2231
    %v2242 = vmul.f32 %v457, %v2241
    %v2243 = vmul.f32 %v461, %v2240
    %v2244 = vmul.f32 %v465, %v2239
    %v2245 = vmul.f32 %v469, %v2238
    %v2246 = vld [vmem:[%s5] sm:$0xff]
    %2247 = vrot.lane.b32.xlu0 %v2226, 16
    %v2248 = vpop.permute.xlu0 %2247
    %2249 = vrot.lane.b32.xlu0 %v2227, 16
    %v2250 = vpop.permute.xlu0 %2249
    %2251 = vrot.lane.b32.xlu0 %v2228, 16
    %v2252 = vpop.permute.xlu0 %2251
    %2253 = vrot.lane.b32.xlu0 %v2229, 16
    %v2254 = vpop.permute.xlu0 %2253
    %v2255 = vsel %vm483, %v2252, %v2254
    %v2256 = vsel %vm483, %v2250, %v2252
    %v2257 = vsel %vm483, %v2248, %v2250
    %v2258 = vsel %vm483, %v2254, %v2248
    %v2259 = vmul.f32 %v491, %v2258
    %v2260 = vmul.f32 %v495, %v2257
    %v2261 = vmul.f32 %v499, %v2256
    %v2262 = vmul.f32 %v503, %v2255
    %s2263 = scalar_lea.vmem %s5, 8
    %v2264 = vld [vmem:[%s2263] sm:$0xff]
    %v2266 = vsel %vm135, %v2264, 0
    %2268 = vmatprep.subr.mxu0 %v2260
    %2269 = vmatpush1.msra.mxu0 %v2259
    %2270 = vmatprep.subr.mxu0 0.0
    %2271 = vmatpush1.msra.mxu0 0.0
    %2272 = vmatprep.subr.mxu0 0.0
    %2273 = vmatpush1.msra.mxu0 0.0
    %2274 = vmatprep.subr.mxu0 0.0
    %2275 = vmatpush1.msra.mxu0 0.0
    %2276 = vmatprep.subr.mxu0 0.0
    %2277 = vmatpush1.msra.mxu0 0.0
    %2278 = vmatprep.subr.mxu0 0.0
    %2279 = vmatpush1.msra.mxu0 0.0
    %2280 = vmatprep.subr.mxu0 0.0
    %2281 = vmatpush1.msra.mxu0 0.0
    %2282 = vmatprep.subr.mxu0 0.0
    %2283 = vmatpush1.msra.mxu0 0.0
    %2284 = vmatprep.subr.mxu0 0.0
    %2285 = vmatpush1.msra.mxu0 0.0
    %2286 = vmatprep.subr.mxu0 0.0
    %2287 = vmatpush1.msra.mxu0 0.0
    %2288 = vmatprep.subr.mxu0 0.0
    %2289 = vmatpush1.msra.mxu0 0.0
    %2290 = vmatprep.subr.mxu0 0.0
    %2291 = vmatpush1.msra.mxu0 0.0
    %2292 = vmatprep.subr.mxu0 0.0
    %2293 = vmatpush1.msra.mxu0 0.0
    %2294 = vmatprep.subr.mxu0 0.0
    %2295 = vmatpush1.msra.mxu0 0.0
    %2296 = vmatprep.subr.mxu0 0.0
    %2297 = vmatpush1.msra.mxu0 0.0
    %2298 = vmatprep.subr.mxu0 0.0
    %2299 = vmatpush1.msra.mxu0 0.0
    %2300 = vmatprep.subr.mxu0 0.0
    %2301 = vmatpush1.msra.mxu0 0.0
    %2302 = vmatprep.subr.mxu0 0.0
    %2303 = vmatpush1.msra.mxu0 0.0
    %2304 = vmatprep.subr.mxu0 0.0
    %2305 = vmatpush1.msra.mxu0 0.0
    %2306 = vmatprep.subr.mxu0 0.0
    %2307 = vmatpush1.msra.mxu0 0.0
    %2308 = vmatprep.subr.mxu0 0.0
    %2309 = vmatpush1.msra.mxu0 0.0
    %2310 = vmatprep.subr.mxu0 0.0
    %2311 = vmatpush1.msra.mxu0 0.0
    %2312 = vmatprep.subr.mxu0 0.0
    %2313 = vmatpush1.msra.mxu0 0.0
    %2314 = vmatprep.subr.mxu0 0.0
    %2315 = vmatpush1.msra.mxu0 0.0
    %2316 = vmatprep.subr.mxu0 0.0
    %2317 = vmatpush1.msra.mxu0 0.0
    %2318 = vmatprep.subr.mxu0 0.0
    %2319 = vmatpush1.msra.mxu0 0.0
    %2320 = vmatprep.subr.mxu0 0.0
    %2321 = vmatpush1.msra.mxu0 0.0
    %2322 = vmatprep.subr.mxu0 0.0
    %2323 = vmatpush1.msra.mxu0 0.0
    %2324 = vmatprep.subr.mxu0 0.0
    %2325 = vmatpush1.msra.mxu0 0.0
    %2326 = vmatprep.subr.mxu0 0.0
    %2327 = vmatpush1.msra.mxu0 0.0
    %2328 = vmatprep.subr.mxu0 0.0
    %2329 = vmatpush1.msra.mxu0 0.0
    %2330 = vmatprep.subr.mxu0 0.0
    %2331 = vmatpush1.msra.mxu0 0.0
    %2332 = vmatprep.mubr.f32.mxu0 0.0
    %2333 = vmatmul.mubr.f32.gmra.mrb[0].mxu0 %v2266
    %v2334 = vpop.f32.mrb[0].mxu0
    %v2335 = vadd.f32 0.0, %v2334
    %v2336 = vpop.f32.mrb[0].mxu0
    %v2337 = vadd.f32 0.0, %v2336
    %2338 = vdwg.mxu0
    %2339 = vmatprep.subr.mxu0 %v2262
    %2340 = vmatpush1.msra.mxu0 %v2261
    %2341 = vmatprep.subr.mxu0 0.0
    %2342 = vmatpush1.msra.mxu0 0.0
    %2343 = vmatprep.subr.mxu0 0.0
    %2344 = vmatpush1.msra.mxu0 0.0
    %2345 = vmatprep.subr.mxu0 0.0
    %2346 = vmatpush1.msra.mxu0 0.0
    %2347 = vmatprep.subr.mxu0 0.0
    %2348 = vmatpush1.msra.mxu0 0.0
    %2349 = vmatprep.subr.mxu0 0.0
    %2350 = vmatpush1.msra.mxu0 0.0
    %2351 = vmatprep.subr.mxu0 0.0
    %2352 = vmatpush1.msra.mxu0 0.0
    %2353 = vmatprep.subr.mxu0 0.0
    %2354 = vmatpush1.msra.mxu0 0.0
    %2355 = vmatprep.subr.mxu0 0.0
    %2356 = vmatpush1.msra.mxu0 0.0
    %2357 = vmatprep.subr.mxu0 0.0
    %2358 = vmatpush1.msra.mxu0 0.0
    %2359 = vmatprep.subr.mxu0 0.0
    %2360 = vmatpush1.msra.mxu0 0.0
    %2361 = vmatprep.subr.mxu0 0.0
    %2362 = vmatpush1.msra.mxu0 0.0
    %2363 = vmatprep.subr.mxu0 0.0
    %2364 = vmatpush1.msra.mxu0 0.0
    %2365 = vmatprep.subr.mxu0 0.0
    %2366 = vmatpush1.msra.mxu0 0.0
    %2367 = vmatprep.subr.mxu0 0.0
    %2368 = vmatpush1.msra.mxu0 0.0
    %2369 = vmatprep.subr.mxu0 0.0
    %2370 = vmatpush1.msra.mxu0 0.0
    %2371 = vmatprep.subr.mxu0 0.0
    %2372 = vmatpush1.msra.mxu0 0.0
    %2373 = vmatprep.subr.mxu0 0.0
    %2374 = vmatpush1.msra.mxu0 0.0
    %2375 = vmatprep.subr.mxu0 0.0
    %2376 = vmatpush1.msra.mxu0 0.0
    %2377 = vmatprep.subr.mxu0 0.0
    %2378 = vmatpush1.msra.mxu0 0.0
    %2379 = vmatprep.subr.mxu0 0.0
    %2380 = vmatpush1.msra.mxu0 0.0
    %2381 = vmatprep.subr.mxu0 0.0
    %2382 = vmatpush1.msra.mxu0 0.0
    %2383 = vmatprep.subr.mxu0 0.0
    %2384 = vmatpush1.msra.mxu0 0.0
    %2385 = vmatprep.subr.mxu0 0.0
    %2386 = vmatpush1.msra.mxu0 0.0
    %2387 = vmatprep.subr.mxu0 0.0
    %2388 = vmatpush1.msra.mxu0 0.0
    %2389 = vmatprep.subr.mxu0 0.0
    %2390 = vmatpush1.msra.mxu0 0.0
    %2391 = vmatprep.subr.mxu0 0.0
    %2392 = vmatpush1.msra.mxu0 0.0
    %2393 = vmatprep.subr.mxu0 0.0
    %2394 = vmatpush1.msra.mxu0 0.0
    %2395 = vmatprep.subr.mxu0 0.0
    %2396 = vmatpush1.msra.mxu0 0.0
    %2397 = vmatprep.subr.mxu0 0.0
    %2398 = vmatpush1.msra.mxu0 0.0
    %2399 = vmatprep.subr.mxu0 0.0
    %2400 = vmatpush1.msra.mxu0 0.0
    %2401 = vmatprep.subr.mxu0 0.0
    %2402 = vmatpush1.msra.mxu0 0.0
    %2403 = vmatprep.mubr.f32.mxu0 0.0
    %2404 = vmatmul.mubr.f32.gmra.mrb[0].mxu0 %v2266
    %v2405 = vpop.f32.mrb[0].mxu0
    %v2406 = vadd.f32 0.0, %v2405
    %v2407 = vpop.f32.mrb[0].mxu0
    %v2408 = vadd.f32 0.0, %v2407
    %2409 = vdwg.mxu0
    %v2411 = vsel %vm135, %v2246, 0
    %2413 = vmatprep.subr.mxu0 %v2243
    %2414 = vmatpush1.msra.mxu0 %v2242
    %2415 = vmatprep.subr.mxu0 0.0
    %2416 = vmatpush1.msra.mxu0 0.0
    %2417 = vmatprep.subr.mxu0 0.0
    %2418 = vmatpush1.msra.mxu0 0.0
    %2419 = vmatprep.subr.mxu0 0.0
    %2420 = vmatpush1.msra.mxu0 0.0
    %2421 = vmatprep.subr.mxu0 0.0
    %2422 = vmatpush1.msra.mxu0 0.0
    %2423 = vmatprep.subr.mxu0 0.0
    %2424 = vmatpush1.msra.mxu0 0.0
    %2425 = vmatprep.subr.mxu0 0.0
    %2426 = vmatpush1.msra.mxu0 0.0
    %2427 = vmatprep.subr.mxu0 0.0
    %2428 = vmatpush1.msra.mxu0 0.0
    %2429 = vmatprep.subr.mxu0 0.0
    %2430 = vmatpush1.msra.mxu0 0.0
    %2431 = vmatprep.subr.mxu0 0.0
    %2432 = vmatpush1.msra.mxu0 0.0
    %2433 = vmatprep.subr.mxu0 0.0
    %2434 = vmatpush1.msra.mxu0 0.0
    %2435 = vmatprep.subr.mxu0 0.0
    %2436 = vmatpush1.msra.mxu0 0.0
    %2437 = vmatprep.subr.mxu0 0.0
    %2438 = vmatpush1.msra.mxu0 0.0
    %2439 = vmatprep.subr.mxu0 0.0
    %2440 = vmatpush1.msra.mxu0 0.0
    %2441 = vmatprep.subr.mxu0 0.0
    %2442 = vmatpush1.msra.mxu0 0.0
    %2443 = vmatprep.subr.mxu0 0.0
    %2444 = vmatpush1.msra.mxu0 0.0
    %2445 = vmatprep.subr.mxu0 0.0
    %2446 = vmatpush1.msra.mxu0 0.0
    %2447 = vmatprep.subr.mxu0 0.0
    %2448 = vmatpush1.msra.mxu0 0.0
    %2449 = vmatprep.subr.mxu0 0.0
    %2450 = vmatpush1.msra.mxu0 0.0
    %2451 = vmatprep.subr.mxu0 0.0
    %2452 = vmatpush1.msra.mxu0 0.0
    %2453 = vmatprep.subr.mxu0 0.0
    %2454 = vmatpush1.msra.mxu0 0.0
    %2455 = vmatprep.subr.mxu0 0.0
    %2456 = vmatpush1.msra.mxu0 0.0
    %2457 = vmatprep.subr.mxu0 0.0
    %2458 = vmatpush1.msra.mxu0 0.0
    %2459 = vmatprep.subr.mxu0 0.0
    %2460 = vmatpush1.msra.mxu0 0.0
    %2461 = vmatprep.subr.mxu0 0.0
    %2462 = vmatpush1.msra.mxu0 0.0
    %2463 = vmatprep.subr.mxu0 0.0
    %2464 = vmatpush1.msra.mxu0 0.0
    %2465 = vmatprep.subr.mxu0 0.0
    %2466 = vmatpush1.msra.mxu0 0.0
    %2467 = vmatprep.subr.mxu0 0.0
    %2468 = vmatpush1.msra.mxu0 0.0
    %2469 = vmatprep.subr.mxu0 0.0
    %2470 = vmatpush1.msra.mxu0 0.0
    %2471 = vmatprep.subr.mxu0 0.0
    %2472 = vmatpush1.msra.mxu0 0.0
    %2473 = vmatprep.subr.mxu0 0.0
    %2474 = vmatpush1.msra.mxu0 0.0
    %2475 = vmatprep.subr.mxu0 0.0
    %2476 = vmatpush1.msra.mxu0 0.0
    %2477 = vmatprep.mubr.f32.mxu0 0.0
    %2478 = vmatmul.mubr.f32.gmra.mrb[0].mxu0 %v2411
    %v2479 = vpop.f32.mrb[0].mxu0
    %v2480 = vadd.f32 %v2335, %v2479
    %v2481 = vpop.f32.mrb[0].mxu0
    %v2482 = vadd.f32 %v2337, %v2481
    %2483 = vdwg.mxu0
    %2484 = vmatprep.subr.mxu0 %v2245
    %2485 = vmatpush1.msra.mxu0 %v2244
    %2486 = vmatprep.subr.mxu0 0.0
    %2487 = vmatpush1.msra.mxu0 0.0
    %2488 = vmatprep.subr.mxu0 0.0
    %2489 = vmatpush1.msra.mxu0 0.0
    %2490 = vmatprep.subr.mxu0 0.0
    %2491 = vmatpush1.msra.mxu0 0.0
    %2492 = vmatprep.subr.mxu0 0.0
    %2493 = vmatpush1.msra.mxu0 0.0
    %2494 = vmatprep.subr.mxu0 0.0
    %2495 = vmatpush1.msra.mxu0 0.0
    %2496 = vmatprep.subr.mxu0 0.0
    %2497 = vmatpush1.msra.mxu0 0.0
    %2498 = vmatprep.subr.mxu0 0.0
    %2499 = vmatpush1.msra.mxu0 0.0
    %2500 = vmatprep.subr.mxu0 0.0
    %2501 = vmatpush1.msra.mxu0 0.0
    %2502 = vmatprep.subr.mxu0 0.0
    %2503 = vmatpush1.msra.mxu0 0.0
    %2504 = vmatprep.subr.mxu0 0.0
    %2505 = vmatpush1.msra.mxu0 0.0
    %2506 = vmatprep.subr.mxu0 0.0
    %2507 = vmatpush1.msra.mxu0 0.0
    %2508 = vmatprep.subr.mxu0 0.0
    %2509 = vmatpush1.msra.mxu0 0.0
    %2510 = vmatprep.subr.mxu0 0.0
    %2511 = vmatpush1.msra.mxu0 0.0
    %2512 = vmatprep.subr.mxu0 0.0
    %2513 = vmatpush1.msra.mxu0 0.0
    %2514 = vmatprep.subr.mxu0 0.0
    %2515 = vmatpush1.msra.mxu0 0.0
    %2516 = vmatprep.subr.mxu0 0.0
    %2517 = vmatpush1.msra.mxu0 0.0
    %2518 = vmatprep.subr.mxu0 0.0
    %2519 = vmatpush1.msra.mxu0 0.0
    %2520 = vmatprep.subr.mxu0 0.0
    %2521 = vmatpush1.msra.mxu0 0.0
    %2522 = vmatprep.subr.mxu0 0.0
    %2523 = vmatpush1.msra.mxu0 0.0
    %2524 = vmatprep.subr.mxu0 0.0
    %2525 = vmatpush1.msra.mxu0 0.0
    %2526 = vmatprep.subr.mxu0 0.0
    %2527 = vmatpush1.msra.mxu0 0.0
    %2528 = vmatprep.subr.mxu0 0.0
    %2529 = vmatpush1.msra.mxu0 0.0
    %2530 = vmatprep.subr.mxu0 0.0
    %2531 = vmatpush1.msra.mxu0 0.0
    %2532 = vmatprep.subr.mxu0 0.0
    %2533 = vmatpush1.msra.mxu0 0.0
    %2534 = vmatprep.subr.mxu0 0.0
    %2535 = vmatpush1.msra.mxu0 0.0
    %2536 = vmatprep.subr.mxu0 0.0
    %2537 = vmatpush1.msra.mxu0 0.0
    %2538 = vmatprep.subr.mxu0 0.0
    %2539 = vmatpush1.msra.mxu0 0.0
    %2540 = vmatprep.subr.mxu0 0.0
    %2541 = vmatpush1.msra.mxu0 0.0
    %2542 = vmatprep.subr.mxu0 0.0
    %2543 = vmatpush1.msra.mxu0 0.0
    %2544 = vmatprep.subr.mxu0 0.0
    %2545 = vmatpush1.msra.mxu0 0.0
    %2546 = vmatprep.subr.mxu0 0.0
    %2547 = vmatpush1.msra.mxu0 0.0
    %2548 = vmatprep.mubr.f32.mxu0 0.0
    %2549 = vmatmul.mubr.f32.gmra.mrb[0].mxu0 %v2411
    %v2550 = vpop.f32.mrb[0].mxu0
    %v2551 = vadd.f32 %v2406, %v2550
    %v2552 = vpop.f32.mrb[0].mxu0
    %v2553 = vadd.f32 %v2408, %v2552
    %2554 = vdwg.mxu0
    %2555 = vrot.lane.b32.xlu0 %v2226, 15
    %v2556 = vpop.permute.xlu0 %2555
    %2557 = vrot.lane.b32.xlu0 %v2227, 15
    %v2558 = vpop.permute.xlu0 %2557
    %2559 = vrot.lane.b32.xlu0 %v2228, 15
    %v2560 = vpop.permute.xlu0 %2559
    %2561 = vrot.lane.b32.xlu0 %v2229, 15
    %v2562 = vpop.permute.xlu0 %2561
    %v2563 = vsel %vm834, %v2560, %v2562
    %v2564 = vsel %vm834, %v2558, %v2560
    %v2565 = vsel %vm834, %v2556, %v2558
    %v2566 = vsel %vm834, %v2562, %v2556
    %v2567 = vmul.f32 %v842, %v2566
    %v2568 = vmul.f32 %v846, %v2565
    %v2569 = vmul.f32 %v850, %v2564
    %v2570 = vmul.f32 %v854, %v2563
    %s2571 = scalar_lea.vmem %s5, 16
    %v2572 = vld [vmem:[%s2571] sm:$0xff]
    %v2574 = vsel %vm135, %v2572, 0
    %2576 = vmatprep.subr.mxu0 %v2568
    %2577 = vmatpush1.msra.mxu0 %v2567
    %2578 = vmatprep.subr.mxu0 0.0
    %2579 = vmatpush1.msra.mxu0 0.0
    %2580 = vmatprep.subr.mxu0 0.0
    %2581 = vmatpush1.msra.mxu0 0.0
    %2582 = vmatprep.subr.mxu0 0.0
    %2583 = vmatpush1.msra.mxu0 0.0
    %2584 = vmatprep.subr.mxu0 0.0
    %2585 = vmatpush1.msra.mxu0 0.0
    %2586 = vmatprep.subr.mxu0 0.0
    %2587 = vmatpush1.msra.mxu0 0.0
    %2588 = vmatprep.subr.mxu0 0.0
    %2589 = vmatpush1.msra.mxu0 0.0
    %2590 = vmatprep.subr.mxu0 0.0
    %2591 = vmatpush1.msra.mxu0 0.0
    %2592 = vmatprep.subr.mxu0 0.0
    %2593 = vmatpush1.msra.mxu0 0.0
    %2594 = vmatprep.subr.mxu0 0.0
    %2595 = vmatpush1.msra.mxu0 0.0
    %2596 = vmatprep.subr.mxu0 0.0
    %2597 = vmatpush1.msra.mxu0 0.0
    %2598 = vmatprep.subr.mxu0 0.0
    %2599 = vmatpush1.msra.mxu0 0.0
    %2600 = vmatprep.subr.mxu0 0.0
    %2601 = vmatpush1.msra.mxu0 0.0
    %2602 = vmatprep.subr.mxu0 0.0
    %2603 = vmatpush1.msra.mxu0 0.0
    %2604 = vmatprep.subr.mxu0 0.0
    %2605 = vmatpush1.msra.mxu0 0.0
    %2606 = vmatprep.subr.mxu0 0.0
    %2607 = vmatpush1.msra.mxu0 0.0
    %2608 = vmatprep.subr.mxu0 0.0
    %2609 = vmatpush1.msra.mxu0 0.0
    %2610 = vmatprep.subr.mxu0 0.0
    %2611 = vmatpush1.msra.mxu0 0.0
    %2612 = vmatprep.subr.mxu0 0.0
    %2613 = vmatpush1.msra.mxu0 0.0
    %2614 = vmatprep.subr.mxu0 0.0
    %2615 = vmatpush1.msra.mxu0 0.0
    %2616 = vmatprep.subr.mxu0 0.0
    %2617 = vmatpush1.msra.mxu0 0.0
    %2618 = vmatprep.subr.mxu0 0.0
    %2619 = vmatpush1.msra.mxu0 0.0
    %2620 = vmatprep.subr.mxu0 0.0
    %2621 = vmatpush1.msra.mxu0 0.0
    %2622 = vmatprep.subr.mxu0 0.0
    %2623 = vmatpush1.msra.mxu0 0.0
    %2624 = vmatprep.subr.mxu0 0.0
    %2625 = vmatpush1.msra.mxu0 0.0
    %2626 = vmatprep.subr.mxu0 0.0
    %2627 = vmatpush1.msra.mxu0 0.0
    %2628 = vmatprep.subr.mxu0 0.0
    %2629 = vmatpush1.msra.mxu0 0.0
    %2630 = vmatprep.subr.mxu0 0.0
    %2631 = vmatpush1.msra.mxu0 0.0
    %2632 = vmatprep.subr.mxu0 0.0
    %2633 = vmatpush1.msra.mxu0 0.0
    %2634 = vmatprep.subr.mxu0 0.0
    %2635 = vmatpush1.msra.mxu0 0.0
    %2636 = vmatprep.subr.mxu0 0.0
    %2637 = vmatpush1.msra.mxu0 0.0
    %2638 = vmatprep.subr.mxu0 0.0
    %2639 = vmatpush1.msra.mxu0 0.0
    %2640 = vmatprep.mubr.f32.mxu0 0.0
    %2641 = vmatmul.mubr.f32.gmra.mrb[0].mxu0 %v2574
    %v2642 = vpop.f32.mrb[0].mxu0
    %v2643 = vadd.f32 0.0, %v2642
    %v2644 = vpop.f32.mrb[0].mxu0
    %v2645 = vadd.f32 0.0, %v2644
    %2646 = vdwg.mxu0
    %2647 = vmatprep.subr.mxu0 %v2570
    %2648 = vmatpush1.msra.mxu0 %v2569
    %2649 = vmatprep.subr.mxu0 0.0
    %2650 = vmatpush1.msra.mxu0 0.0
    %2651 = vmatprep.subr.mxu0 0.0
    %2652 = vmatpush1.msra.mxu0 0.0
    %2653 = vmatprep.subr.mxu0 0.0
    %2654 = vmatpush1.msra.mxu0 0.0
    %2655 = vmatprep.subr.mxu0 0.0
    %2656 = vmatpush1.msra.mxu0 0.0
    %2657 = vmatprep.subr.mxu0 0.0
    %2658 = vmatpush1.msra.mxu0 0.0
    %2659 = vmatprep.subr.mxu0 0.0
    %2660 = vmatpush1.msra.mxu0 0.0
    %2661 = vmatprep.subr.mxu0 0.0
    %2662 = vmatpush1.msra.mxu0 0.0
    %2663 = vmatprep.subr.mxu0 0.0
    %2664 = vmatpush1.msra.mxu0 0.0
    %2665 = vmatprep.subr.mxu0 0.0
    %2666 = vmatpush1.msra.mxu0 0.0
    %2667 = vmatprep.subr.mxu0 0.0
    %2668 = vmatpush1.msra.mxu0 0.0
    %2669 = vmatprep.subr.mxu0 0.0
    %2670 = vmatpush1.msra.mxu0 0.0
    %2671 = vmatprep.subr.mxu0 0.0
    %2672 = vmatpush1.msra.mxu0 0.0
    %2673 = vmatprep.subr.mxu0 0.0
    %2674 = vmatpush1.msra.mxu0 0.0
    %2675 = vmatprep.subr.mxu0 0.0
    %2676 = vmatpush1.msra.mxu0 0.0
    %2677 = vmatprep.subr.mxu0 0.0
    %2678 = vmatpush1.msra.mxu0 0.0
    %2679 = vmatprep.subr.mxu0 0.0
    %2680 = vmatpush1.msra.mxu0 0.0
    %2681 = vmatprep.subr.mxu0 0.0
    %2682 = vmatpush1.msra.mxu0 0.0
    %2683 = vmatprep.subr.mxu0 0.0
    %2684 = vmatpush1.msra.mxu0 0.0
    %2685 = vmatprep.subr.mxu0 0.0
    %2686 = vmatpush1.msra.mxu0 0.0
    %2687 = vmatprep.subr.mxu0 0.0
    %2688 = vmatpush1.msra.mxu0 0.0
    %2689 = vmatprep.subr.mxu0 0.0
    %2690 = vmatpush1.msra.mxu0 0.0
    %2691 = vmatprep.subr.mxu0 0.0
    %2692 = vmatpush1.msra.mxu0 0.0
    %2693 = vmatprep.subr.mxu0 0.0
    %2694 = vmatpush1.msra.mxu0 0.0
    %2695 = vmatprep.subr.mxu0 0.0
    %2696 = vmatpush1.msra.mxu0 0.0
    %2697 = vmatprep.subr.mxu0 0.0
    %2698 = vmatpush1.msra.mxu0 0.0
    %2699 = vmatprep.subr.mxu0 0.0
    %2700 = vmatpush1.msra.mxu0 0.0
    %2701 = vmatprep.subr.mxu0 0.0
    %2702 = vmatpush1.msra.mxu0 0.0
    %2703 = vmatprep.subr.mxu0 0.0
    %2704 = vmatpush1.msra.mxu0 0.0
    %2705 = vmatprep.subr.mxu0 0.0
    %2706 = vmatpush1.msra.mxu0 0.0
    %2707 = vmatprep.subr.mxu0 0.0
    %2708 = vmatpush1.msra.mxu0 0.0
    %2709 = vmatprep.subr.mxu0 0.0
    %2710 = vmatpush1.msra.mxu0 0.0
    %2711 = vmatprep.mubr.f32.mxu0 0.0
    %2712 = vmatmul.mubr.f32.gmra.mrb[0].mxu0 %v2574
    %v2713 = vpop.f32.mrb[0].mxu0
    %v2714 = vadd.f32 0.0, %v2713
    %v2715 = vpop.f32.mrb[0].mxu0
    %v2716 = vadd.f32 0.0, %v2715
    %2717 = vdwg.mxu0
    %v2718 = vadd.f32 %v2480, %v2643
    %v2719 = vadd.f32 %v2482, %v2645
    %v2720 = vadd.f32 %v2551, %v2714
    %v2721 = vadd.f32 %v2553, %v2716
    %2722 = vrot.lane.b32.xlu0 %v2226, 1
    %v2723 = vpop.permute.xlu0 %2722
    %2724 = vrot.lane.b32.xlu0 %v2227, 1
    %v2725 = vpop.permute.xlu0 %2724
    %2726 = vrot.lane.b32.xlu0 %v2228, 1
    %v2727 = vpop.permute.xlu0 %2726
    %2728 = vrot.lane.b32.xlu0 %v2229, 1
    %v2729 = vpop.permute.xlu0 %2728
    %v2730 = vsel %vm1030, %v2727, %v2729
    %v2731 = vsel %vm1030, %v2725, %v2727
    %v2732 = vsel %vm1030, %v2723, %v2725
    %v2733 = vsel %vm1030, %v2729, %v2723
    %v2734 = vmul.f32 %v1038, %v2733
    %v2735 = vmul.f32 %v1042, %v2732
    %v2736 = vmul.f32 %v1046, %v2731
    %v2737 = vmul.f32 %v1050, %v2730
    %s2738 = scalar_lea.vmem %s5, 24
    %v2739 = vld [vmem:[%s2738] sm:$0xff]
    %v2741 = vsel %vm135, %v2739, 0
    %2743 = vmatprep.subr.mxu0 %v2735
    %2744 = vmatpush1.msra.mxu0 %v2734
    %2745 = vmatprep.subr.mxu0 0.0
    %2746 = vmatpush1.msra.mxu0 0.0
    %2747 = vmatprep.subr.mxu0 0.0
    %2748 = vmatpush1.msra.mxu0 0.0
    %2749 = vmatprep.subr.mxu0 0.0
    %2750 = vmatpush1.msra.mxu0 0.0
    %2751 = vmatprep.subr.mxu0 0.0
    %2752 = vmatpush1.msra.mxu0 0.0
    %2753 = vmatprep.subr.mxu0 0.0
    %2754 = vmatpush1.msra.mxu0 0.0
    %2755 = vmatprep.subr.mxu0 0.0
    %2756 = vmatpush1.msra.mxu0 0.0
    %2757 = vmatprep.subr.mxu0 0.0
    %2758 = vmatpush1.msra.mxu0 0.0
    %2759 = vmatprep.subr.mxu0 0.0
    %2760 = vmatpush1.msra.mxu0 0.0
    %2761 = vmatprep.subr.mxu0 0.0
    %2762 = vmatpush1.msra.mxu0 0.0
    %2763 = vmatprep.subr.mxu0 0.0
    %2764 = vmatpush1.msra.mxu0 0.0
    %2765 = vmatprep.subr.mxu0 0.0
    %2766 = vmatpush1.msra.mxu0 0.0
    %2767 = vmatprep.subr.mxu0 0.0
    %2768 = vmatpush1.msra.mxu0 0.0
    %2769 = vmatprep.subr.mxu0 0.0
    %2770 = vmatpush1.msra.mxu0 0.0
    %2771 = vmatprep.subr.mxu0 0.0
    %2772 = vmatpush1.msra.mxu0 0.0
    %2773 = vmatprep.subr.mxu0 0.0
    %2774 = vmatpush1.msra.mxu0 0.0
    %2775 = vmatprep.subr.mxu0 0.0
    %2776 = vmatpush1.msra.mxu0 0.0
    %2777 = vmatprep.subr.mxu0 0.0
    %2778 = vmatpush1.msra.mxu0 0.0
    %2779 = vmatprep.subr.mxu0 0.0
    %2780 = vmatpush1.msra.mxu0 0.0
    %2781 = vmatprep.subr.mxu0 0.0
    %2782 = vmatpush1.msra.mxu0 0.0
    %2783 = vmatprep.subr.mxu0 0.0
    %2784 = vmatpush1.msra.mxu0 0.0
    %2785 = vmatprep.subr.mxu0 0.0
    %2786 = vmatpush1.msra.mxu0 0.0
    %2787 = vmatprep.subr.mxu0 0.0
    %2788 = vmatpush1.msra.mxu0 0.0
    %2789 = vmatprep.subr.mxu0 0.0
    %2790 = vmatpush1.msra.mxu0 0.0
    %2791 = vmatprep.subr.mxu0 0.0
    %2792 = vmatpush1.msra.mxu0 0.0
    %2793 = vmatprep.subr.mxu0 0.0
    %2794 = vmatpush1.msra.mxu0 0.0
    %2795 = vmatprep.subr.mxu0 0.0
    %2796 = vmatpush1.msra.mxu0 0.0
    %2797 = vmatprep.subr.mxu0 0.0
    %2798 = vmatpush1.msra.mxu0 0.0
    %2799 = vmatprep.subr.mxu0 0.0
    %2800 = vmatpush1.msra.mxu0 0.0
    %2801 = vmatprep.subr.mxu0 0.0
    %2802 = vmatpush1.msra.mxu0 0.0
    %2803 = vmatprep.subr.mxu0 0.0
    %2804 = vmatpush1.msra.mxu0 0.0
    %2805 = vmatprep.subr.mxu0 0.0
    %2806 = vmatpush1.msra.mxu0 0.0
    %2807 = vmatprep.mubr.f32.mxu0 0.0
    %2808 = vmatmul.mubr.f32.gmra.mrb[0].mxu0 %v2741
    %v2809 = vpop.f32.mrb[0].mxu0
    %v2810 = vadd.f32 0.0, %v2809
    %v2811 = vpop.f32.mrb[0].mxu0
    %v2812 = vadd.f32 0.0, %v2811
    %2813 = vdwg.mxu0
    %2814 = vmatprep.subr.mxu0 %v2737
    %2815 = vmatpush1.msra.mxu0 %v2736
    %2816 = vmatprep.subr.mxu0 0.0
    %2817 = vmatpush1.msra.mxu0 0.0
    %2818 = vmatprep.subr.mxu0 0.0
    %2819 = vmatpush1.msra.mxu0 0.0
    %2820 = vmatprep.subr.mxu0 0.0
    %2821 = vmatpush1.msra.mxu0 0.0
    %2822 = vmatprep.subr.mxu0 0.0
    %2823 = vmatpush1.msra.mxu0 0.0
    %2824 = vmatprep.subr.mxu0 0.0
    %2825 = vmatpush1.msra.mxu0 0.0
    %2826 = vmatprep.subr.mxu0 0.0
    %2827 = vmatpush1.msra.mxu0 0.0
    %2828 = vmatprep.subr.mxu0 0.0
    %2829 = vmatpush1.msra.mxu0 0.0
    %2830 = vmatprep.subr.mxu0 0.0
    %2831 = vmatpush1.msra.mxu0 0.0
    %2832 = vmatprep.subr.mxu0 0.0
    %2833 = vmatpush1.msra.mxu0 0.0
    %2834 = vmatprep.subr.mxu0 0.0
    %2835 = vmatpush1.msra.mxu0 0.0
    %2836 = vmatprep.subr.mxu0 0.0
    %2837 = vmatpush1.msra.mxu0 0.0
    %2838 = vmatprep.subr.mxu0 0.0
    %2839 = vmatpush1.msra.mxu0 0.0
    %2840 = vmatprep.subr.mxu0 0.0
    %2841 = vmatpush1.msra.mxu0 0.0
    %2842 = vmatprep.subr.mxu0 0.0
    %2843 = vmatpush1.msra.mxu0 0.0
    %2844 = vmatprep.subr.mxu0 0.0
    %2845 = vmatpush1.msra.mxu0 0.0
    %2846 = vmatprep.subr.mxu0 0.0
    %2847 = vmatpush1.msra.mxu0 0.0
    %2848 = vmatprep.subr.mxu0 0.0
    %2849 = vmatpush1.msra.mxu0 0.0
    %2850 = vmatprep.subr.mxu0 0.0
    %2851 = vmatpush1.msra.mxu0 0.0
    %2852 = vmatprep.subr.mxu0 0.0
    %2853 = vmatpush1.msra.mxu0 0.0
    %2854 = vmatprep.subr.mxu0 0.0
    %2855 = vmatpush1.msra.mxu0 0.0
    %2856 = vmatprep.subr.mxu0 0.0
    %2857 = vmatpush1.msra.mxu0 0.0
    %2858 = vmatprep.subr.mxu0 0.0
    %2859 = vmatpush1.msra.mxu0 0.0
    %2860 = vmatprep.subr.mxu0 0.0
    %2861 = vmatpush1.msra.mxu0 0.0
    %2862 = vmatprep.subr.mxu0 0.0
    %2863 = vmatpush1.msra.mxu0 0.0
    %2864 = vmatprep.subr.mxu0 0.0
    %2865 = vmatpush1.msra.mxu0 0.0
    %2866 = vmatprep.subr.mxu0 0.0
    %2867 = vmatpush1.msra.mxu0 0.0
    %2868 = vmatprep.subr.mxu0 0.0
    %2869 = vmatpush1.msra.mxu0 0.0
    %2870 = vmatprep.subr.mxu0 0.0
    %2871 = vmatpush1.msra.mxu0 0.0
    %2872 = vmatprep.subr.mxu0 0.0
    %2873 = vmatpush1.msra.mxu0 0.0
    %2874 = vmatprep.subr.mxu0 0.0
    %2875 = vmatpush1.msra.mxu0 0.0
    %2876 = vmatprep.subr.mxu0 0.0
    %2877 = vmatpush1.msra.mxu0 0.0
    %2878 = vmatprep.mubr.f32.mxu0 0.0
    %2879 = vmatmul.mubr.f32.gmra.mrb[0].mxu0 %v2741
    %v2880 = vpop.f32.mrb[0].mxu0
    %v2881 = vadd.f32 0.0, %v2880
    %v2882 = vpop.f32.mrb[0].mxu0
    %v2883 = vadd.f32 0.0, %v2882
    %2884 = vdwg.mxu0
    %v2885 = vadd.f32 %v2718, %v2810
    %v2886 = vadd.f32 %v2719, %v2812
    %v2887 = vadd.f32 %v2720, %v2881
    %v2888 = vadd.f32 %v2721, %v2883
    %v2889 = vmul.f32 %v1221, %v2226
    %v2890 = vmul.f32 %v1225, %v2227
    %v2891 = vmul.f32 %v1229, %v2228
    %v2892 = vmul.f32 %v1233, %v2229
    %s2893 = scalar_lea.vmem %s5, 32
    %v2894 = vld [vmem:[%s2893] sm:$0xff]
    %v2896 = vsel %vm135, %v2894, 0
    %2898 = vmatprep.subr.mxu0 %v2890
    %2899 = vmatpush1.msra.mxu0 %v2889
    %2900 = vmatprep.subr.mxu0 0.0
    %2901 = vmatpush1.msra.mxu0 0.0
    %2902 = vmatprep.subr.mxu0 0.0
    %2903 = vmatpush1.msra.mxu0 0.0
    %2904 = vmatprep.subr.mxu0 0.0
    %2905 = vmatpush1.msra.mxu0 0.0
    %2906 = vmatprep.subr.mxu0 0.0
    %2907 = vmatpush1.msra.mxu0 0.0
    %2908 = vmatprep.subr.mxu0 0.0
    %2909 = vmatpush1.msra.mxu0 0.0
    %2910 = vmatprep.subr.mxu0 0.0
    %2911 = vmatpush1.msra.mxu0 0.0
    %2912 = vmatprep.subr.mxu0 0.0
    %2913 = vmatpush1.msra.mxu0 0.0
    %2914 = vmatprep.subr.mxu0 0.0
    %2915 = vmatpush1.msra.mxu0 0.0
    %2916 = vmatprep.subr.mxu0 0.0
    %2917 = vmatpush1.msra.mxu0 0.0
    %2918 = vmatprep.subr.mxu0 0.0
    %2919 = vmatpush1.msra.mxu0 0.0
    %2920 = vmatprep.subr.mxu0 0.0
    %2921 = vmatpush1.msra.mxu0 0.0
    %2922 = vmatprep.subr.mxu0 0.0
    %2923 = vmatpush1.msra.mxu0 0.0
    %2924 = vmatprep.subr.mxu0 0.0
    %2925 = vmatpush1.msra.mxu0 0.0
    %2926 = vmatprep.subr.mxu0 0.0
    %2927 = vmatpush1.msra.mxu0 0.0
    %2928 = vmatprep.subr.mxu0 0.0
    %2929 = vmatpush1.msra.mxu0 0.0
    %2930 = vmatprep.subr.mxu0 0.0
    %2931 = vmatpush1.msra.mxu0 0.0
    %2932 = vmatprep.subr.mxu0 0.0
    %2933 = vmatpush1.msra.mxu0 0.0
    %2934 = vmatprep.subr.mxu0 0.0
    %2935 = vmatpush1.msra.mxu0 0.0
    %2936 = vmatprep.subr.mxu0 0.0
    %2937 = vmatpush1.msra.mxu0 0.0
    %2938 = vmatprep.subr.mxu0 0.0
    %2939 = vmatpush1.msra.mxu0 0.0
    %2940 = vmatprep.subr.mxu0 0.0
    %2941 = vmatpush1.msra.mxu0 0.0
    %2942 = vmatprep.subr.mxu0 0.0
    %2943 = vmatpush1.msra.mxu0 0.0
    %2944 = vmatprep.subr.mxu0 0.0
    %2945 = vmatpush1.msra.mxu0 0.0
    %2946 = vmatprep.subr.mxu0 0.0
    %2947 = vmatpush1.msra.mxu0 0.0
    %2948 = vmatprep.subr.mxu0 0.0
    %2949 = vmatpush1.msra.mxu0 0.0
    %2950 = vmatprep.subr.mxu0 0.0
    %2951 = vmatpush1.msra.mxu0 0.0
    %2952 = vmatprep.subr.mxu0 0.0
    %2953 = vmatpush1.msra.mxu0 0.0
    %2954 = vmatprep.subr.mxu0 0.0
    %2955 = vmatpush1.msra.mxu0 0.0
    %2956 = vmatprep.subr.mxu0 0.0
    %2957 = vmatpush1.msra.mxu0 0.0
    %2958 = vmatprep.subr.mxu0 0.0
    %2959 = vmatpush1.msra.mxu0 0.0
    %2960 = vmatprep.subr.mxu0 0.0
    %2961 = vmatpush1.msra.mxu0 0.0
    %2962 = vmatprep.mubr.f32.mxu0 0.0
    %2963 = vmatmul.mubr.f32.gmra.mrb[0].mxu0 %v2896
    %v2964 = vpop.f32.mrb[0].mxu0
    %v2965 = vadd.f32 0.0, %v2964
    %v2966 = vpop.f32.mrb[0].mxu0
    %v2967 = vadd.f32 0.0, %v2966
    %2968 = vdwg.mxu0
    %2969 = vmatprep.subr.mxu0 %v2892
    %2970 = vmatpush1.msra.mxu0 %v2891
    %2971 = vmatprep.subr.mxu0 0.0
    %2972 = vmatpush1.msra.mxu0 0.0
    %2973 = vmatprep.subr.mxu0 0.0
    %2974 = vmatpush1.msra.mxu0 0.0
    %2975 = vmatprep.subr.mxu0 0.0
    %2976 = vmatpush1.msra.mxu0 0.0
    %2977 = vmatprep.subr.mxu0 0.0
    %2978 = vmatpush1.msra.mxu0 0.0
    %2979 = vmatprep.subr.mxu0 0.0
    %2980 = vmatpush1.msra.mxu0 0.0
    %2981 = vmatprep.subr.mxu0 0.0
    %2982 = vmatpush1.msra.mxu0 0.0
    %2983 = vmatprep.subr.mxu0 0.0
    %2984 = vmatpush1.msra.mxu0 0.0
    %2985 = vmatprep.subr.mxu0 0.0
    %2986 = vmatpush1.msra.mxu0 0.0
    %2987 = vmatprep.subr.mxu0 0.0
    %2988 = vmatpush1.msra.mxu0 0.0
    %2989 = vmatprep.subr.mxu0 0.0
    %2990 = vmatpush1.msra.mxu0 0.0
    %2991 = vmatprep.subr.mxu0 0.0
    %2992 = vmatpush1.msra.mxu0 0.0
    %2993 = vmatprep.subr.mxu0 0.0
    %2994 = vmatpush1.msra.mxu0 0.0
    %2995 = vmatprep.subr.mxu0 0.0
    %2996 = vmatpush1.msra.mxu0 0.0
    %2997 = vmatprep.subr.mxu0 0.0
    %2998 = vmatpush1.msra.mxu0 0.0
    %2999 = vmatprep.subr.mxu0 0.0
    %3000 = vmatpush1.msra.mxu0 0.0
    %3001 = vmatprep.subr.mxu0 0.0
    %3002 = vmatpush1.msra.mxu0 0.0
    %3003 = vmatprep.subr.mxu0 0.0
    %3004 = vmatpush1.msra.mxu0 0.0
    %3005 = vmatprep.subr.mxu0 0.0
    %3006 = vmatpush1.msra.mxu0 0.0
    %3007 = vmatprep.subr.mxu0 0.0
    %3008 = vmatpush1.msra.mxu0 0.0
    %3009 = vmatprep.subr.mxu0 0.0
    %3010 = vmatpush1.msra.mxu0 0.0
    %3011 = vmatprep.subr.mxu0 0.0
    %3012 = vmatpush1.msra.mxu0 0.0
    %3013 = vmatprep.subr.mxu0 0.0
    %3014 = vmatpush1.msra.mxu0 0.0
    %3015 = vmatprep.subr.mxu0 0.0
    %3016 = vmatpush1.msra.mxu0 0.0
    %3017 = vmatprep.subr.mxu0 0.0
    %3018 = vmatpush1.msra.mxu0 0.0
    %3019 = vmatprep.subr.mxu0 0.0
    %3020 = vmatpush1.msra.mxu0 0.0
    %3021 = vmatprep.subr.mxu0 0.0
    %3022 = vmatpush1.msra.mxu0 0.0
    %3023 = vmatprep.subr.mxu0 0.0
    %3024 = vmatpush1.msra.mxu0 0.0
    %3025 = vmatprep.subr.mxu0 0.0
    %3026 = vmatpush1.msra.mxu0 0.0
    %3027 = vmatprep.subr.mxu0 0.0
    %3028 = vmatpush1.msra.mxu0 0.0
    %3029 = vmatprep.subr.mxu0 0.0
    %3030 = vmatpush1.msra.mxu0 0.0
    %3031 = vmatprep.subr.mxu0 0.0
    %3032 = vmatpush1.msra.mxu0 0.0
    %3033 = vmatprep.mubr.f32.mxu0 0.0
    %3034 = vmatmul.mubr.f32.gmra.mrb[0].mxu0 %v2896
    %v3035 = vpop.f32.mrb[0].mxu0
    %v3036 = vadd.f32 0.0, %v3035
    %v3037 = vpop.f32.mrb[0].mxu0
    %v3038 = vadd.f32 0.0, %v3037
    %3039 = vdwg.mxu0
    %v3040 = vadd.f32 %v2885, %v2965
    %v3041 = vadd.f32 %v2886, %v2967
    %v3042 = vadd.f32 %v2887, %v3036
    %v3043 = vadd.f32 %v2888, %v3038
    %3044 = vrot.lane.b32.xlu0 %v2226, 127
    %v3045 = vpop.permute.xlu0 %3044
    %3046 = vrot.lane.b32.xlu0 %v2227, 127
    %v3047 = vpop.permute.xlu0 %3046
    %3048 = vrot.lane.b32.xlu0 %v2228, 127
    %v3049 = vpop.permute.xlu0 %3048
    %3050 = vrot.lane.b32.xlu0 %v2229, 127
    %v3051 = vpop.permute.xlu0 %3050
    %v3052 = vsel %vm1409, %v3049, %v3051
    %v3053 = vsel %vm1409, %v3047, %v3049
    %v3054 = vsel %vm1409, %v3045, %v3047
    %v3055 = vsel %vm1409, %v3051, %v3045
    %v3056 = vmul.f32 %v1417, %v3054
    %v3057 = vmul.f32 %v1421, %v3053
    %v3058 = vmul.f32 %v1425, %v3052
    %v3059 = vmul.f32 %v1429, %v3055
    %s3060 = scalar_lea.vmem %s5, 40
    %v3061 = vld [vmem:[%s3060] sm:$0xff]
    %v3063 = vsel %vm135, %v3061, 0
    %3065 = vmatprep.subr.mxu0 %v3057
    %3066 = vmatpush1.msra.mxu0 %v3056
    %3067 = vmatprep.subr.mxu0 0.0
    %3068 = vmatpush1.msra.mxu0 0.0
    %3069 = vmatprep.subr.mxu0 0.0
    %3070 = vmatpush1.msra.mxu0 0.0
    %3071 = vmatprep.subr.mxu0 0.0
    %3072 = vmatpush1.msra.mxu0 0.0
    %3073 = vmatprep.subr.mxu0 0.0
    %3074 = vmatpush1.msra.mxu0 0.0
    %3075 = vmatprep.subr.mxu0 0.0
    %3076 = vmatpush1.msra.mxu0 0.0
    %3077 = vmatprep.subr.mxu0 0.0
    %3078 = vmatpush1.msra.mxu0 0.0
    %3079 = vmatprep.subr.mxu0 0.0
    %3080 = vmatpush1.msra.mxu0 0.0
    %3081 = vmatprep.subr.mxu0 0.0
    %3082 = vmatpush1.msra.mxu0 0.0
    %3083 = vmatprep.subr.mxu0 0.0
    %3084 = vmatpush1.msra.mxu0 0.0
    %3085 = vmatprep.subr.mxu0 0.0
    %3086 = vmatpush1.msra.mxu0 0.0
    %3087 = vmatprep.subr.mxu0 0.0
    %3088 = vmatpush1.msra.mxu0 0.0
    %3089 = vmatprep.subr.mxu0 0.0
    %3090 = vmatpush1.msra.mxu0 0.0
    %3091 = vmatprep.subr.mxu0 0.0
    %3092 = vmatpush1.msra.mxu0 0.0
    %3093 = vmatprep.subr.mxu0 0.0
    %3094 = vmatpush1.msra.mxu0 0.0
    %3095 = vmatprep.subr.mxu0 0.0
    %3096 = vmatpush1.msra.mxu0 0.0
    %3097 = vmatprep.subr.mxu0 0.0
    %3098 = vmatpush1.msra.mxu0 0.0
    %3099 = vmatprep.subr.mxu0 0.0
    %3100 = vmatpush1.msra.mxu0 0.0
    %3101 = vmatprep.subr.mxu0 0.0
    %3102 = vmatpush1.msra.mxu0 0.0
    %3103 = vmatprep.subr.mxu0 0.0
    %3104 = vmatpush1.msra.mxu0 0.0
    %3105 = vmatprep.subr.mxu0 0.0
    %3106 = vmatpush1.msra.mxu0 0.0
    %3107 = vmatprep.subr.mxu0 0.0
    %3108 = vmatpush1.msra.mxu0 0.0
    %3109 = vmatprep.subr.mxu0 0.0
    %3110 = vmatpush1.msra.mxu0 0.0
    %3111 = vmatprep.subr.mxu0 0.0
    %3112 = vmatpush1.msra.mxu0 0.0
    %3113 = vmatprep.subr.mxu0 0.0
    %3114 = vmatpush1.msra.mxu0 0.0
    %3115 = vmatprep.subr.mxu0 0.0
    %3116 = vmatpush1.msra.mxu0 0.0
    %3117 = vmatprep.subr.mxu0 0.0
    %3118 = vmatpush1.msra.mxu0 0.0
    %3119 = vmatprep.subr.mxu0 0.0
    %3120 = vmatpush1.msra.mxu0 0.0
    %3121 = vmatprep.subr.mxu0 0.0
    %3122 = vmatpush1.msra.mxu0 0.0
    %3123 = vmatprep.subr.mxu0 0.0
    %3124 = vmatpush1.msra.mxu0 0.0
    %3125 = vmatprep.subr.mxu0 0.0
    %3126 = vmatpush1.msra.mxu0 0.0
    %3127 = vmatprep.subr.mxu0 0.0
    %3128 = vmatpush1.msra.mxu0 0.0
    %3129 = vmatprep.mubr.f32.mxu0 0.0
    %3130 = vmatmul.mubr.f32.gmra.mrb[0].mxu0 %v3063
    %v3131 = vpop.f32.mrb[0].mxu0
    %v3132 = vadd.f32 0.0, %v3131
    %v3133 = vpop.f32.mrb[0].mxu0
    %v3134 = vadd.f32 0.0, %v3133
    %3135 = vdwg.mxu0
    %3136 = vmatprep.subr.mxu0 %v3059
    %3137 = vmatpush1.msra.mxu0 %v3058
    %3138 = vmatprep.subr.mxu0 0.0
    %3139 = vmatpush1.msra.mxu0 0.0
    %3140 = vmatprep.subr.mxu0 0.0
    %3141 = vmatpush1.msra.mxu0 0.0
    %3142 = vmatprep.subr.mxu0 0.0
    %3143 = vmatpush1.msra.mxu0 0.0
    %3144 = vmatprep.subr.mxu0 0.0
    %3145 = vmatpush1.msra.mxu0 0.0
    %3146 = vmatprep.subr.mxu0 0.0
    %3147 = vmatpush1.msra.mxu0 0.0
    %3148 = vmatprep.subr.mxu0 0.0
    %3149 = vmatpush1.msra.mxu0 0.0
    %3150 = vmatprep.subr.mxu0 0.0
    %3151 = vmatpush1.msra.mxu0 0.0
    %3152 = vmatprep.subr.mxu0 0.0
    %3153 = vmatpush1.msra.mxu0 0.0
    %3154 = vmatprep.subr.mxu0 0.0
    %3155 = vmatpush1.msra.mxu0 0.0
    %3156 = vmatprep.subr.mxu0 0.0
    %3157 = vmatpush1.msra.mxu0 0.0
    %3158 = vmatprep.subr.mxu0 0.0
    %3159 = vmatpush1.msra.mxu0 0.0
    %3160 = vmatprep.subr.mxu0 0.0
    %3161 = vmatpush1.msra.mxu0 0.0
    %3162 = vmatprep.subr.mxu0 0.0
    %3163 = vmatpush1.msra.mxu0 0.0
    %3164 = vmatprep.subr.mxu0 0.0
    %3165 = vmatpush1.msra.mxu0 0.0
    %3166 = vmatprep.subr.mxu0 0.0
    %3167 = vmatpush1.msra.mxu0 0.0
    %3168 = vmatprep.subr.mxu0 0.0
    %3169 = vmatpush1.msra.mxu0 0.0
    %3170 = vmatprep.subr.mxu0 0.0
    %3171 = vmatpush1.msra.mxu0 0.0
    %3172 = vmatprep.subr.mxu0 0.0
    %3173 = vmatpush1.msra.mxu0 0.0
    %3174 = vmatprep.subr.mxu0 0.0
    %3175 = vmatpush1.msra.mxu0 0.0
    %3176 = vmatprep.subr.mxu0 0.0
    %3177 = vmatpush1.msra.mxu0 0.0
    %3178 = vmatprep.subr.mxu0 0.0
    %3179 = vmatpush1.msra.mxu0 0.0
    %3180 = vmatprep.subr.mxu0 0.0
    %3181 = vmatpush1.msra.mxu0 0.0
    %3182 = vmatprep.subr.mxu0 0.0
    %3183 = vmatpush1.msra.mxu0 0.0
    %3184 = vmatprep.subr.mxu0 0.0
    %3185 = vmatpush1.msra.mxu0 0.0
    %3186 = vmatprep.subr.mxu0 0.0
    %3187 = vmatpush1.msra.mxu0 0.0
    %3188 = vmatprep.subr.mxu0 0.0
    %3189 = vmatpush1.msra.mxu0 0.0
    %3190 = vmatprep.subr.mxu0 0.0
    %3191 = vmatpush1.msra.mxu0 0.0
    %3192 = vmatprep.subr.mxu0 0.0
    %3193 = vmatpush1.msra.mxu0 0.0
    %3194 = vmatprep.subr.mxu0 0.0
    %3195 = vmatpush1.msra.mxu0 0.0
    %3196 = vmatprep.subr.mxu0 0.0
    %3197 = vmatpush1.msra.mxu0 0.0
    %3198 = vmatprep.subr.mxu0 0.0
    %3199 = vmatpush1.msra.mxu0 0.0
    %3200 = vmatprep.mubr.f32.mxu0 0.0
    %3201 = vmatmul.mubr.f32.gmra.mrb[0].mxu0 %v3063
    %v3202 = vpop.f32.mrb[0].mxu0
    %v3203 = vadd.f32 0.0, %v3202
    %v3204 = vpop.f32.mrb[0].mxu0
    %v3205 = vadd.f32 0.0, %v3204
    %3206 = vdwg.mxu0
    %v3207 = vadd.f32 %v3040, %v3132
    %v3208 = vadd.f32 %v3041, %v3134
    %v3209 = vadd.f32 %v3042, %v3203
    %v3210 = vadd.f32 %v3043, %v3205
    %3211 = vrot.lane.b32.xlu0 %v2226, 113
    %v3212 = vpop.permute.xlu0 %3211
    %3213 = vrot.lane.b32.xlu0 %v2227, 113
    %v3214 = vpop.permute.xlu0 %3213
    %3215 = vrot.lane.b32.xlu0 %v2228, 113
    %v3216 = vpop.permute.xlu0 %3215
    %3217 = vrot.lane.b32.xlu0 %v2229, 113
    %v3218 = vpop.permute.xlu0 %3217
    %v3219 = vsel %vm1605, %v3216, %v3218
    %v3220 = vsel %vm1605, %v3214, %v3216
    %v3221 = vsel %vm1605, %v3212, %v3214
    %v3222 = vsel %vm1605, %v3218, %v3212
    %v3223 = vmul.f32 %v1613, %v3221
    %v3224 = vmul.f32 %v1617, %v3220
    %v3225 = vmul.f32 %v1621, %v3219
    %v3226 = vmul.f32 %v1625, %v3222
    %s3227 = scalar_lea.vmem %s5, 48
    %v3228 = vld [vmem:[%s3227] sm:$0xff]
    %v3230 = vsel %vm135, %v3228, 0
    %3232 = vmatprep.subr.mxu0 %v3224
    %3233 = vmatpush1.msra.mxu0 %v3223
    %3234 = vmatprep.subr.mxu0 0.0
    %3235 = vmatpush1.msra.mxu0 0.0
    %3236 = vmatprep.subr.mxu0 0.0
    %3237 = vmatpush1.msra.mxu0 0.0
    %3238 = vmatprep.subr.mxu0 0.0
    %3239 = vmatpush1.msra.mxu0 0.0
    %3240 = vmatprep.subr.mxu0 0.0
    %3241 = vmatpush1.msra.mxu0 0.0
    %3242 = vmatprep.subr.mxu0 0.0
    %3243 = vmatpush1.msra.mxu0 0.0
    %3244 = vmatprep.subr.mxu0 0.0
    %3245 = vmatpush1.msra.mxu0 0.0
    %3246 = vmatprep.subr.mxu0 0.0
    %3247 = vmatpush1.msra.mxu0 0.0
    %3248 = vmatprep.subr.mxu0 0.0
    %3249 = vmatpush1.msra.mxu0 0.0
    %3250 = vmatprep.subr.mxu0 0.0
    %3251 = vmatpush1.msra.mxu0 0.0
    %3252 = vmatprep.subr.mxu0 0.0
    %3253 = vmatpush1.msra.mxu0 0.0
    %3254 = vmatprep.subr.mxu0 0.0
    %3255 = vmatpush1.msra.mxu0 0.0
    %3256 = vmatprep.subr.mxu0 0.0
    %3257 = vmatpush1.msra.mxu0 0.0
    %3258 = vmatprep.subr.mxu0 0.0
    %3259 = vmatpush1.msra.mxu0 0.0
    %3260 = vmatprep.subr.mxu0 0.0
    %3261 = vmatpush1.msra.mxu0 0.0
    %3262 = vmatprep.subr.mxu0 0.0
    %3263 = vmatpush1.msra.mxu0 0.0
    %3264 = vmatprep.subr.mxu0 0.0
    %3265 = vmatpush1.msra.mxu0 0.0
    %3266 = vmatprep.subr.mxu0 0.0
    %3267 = vmatpush1.msra.mxu0 0.0
    %3268 = vmatprep.subr.mxu0 0.0
    %3269 = vmatpush1.msra.mxu0 0.0
    %3270 = vmatprep.subr.mxu0 0.0
    %3271 = vmatpush1.msra.mxu0 0.0
    %3272 = vmatprep.subr.mxu0 0.0
    %3273 = vmatpush1.msra.mxu0 0.0
    %3274 = vmatprep.subr.mxu0 0.0
    %3275 = vmatpush1.msra.mxu0 0.0
    %3276 = vmatprep.subr.mxu0 0.0
    %3277 = vmatpush1.msra.mxu0 0.0
    %3278 = vmatprep.subr.mxu0 0.0
    %3279 = vmatpush1.msra.mxu0 0.0
    %3280 = vmatprep.subr.mxu0 0.0
    %3281 = vmatpush1.msra.mxu0 0.0
    %3282 = vmatprep.subr.mxu0 0.0
    %3283 = vmatpush1.msra.mxu0 0.0
    %3284 = vmatprep.subr.mxu0 0.0
    %3285 = vmatpush1.msra.mxu0 0.0
    %3286 = vmatprep.subr.mxu0 0.0
    %3287 = vmatpush1.msra.mxu0 0.0
    %3288 = vmatprep.subr.mxu0 0.0
    %3289 = vmatpush1.msra.mxu0 0.0
    %3290 = vmatprep.subr.mxu0 0.0
    %3291 = vmatpush1.msra.mxu0 0.0
    %3292 = vmatprep.subr.mxu0 0.0
    %3293 = vmatpush1.msra.mxu0 0.0
    %3294 = vmatprep.subr.mxu0 0.0
    %3295 = vmatpush1.msra.mxu0 0.0
    %3296 = vmatprep.mubr.f32.mxu0 0.0
    %3297 = vmatmul.mubr.f32.gmra.mrb[0].mxu0 %v3230
    %v3298 = vpop.f32.mrb[0].mxu0
    %v3299 = vadd.f32 0.0, %v3298
    %v3300 = vpop.f32.mrb[0].mxu0
    %v3301 = vadd.f32 0.0, %v3300
    %3302 = vdwg.mxu0
    %3303 = vmatprep.subr.mxu0 %v3226
    %3304 = vmatpush1.msra.mxu0 %v3225
    %3305 = vmatprep.subr.mxu0 0.0
    %3306 = vmatpush1.msra.mxu0 0.0
    %3307 = vmatprep.subr.mxu0 0.0
    %3308 = vmatpush1.msra.mxu0 0.0
    %3309 = vmatprep.subr.mxu0 0.0
    %3310 = vmatpush1.msra.mxu0 0.0
    %3311 = vmatprep.subr.mxu0 0.0
    %3312 = vmatpush1.msra.mxu0 0.0
    %3313 = vmatprep.subr.mxu0 0.0
    %3314 = vmatpush1.msra.mxu0 0.0
    %3315 = vmatprep.subr.mxu0 0.0
    %3316 = vmatpush1.msra.mxu0 0.0
    %3317 = vmatprep.subr.mxu0 0.0
    %3318 = vmatpush1.msra.mxu0 0.0
    %3319 = vmatprep.subr.mxu0 0.0
    %3320 = vmatpush1.msra.mxu0 0.0
    %3321 = vmatprep.subr.mxu0 0.0
    %3322 = vmatpush1.msra.mxu0 0.0
    %3323 = vmatprep.subr.mxu0 0.0
    %3324 = vmatpush1.msra.mxu0 0.0
    %3325 = vmatprep.subr.mxu0 0.0
    %3326 = vmatpush1.msra.mxu0 0.0
    %3327 = vmatprep.subr.mxu0 0.0
    %3328 = vmatpush1.msra.mxu0 0.0
    %3329 = vmatprep.subr.mxu0 0.0
    %3330 = vmatpush1.msra.mxu0 0.0
    %3331 = vmatprep.subr.mxu0 0.0
    %3332 = vmatpush1.msra.mxu0 0.0
    %3333 = vmatprep.subr.mxu0 0.0
    %3334 = vmatpush1.msra.mxu0 0.0
    %3335 = vmatprep.subr.mxu0 0.0
    %3336 = vmatpush1.msra.mxu0 0.0
    %3337 = vmatprep.subr.mxu0 0.0
    %3338 = vmatpush1.msra.mxu0 0.0
    %3339 = vmatprep.subr.mxu0 0.0
    %3340 = vmatpush1.msra.mxu0 0.0
    %3341 = vmatprep.subr.mxu0 0.0
    %3342 = vmatpush1.msra.mxu0 0.0
    %3343 = vmatprep.subr.mxu0 0.0
    %3344 = vmatpush1.msra.mxu0 0.0
    %3345 = vmatprep.subr.mxu0 0.0
    %3346 = vmatpush1.msra.mxu0 0.0
    %3347 = vmatprep.subr.mxu0 0.0
    %3348 = vmatpush1.msra.mxu0 0.0
    %3349 = vmatprep.subr.mxu0 0.0
    %3350 = vmatpush1.msra.mxu0 0.0
    %3351 = vmatprep.subr.mxu0 0.0
    %3352 = vmatpush1.msra.mxu0 0.0
    %3353 = vmatprep.subr.mxu0 0.0
    %3354 = vmatpush1.msra.mxu0 0.0
    %3355 = vmatprep.subr.mxu0 0.0
    %3356 = vmatpush1.msra.mxu0 0.0
    %3357 = vmatprep.subr.mxu0 0.0
    %3358 = vmatpush1.msra.mxu0 0.0
    %3359 = vmatprep.subr.mxu0 0.0
    %3360 = vmatpush1.msra.mxu0 0.0
    %3361 = vmatprep.subr.mxu0 0.0
    %3362 = vmatpush1.msra.mxu0 0.0
    %3363 = vmatprep.subr.mxu0 0.0
    %3364 = vmatpush1.msra.mxu0 0.0
    %3365 = vmatprep.subr.mxu0 0.0
    %3366 = vmatpush1.msra.mxu0 0.0
    %3367 = vmatprep.mubr.f32.mxu0 0.0
    %3368 = vmatmul.mubr.f32.gmra.mrb[0].mxu0 %v3230
    %v3369 = vpop.f32.mrb[0].mxu0
    %v3370 = vadd.f32 0.0, %v3369
    %v3371 = vpop.f32.mrb[0].mxu0
    %v3372 = vadd.f32 0.0, %v3371
    %3373 = vdwg.mxu0
    %v3374 = vadd.f32 %v3207, %v3299
    %v3375 = vadd.f32 %v3208, %v3301
    %v3376 = vadd.f32 %v3209, %v3370
    %v3377 = vadd.f32 %v3210, %v3372
    %3378 = vrot.lane.b32.xlu0 %v2226, 112
    %v3379 = vpop.permute.xlu0 %3378
    %3380 = vrot.lane.b32.xlu0 %v2227, 112
    %v3381 = vpop.permute.xlu0 %3380
    %3382 = vrot.lane.b32.xlu0 %v2228, 112
    %v3383 = vpop.permute.xlu0 %3382
    %3384 = vrot.lane.b32.xlu0 %v2229, 112
    %v3385 = vpop.permute.xlu0 %3384
    %v3386 = vsel %vm1801, %v3383, %v3385
    %v3387 = vsel %vm1801, %v3381, %v3383
    %v3388 = vsel %vm1801, %v3379, %v3381
    %v3389 = vsel %vm1801, %v3385, %v3379
    %v3390 = vmul.f32 %v1809, %v3388
    %v3391 = vmul.f32 %v1813, %v3387
    %v3392 = vmul.f32 %v1817, %v3386
    %v3393 = vmul.f32 %v1821, %v3389
    %s3394 = scalar_lea.vmem %s5, 56
    %v3395 = vld [vmem:[%s3394] sm:$0xff]
    %v3397 = vsel %vm135, %v3395, 0
    %3399 = vmatprep.subr.mxu0 %v3391
    %3400 = vmatpush1.msra.mxu0 %v3390
    %3401 = vmatprep.subr.mxu0 0.0
    %3402 = vmatpush1.msra.mxu0 0.0
    %3403 = vmatprep.subr.mxu0 0.0
    %3404 = vmatpush1.msra.mxu0 0.0
    %3405 = vmatprep.subr.mxu0 0.0
    %3406 = vmatpush1.msra.mxu0 0.0
    %3407 = vmatprep.subr.mxu0 0.0
    %3408 = vmatpush1.msra.mxu0 0.0
    %3409 = vmatprep.subr.mxu0 0.0
    %3410 = vmatpush1.msra.mxu0 0.0
    %3411 = vmatprep.subr.mxu0 0.0
    %3412 = vmatpush1.msra.mxu0 0.0
    %3413 = vmatprep.subr.mxu0 0.0
    %3414 = vmatpush1.msra.mxu0 0.0
    %3415 = vmatprep.subr.mxu0 0.0
    %3416 = vmatpush1.msra.mxu0 0.0
    %3417 = vmatprep.subr.mxu0 0.0
    %3418 = vmatpush1.msra.mxu0 0.0
    %3419 = vmatprep.subr.mxu0 0.0
    %3420 = vmatpush1.msra.mxu0 0.0
    %3421 = vmatprep.subr.mxu0 0.0
    %3422 = vmatpush1.msra.mxu0 0.0
    %3423 = vmatprep.subr.mxu0 0.0
    %3424 = vmatpush1.msra.mxu0 0.0
    %3425 = vmatprep.subr.mxu0 0.0
    %3426 = vmatpush1.msra.mxu0 0.0
    %3427 = vmatprep.subr.mxu0 0.0
    %3428 = vmatpush1.msra.mxu0 0.0
    %3429 = vmatprep.subr.mxu0 0.0
    %3430 = vmatpush1.msra.mxu0 0.0
    %3431 = vmatprep.subr.mxu0 0.0
    %3432 = vmatpush1.msra.mxu0 0.0
    %3433 = vmatprep.subr.mxu0 0.0
    %3434 = vmatpush1.msra.mxu0 0.0
    %3435 = vmatprep.subr.mxu0 0.0
    %3436 = vmatpush1.msra.mxu0 0.0
    %3437 = vmatprep.subr.mxu0 0.0
    %3438 = vmatpush1.msra.mxu0 0.0
    %3439 = vmatprep.subr.mxu0 0.0
    %3440 = vmatpush1.msra.mxu0 0.0
    %3441 = vmatprep.subr.mxu0 0.0
    %3442 = vmatpush1.msra.mxu0 0.0
    %3443 = vmatprep.subr.mxu0 0.0
    %3444 = vmatpush1.msra.mxu0 0.0
    %3445 = vmatprep.subr.mxu0 0.0
    %3446 = vmatpush1.msra.mxu0 0.0
    %3447 = vmatprep.subr.mxu0 0.0
    %3448 = vmatpush1.msra.mxu0 0.0
    %3449 = vmatprep.subr.mxu0 0.0
    %3450 = vmatpush1.msra.mxu0 0.0
    %3451 = vmatprep.subr.mxu0 0.0
    %3452 = vmatpush1.msra.mxu0 0.0
    %3453 = vmatprep.subr.mxu0 0.0
    %3454 = vmatpush1.msra.mxu0 0.0
    %3455 = vmatprep.subr.mxu0 0.0
    %3456 = vmatpush1.msra.mxu0 0.0
    %3457 = vmatprep.subr.mxu0 0.0
    %3458 = vmatpush1.msra.mxu0 0.0
    %3459 = vmatprep.subr.mxu0 0.0
    %3460 = vmatpush1.msra.mxu0 0.0
    %3461 = vmatprep.subr.mxu0 0.0
    %3462 = vmatpush1.msra.mxu0 0.0
    %3463 = vmatprep.mubr.f32.mxu0 0.0
    %3464 = vmatmul.mubr.f32.gmra.mrb[0].mxu0 %v3397
    %v3465 = vpop.f32.mrb[0].mxu0
    %v3466 = vadd.f32 0.0, %v3465
    %v3467 = vpop.f32.mrb[0].mxu0
    %v3468 = vadd.f32 0.0, %v3467
    %3469 = vdwg.mxu0
    %3470 = vmatprep.subr.mxu0 %v3393
    %3471 = vmatpush1.msra.mxu0 %v3392
    %3472 = vmatprep.subr.mxu0 0.0
    %3473 = vmatpush1.msra.mxu0 0.0
    %3474 = vmatprep.subr.mxu0 0.0
    %3475 = vmatpush1.msra.mxu0 0.0
    %3476 = vmatprep.subr.mxu0 0.0
    %3477 = vmatpush1.msra.mxu0 0.0
    %3478 = vmatprep.subr.mxu0 0.0
    %3479 = vmatpush1.msra.mxu0 0.0
    %3480 = vmatprep.subr.mxu0 0.0
    %3481 = vmatpush1.msra.mxu0 0.0
    %3482 = vmatprep.subr.mxu0 0.0
    %3483 = vmatpush1.msra.mxu0 0.0
    %3484 = vmatprep.subr.mxu0 0.0
    %3485 = vmatpush1.msra.mxu0 0.0
    %3486 = vmatprep.subr.mxu0 0.0
    %3487 = vmatpush1.msra.mxu0 0.0
    %3488 = vmatprep.subr.mxu0 0.0
    %3489 = vmatpush1.msra.mxu0 0.0
    %3490 = vmatprep.subr.mxu0 0.0
    %3491 = vmatpush1.msra.mxu0 0.0
    %3492 = vmatprep.subr.mxu0 0.0
    %3493 = vmatpush1.msra.mxu0 0.0
    %3494 = vmatprep.subr.mxu0 0.0
    %3495 = vmatpush1.msra.mxu0 0.0
    %3496 = vmatprep.subr.mxu0 0.0
    %3497 = vmatpush1.msra.mxu0 0.0
    %3498 = vmatprep.subr.mxu0 0.0
    %3499 = vmatpush1.msra.mxu0 0.0
    %3500 = vmatprep.subr.mxu0 0.0
    %3501 = vmatpush1.msra.mxu0 0.0
    %3502 = vmatprep.subr.mxu0 0.0
    %3503 = vmatpush1.msra.mxu0 0.0
    %3504 = vmatprep.subr.mxu0 0.0
    %3505 = vmatpush1.msra.mxu0 0.0
    %3506 = vmatprep.subr.mxu0 0.0
    %3507 = vmatpush1.msra.mxu0 0.0
    %3508 = vmatprep.subr.mxu0 0.0
    %3509 = vmatpush1.msra.mxu0 0.0
    %3510 = vmatprep.subr.mxu0 0.0
    %3511 = vmatpush1.msra.mxu0 0.0
    %3512 = vmatprep.subr.mxu0 0.0
    %3513 = vmatpush1.msra.mxu0 0.0
    %3514 = vmatprep.subr.mxu0 0.0
    %3515 = vmatpush1.msra.mxu0 0.0
    %3516 = vmatprep.subr.mxu0 0.0
    %3517 = vmatpush1.msra.mxu0 0.0
    %3518 = vmatprep.subr.mxu0 0.0
    %3519 = vmatpush1.msra.mxu0 0.0
    %3520 = vmatprep.subr.mxu0 0.0
    %3521 = vmatpush1.msra.mxu0 0.0
    %3522 = vmatprep.subr.mxu0 0.0
    %3523 = vmatpush1.msra.mxu0 0.0
    %3524 = vmatprep.subr.mxu0 0.0
    %3525 = vmatpush1.msra.mxu0 0.0
    %3526 = vmatprep.subr.mxu0 0.0
    %3527 = vmatpush1.msra.mxu0 0.0
    %3528 = vmatprep.subr.mxu0 0.0
    %3529 = vmatpush1.msra.mxu0 0.0
    %3530 = vmatprep.subr.mxu0 0.0
    %3531 = vmatpush1.msra.mxu0 0.0
    %3532 = vmatprep.subr.mxu0 0.0
    %3533 = vmatpush1.msra.mxu0 0.0
    %3534 = vmatprep.mubr.f32.mxu0 0.0
    %3535 = vmatmul.mubr.f32.gmra.mrb[0].mxu0 %v3397
    %v3536 = vpop.f32.mrb[0].mxu0
    %v3537 = vadd.f32 0.0, %v3536
    %v3538 = vpop.f32.mrb[0].mxu0
    %v3539 = vadd.f32 0.0, %v3538
    %3540 = vdwg.mxu0
    %v3541 = vadd.f32 %v3374, %v3466
    %v3542 = vadd.f32 %v3375, %v3468
    %v3543 = vadd.f32 %v3376, %v3537
    %v3544 = vadd.f32 %v3377, %v3539
    %3545 = vrot.lane.b32.xlu0 %v2226, 111
    %v3546 = vpop.permute.xlu0 %3545
    %3547 = vrot.lane.b32.xlu0 %v2227, 111
    %v3548 = vpop.permute.xlu0 %3547
    %3549 = vrot.lane.b32.xlu0 %v2228, 111
    %v3550 = vpop.permute.xlu0 %3549
    %3551 = vrot.lane.b32.xlu0 %v2229, 111
    %v3552 = vpop.permute.xlu0 %3551
    %v3553 = vsel %vm1997, %v3550, %v3552
    %v3554 = vsel %vm1997, %v3548, %v3550
    %v3555 = vsel %vm1997, %v3546, %v3548
    %v3556 = vsel %vm1997, %v3552, %v3546
    %v3557 = vmul.f32 %v2005, %v3555
    %v3558 = vmul.f32 %v2009, %v3554
    %v3559 = vmul.f32 %v2013, %v3553
    %v3560 = vmul.f32 %v2017, %v3556
    %s3561 = scalar_lea.vmem %s5, 64
    %v3562 = vld [vmem:[%s3561] sm:$0xff]
    %v3564 = vsel %vm135, %v3562, 0
    %3566 = vmatprep.subr.mxu0 %v3558
    %3567 = vmatpush1.msra.mxu0 %v3557
    %3568 = vmatprep.subr.mxu0 0.0
    %3569 = vmatpush1.msra.mxu0 0.0
    %3570 = vmatprep.subr.mxu0 0.0
    %3571 = vmatpush1.msra.mxu0 0.0
    %3572 = vmatprep.subr.mxu0 0.0
    %3573 = vmatpush1.msra.mxu0 0.0
    %3574 = vmatprep.subr.mxu0 0.0
    %3575 = vmatpush1.msra.mxu0 0.0
    %3576 = vmatprep.subr.mxu0 0.0
    %3577 = vmatpush1.msra.mxu0 0.0
    %3578 = vmatprep.subr.mxu0 0.0
    %3579 = vmatpush1.msra.mxu0 0.0
    %3580 = vmatprep.subr.mxu0 0.0
    %3581 = vmatpush1.msra.mxu0 0.0
    %3582 = vmatprep.subr.mxu0 0.0
    %3583 = vmatpush1.msra.mxu0 0.0
    %3584 = vmatprep.subr.mxu0 0.0
    %3585 = vmatpush1.msra.mxu0 0.0
    %3586 = vmatprep.subr.mxu0 0.0
    %3587 = vmatpush1.msra.mxu0 0.0
    %3588 = vmatprep.subr.mxu0 0.0
    %3589 = vmatpush1.msra.mxu0 0.0
    %3590 = vmatprep.subr.mxu0 0.0
    %3591 = vmatpush1.msra.mxu0 0.0
    %3592 = vmatprep.subr.mxu0 0.0
    %3593 = vmatpush1.msra.mxu0 0.0
    %3594 = vmatprep.subr.mxu0 0.0
    %3595 = vmatpush1.msra.mxu0 0.0
    %3596 = vmatprep.subr.mxu0 0.0
    %3597 = vmatpush1.msra.mxu0 0.0
    %3598 = vmatprep.subr.mxu0 0.0
    %3599 = vmatpush1.msra.mxu0 0.0
    %3600 = vmatprep.subr.mxu0 0.0
    %3601 = vmatpush1.msra.mxu0 0.0
    %3602 = vmatprep.subr.mxu0 0.0
    %3603 = vmatpush1.msra.mxu0 0.0
    %3604 = vmatprep.subr.mxu0 0.0
    %3605 = vmatpush1.msra.mxu0 0.0
    %3606 = vmatprep.subr.mxu0 0.0
    %3607 = vmatpush1.msra.mxu0 0.0
    %3608 = vmatprep.subr.mxu0 0.0
    %3609 = vmatpush1.msra.mxu0 0.0
    %3610 = vmatprep.subr.mxu0 0.0
    %3611 = vmatpush1.msra.mxu0 0.0
    %3612 = vmatprep.subr.mxu0 0.0
    %3613 = vmatpush1.msra.mxu0 0.0
    %3614 = vmatprep.subr.mxu0 0.0
    %3615 = vmatpush1.msra.mxu0 0.0
    %3616 = vmatprep.subr.mxu0 0.0
    %3617 = vmatpush1.msra.mxu0 0.0
    %3618 = vmatprep.subr.mxu0 0.0
    %3619 = vmatpush1.msra.mxu0 0.0
    %3620 = vmatprep.subr.mxu0 0.0
    %3621 = vmatpush1.msra.mxu0 0.0
    %3622 = vmatprep.subr.mxu0 0.0
    %3623 = vmatpush1.msra.mxu0 0.0
    %3624 = vmatprep.subr.mxu0 0.0
    %3625 = vmatpush1.msra.mxu0 0.0
    %3626 = vmatprep.subr.mxu0 0.0
    %3627 = vmatpush1.msra.mxu0 0.0
    %3628 = vmatprep.subr.mxu0 0.0
    %3629 = vmatpush1.msra.mxu0 0.0
    %3630 = vmatprep.mubr.f32.mxu0 0.0
    %3631 = vmatmul.mubr.f32.gmra.mrb[0].mxu0 %v3564
    %v3632 = vpop.f32.mrb[0].mxu0
    %v3633 = vadd.f32 0.0, %v3632
    %v3634 = vpop.f32.mrb[0].mxu0
    %v3635 = vadd.f32 0.0, %v3634
    %3636 = vdwg.mxu0
    %3637 = vmatprep.subr.mxu0 %v3560
    %3638 = vmatpush1.msra.mxu0 %v3559
    %3639 = vmatprep.subr.mxu0 0.0
    %3640 = vmatpush1.msra.mxu0 0.0
    %3641 = vmatprep.subr.mxu0 0.0
    %3642 = vmatpush1.msra.mxu0 0.0
    %3643 = vmatprep.subr.mxu0 0.0
    %3644 = vmatpush1.msra.mxu0 0.0
    %3645 = vmatprep.subr.mxu0 0.0
    %3646 = vmatpush1.msra.mxu0 0.0
    %3647 = vmatprep.subr.mxu0 0.0
    %3648 = vmatpush1.msra.mxu0 0.0
    %3649 = vmatprep.subr.mxu0 0.0
    %3650 = vmatpush1.msra.mxu0 0.0
    %3651 = vmatprep.subr.mxu0 0.0
    %3652 = vmatpush1.msra.mxu0 0.0
    %3653 = vmatprep.subr.mxu0 0.0
    %3654 = vmatpush1.msra.mxu0 0.0
    %3655 = vmatprep.subr.mxu0 0.0
    %3656 = vmatpush1.msra.mxu0 0.0
    %3657 = vmatprep.subr.mxu0 0.0
    %3658 = vmatpush1.msra.mxu0 0.0
    %3659 = vmatprep.subr.mxu0 0.0
    %3660 = vmatpush1.msra.mxu0 0.0
    %3661 = vmatprep.subr.mxu0 0.0
    %3662 = vmatpush1.msra.mxu0 0.0
    %3663 = vmatprep.subr.mxu0 0.0
    %3664 = vmatpush1.msra.mxu0 0.0
    %3665 = vmatprep.subr.mxu0 0.0
    %3666 = vmatpush1.msra.mxu0 0.0
    %3667 = vmatprep.subr.mxu0 0.0
    %3668 = vmatpush1.msra.mxu0 0.0
    %3669 = vmatprep.subr.mxu0 0.0
    %3670 = vmatpush1.msra.mxu0 0.0
    %3671 = vmatprep.subr.mxu0 0.0
    %3672 = vmatpush1.msra.mxu0 0.0
    %3673 = vmatprep.subr.mxu0 0.0
    %3674 = vmatpush1.msra.mxu0 0.0
    %3675 = vmatprep.subr.mxu0 0.0
    %3676 = vmatpush1.msra.mxu0 0.0
    %3677 = vmatprep.subr.mxu0 0.0
    %3678 = vmatpush1.msra.mxu0 0.0
    %3679 = vmatprep.subr.mxu0 0.0
    %3680 = vmatpush1.msra.mxu0 0.0
    %3681 = vmatprep.subr.mxu0 0.0
    %3682 = vmatpush1.msra.mxu0 0.0
    %3683 = vmatprep.subr.mxu0 0.0
    %3684 = vmatpush1.msra.mxu0 0.0
    %3685 = vmatprep.subr.mxu0 0.0
    %3686 = vmatpush1.msra.mxu0 0.0
    %3687 = vmatprep.subr.mxu0 0.0
    %3688 = vmatpush1.msra.mxu0 0.0
    %3689 = vmatprep.subr.mxu0 0.0
    %3690 = vmatpush1.msra.mxu0 0.0
    %3691 = vmatprep.subr.mxu0 0.0
    %3692 = vmatpush1.msra.mxu0 0.0
    %3693 = vmatprep.subr.mxu0 0.0
    %3694 = vmatpush1.msra.mxu0 0.0
    %3695 = vmatprep.subr.mxu0 0.0
    %3696 = vmatpush1.msra.mxu0 0.0
    %3697 = vmatprep.subr.mxu0 0.0
    %3698 = vmatpush1.msra.mxu0 0.0
    %3699 = vmatprep.subr.mxu0 0.0
    %3700 = vmatpush1.msra.mxu0 0.0
    %3701 = vmatprep.mubr.f32.mxu0 0.0
    %3702 = vmatmul.mubr.f32.gmra.mrb[0].mxu0 %v3564
    %v3703 = vpop.f32.mrb[0].mxu0
    %v3704 = vadd.f32 0.0, %v3703
    %v3705 = vpop.f32.mrb[0].mxu0
    %v3706 = vadd.f32 0.0, %v3705
    %3707 = vdwg.mxu0
    %v3708 = vadd.f32 %v3541, %v3633
    %v3709 = vadd.f32 %v3542, %v3635
    %v3710 = vadd.f32 %v3543, %v3704
    %v3711 = vadd.f32 %v3544, %v3706
    %v3712 = vadd.f32 %v3708, %v3709
    %3713 = vadd.xlane.f32.xlu0 %v3712
    %v3714 = vpop.xlane.xlu0 %3713
    %v3715 = vmul.f32 %v3714, %v2188
    %v3716 = vsub.f32 %v3708, %v3715
    %v3717 = vsub.f32 %v3709, %v3715
    %v3718 = vmul.f32 %v3716, %v3716
    %v3719 = vmul.f32 %v3717, %v3717
    %v3720 = vadd.f32 %v3718, %v3719
    %3721 = vadd.xlane.f32.xlu0 %v3720
    %v3722 = vpop.xlane.xlu0 %3721
    %v3723 = vmul.f32 %v3722, %v2188
    %v3724 = vadd.f32 %v3723, 1e-05
    %v3725 = vrsqrt.pop %v3724
    %v3726 = vmul.f32 %v3716, %v3725
    %v3727 = vmul.f32 %v3717, %v3725
    %v3728 = vadd.f32 %v3710, %v3711
    %3729 = vadd.xlane.f32.xlu0 %v3728
    %v3730 = vpop.xlane.xlu0 %3729
    %v3731 = vmul.f32 %v3730, %v2188
    %v3732 = vsub.f32 %v3710, %v3731
    %v3733 = vsub.f32 %v3711, %v3731
    %v3734 = vmul.f32 %v3732, %v3732
    %v3735 = vmul.f32 %v3733, %v3733
    %v3736 = vadd.f32 %v3734, %v3735
    %3737 = vadd.xlane.f32.xlu0 %v3736
    %v3738 = vpop.xlane.xlu0 %3737
    %v3739 = vmul.f32 %v3738, %v2188
    %v3740 = vadd.f32 %v3739, 1e-05
    %v3741 = vrsqrt.pop %v3740
    %v3742 = vmul.f32 %v3732, %v3741
    %v3743 = vmul.f32 %v3733, %v3741
    %vm3744 = vcmp.ge.f32.partialorder %v3726, 0.0
    %vm3745 = vcmp.ge.f32.partialorder %v3727, 0.0
    %vm3746 = vcmp.ge.f32.partialorder %v3742, 0.0
    %vm3747 = vcmp.ge.f32.partialorder %v3743, 0.0
    %v3748 = vmul.f32 %v3726, 0.01
    %v3749 = vmul.f32 %v3727, 0.01
    %v3750 = vmul.f32 %v3742, 0.01
    %v3751 = vmul.f32 %v3743, 0.01
    %v3752 = vsel %vm3744, %v3726, %v3748
    %v3753 = vsel %vm3745, %v3727, %v3749
    %v3754 = vsel %vm3746, %v3742, %v3750
    %v3755 = vsel %vm3747, %v3743, %v3751
    %v3757 = vsel %vm135, %v125, 0
    %3759 = vmatprep.subr.mxu0 %v3753
    %3760 = vmatpush1.msra.mxu0 %v3752
    %3761 = vmatprep.subr.mxu0 0.0
    %3762 = vmatpush1.msra.mxu0 0.0
    %3763 = vmatprep.subr.mxu0 0.0
    %3764 = vmatpush1.msra.mxu0 0.0
    %3765 = vmatprep.subr.mxu0 0.0
    %3766 = vmatpush1.msra.mxu0 0.0
    %3767 = vmatprep.subr.mxu0 0.0
    %3768 = vmatpush1.msra.mxu0 0.0
    %3769 = vmatprep.subr.mxu0 0.0
    %3770 = vmatpush1.msra.mxu0 0.0
    %3771 = vmatprep.subr.mxu0 0.0
    %3772 = vmatpush1.msra.mxu0 0.0
    %3773 = vmatprep.subr.mxu0 0.0
    %3774 = vmatpush1.msra.mxu0 0.0
    %3775 = vmatprep.subr.mxu0 0.0
    %3776 = vmatpush1.msra.mxu0 0.0
    %3777 = vmatprep.subr.mxu0 0.0
    %3778 = vmatpush1.msra.mxu0 0.0
    %3779 = vmatprep.subr.mxu0 0.0
    %3780 = vmatpush1.msra.mxu0 0.0
    %3781 = vmatprep.subr.mxu0 0.0
    %3782 = vmatpush1.msra.mxu0 0.0
    %3783 = vmatprep.subr.mxu0 0.0
    %3784 = vmatpush1.msra.mxu0 0.0
    %3785 = vmatprep.subr.mxu0 0.0
    %3786 = vmatpush1.msra.mxu0 0.0
    %3787 = vmatprep.subr.mxu0 0.0
    %3788 = vmatpush1.msra.mxu0 0.0
    %3789 = vmatprep.subr.mxu0 0.0
    %3790 = vmatpush1.msra.mxu0 0.0
    %3791 = vmatprep.subr.mxu0 0.0
    %3792 = vmatpush1.msra.mxu0 0.0
    %3793 = vmatprep.subr.mxu0 0.0
    %3794 = vmatpush1.msra.mxu0 0.0
    %3795 = vmatprep.subr.mxu0 0.0
    %3796 = vmatpush1.msra.mxu0 0.0
    %3797 = vmatprep.subr.mxu0 0.0
    %3798 = vmatpush1.msra.mxu0 0.0
    %3799 = vmatprep.subr.mxu0 0.0
    %3800 = vmatpush1.msra.mxu0 0.0
    %3801 = vmatprep.subr.mxu0 0.0
    %3802 = vmatpush1.msra.mxu0 0.0
    %3803 = vmatprep.subr.mxu0 0.0
    %3804 = vmatpush1.msra.mxu0 0.0
    %3805 = vmatprep.subr.mxu0 0.0
    %3806 = vmatpush1.msra.mxu0 0.0
    %3807 = vmatprep.subr.mxu0 0.0
    %3808 = vmatpush1.msra.mxu0 0.0
    %3809 = vmatprep.subr.mxu0 0.0
    %3810 = vmatpush1.msra.mxu0 0.0
    %3811 = vmatprep.subr.mxu0 0.0
    %3812 = vmatpush1.msra.mxu0 0.0
    %3813 = vmatprep.subr.mxu0 0.0
    %3814 = vmatpush1.msra.mxu0 0.0
    %3815 = vmatprep.subr.mxu0 0.0
    %3816 = vmatpush1.msra.mxu0 0.0
    %3817 = vmatprep.subr.mxu0 0.0
    %3818 = vmatpush1.msra.mxu0 0.0
    %3819 = vmatprep.subr.mxu0 0.0
    %3820 = vmatpush1.msra.mxu0 0.0
    %3821 = vmatprep.subr.mxu0 0.0
    %3822 = vmatpush1.msra.mxu0 0.0
    %3823 = vmatprep.mubr.f32.mxu0 0.0
    %3824 = vmatmul.mubr.f32.gmra.mrb[0].mxu0 %v3757
    %v3825 = vpop.f32.mrb[0].mxu0
    %v3826 = vadd.f32 0.0, %v3825
    %v3827 = vpop.f32.mrb[0].mxu0
    %v3828 = vadd.f32 0.0, %v3827
    %3829 = vdwg.mxu0
    %3830 = vmatprep.subr.mxu0 %v3755
    %3831 = vmatpush1.msra.mxu0 %v3754
    %3832 = vmatprep.subr.mxu0 0.0
    %3833 = vmatpush1.msra.mxu0 0.0
    %3834 = vmatprep.subr.mxu0 0.0
    %3835 = vmatpush1.msra.mxu0 0.0
    %3836 = vmatprep.subr.mxu0 0.0
    %3837 = vmatpush1.msra.mxu0 0.0
    %3838 = vmatprep.subr.mxu0 0.0
    %3839 = vmatpush1.msra.mxu0 0.0
    %3840 = vmatprep.subr.mxu0 0.0
    %3841 = vmatpush1.msra.mxu0 0.0
    %3842 = vmatprep.subr.mxu0 0.0
    %3843 = vmatpush1.msra.mxu0 0.0
    %3844 = vmatprep.subr.mxu0 0.0
    %3845 = vmatpush1.msra.mxu0 0.0
    %3846 = vmatprep.subr.mxu0 0.0
    %3847 = vmatpush1.msra.mxu0 0.0
    %3848 = vmatprep.subr.mxu0 0.0
    %3849 = vmatpush1.msra.mxu0 0.0
    %3850 = vmatprep.subr.mxu0 0.0
    %3851 = vmatpush1.msra.mxu0 0.0
    %3852 = vmatprep.subr.mxu0 0.0
    %3853 = vmatpush1.msra.mxu0 0.0
    %3854 = vmatprep.subr.mxu0 0.0
    %3855 = vmatpush1.msra.mxu0 0.0
    %3856 = vmatprep.subr.mxu0 0.0
    %3857 = vmatpush1.msra.mxu0 0.0
    %3858 = vmatprep.subr.mxu0 0.0
    %3859 = vmatpush1.msra.mxu0 0.0
    %3860 = vmatprep.subr.mxu0 0.0
    %3861 = vmatpush1.msra.mxu0 0.0
    %3862 = vmatprep.subr.mxu0 0.0
    %3863 = vmatpush1.msra.mxu0 0.0
    %3864 = vmatprep.subr.mxu0 0.0
    %3865 = vmatpush1.msra.mxu0 0.0
    %3866 = vmatprep.subr.mxu0 0.0
    %3867 = vmatpush1.msra.mxu0 0.0
    %3868 = vmatprep.subr.mxu0 0.0
    %3869 = vmatpush1.msra.mxu0 0.0
    %3870 = vmatprep.subr.mxu0 0.0
    %3871 = vmatpush1.msra.mxu0 0.0
    %3872 = vmatprep.subr.mxu0 0.0
    %3873 = vmatpush1.msra.mxu0 0.0
    %3874 = vmatprep.subr.mxu0 0.0
    %3875 = vmatpush1.msra.mxu0 0.0
    %3876 = vmatprep.subr.mxu0 0.0
    %3877 = vmatpush1.msra.mxu0 0.0
    %3878 = vmatprep.subr.mxu0 0.0
    %3879 = vmatpush1.msra.mxu0 0.0
    %3880 = vmatprep.subr.mxu0 0.0
    %3881 = vmatpush1.msra.mxu0 0.0
    %3882 = vmatprep.subr.mxu0 0.0
    %3883 = vmatpush1.msra.mxu0 0.0
    %3884 = vmatprep.subr.mxu0 0.0
    %3885 = vmatpush1.msra.mxu0 0.0
    %3886 = vmatprep.subr.mxu0 0.0
    %3887 = vmatpush1.msra.mxu0 0.0
    %3888 = vmatprep.subr.mxu0 0.0
    %3889 = vmatpush1.msra.mxu0 0.0
    %3890 = vmatprep.subr.mxu0 0.0
    %3891 = vmatpush1.msra.mxu0 0.0
    %3892 = vmatprep.subr.mxu0 0.0
    %3893 = vmatpush1.msra.mxu0 0.0
    %3894 = vmatprep.mubr.f32.mxu0 0.0
    %3895 = vmatmul.mubr.f32.gmra.mrb[0].mxu0 %v3757
    %v3896 = vpop.f32.mrb[0].mxu0
    %v3897 = vadd.f32 0.0, %v3896
    %v3898 = vpop.f32.mrb[0].mxu0
    %v3899 = vadd.f32 0.0, %v3898
    %3900 = vdwg.mxu0
    %v3902 = vsel %vm135, %v124, 0
    %3904 = vmatprep.subr.mxu0 %v282
    %3905 = vmatpush1.msra.mxu0 %v280
    %3906 = vmatprep.subr.mxu0 0.0
    %3907 = vmatpush1.msra.mxu0 0.0
    %3908 = vmatprep.subr.mxu0 0.0
    %3909 = vmatpush1.msra.mxu0 0.0
    %3910 = vmatprep.subr.mxu0 0.0
    %3911 = vmatpush1.msra.mxu0 0.0
    %3912 = vmatprep.subr.mxu0 0.0
    %3913 = vmatpush1.msra.mxu0 0.0
    %3914 = vmatprep.subr.mxu0 0.0
    %3915 = vmatpush1.msra.mxu0 0.0
    %3916 = vmatprep.subr.mxu0 0.0
    %3917 = vmatpush1.msra.mxu0 0.0
    %3918 = vmatprep.subr.mxu0 0.0
    %3919 = vmatpush1.msra.mxu0 0.0
    %3920 = vmatprep.subr.mxu0 0.0
    %3921 = vmatpush1.msra.mxu0 0.0
    %3922 = vmatprep.subr.mxu0 0.0
    %3923 = vmatpush1.msra.mxu0 0.0
    %3924 = vmatprep.subr.mxu0 0.0
    %3925 = vmatpush1.msra.mxu0 0.0
    %3926 = vmatprep.subr.mxu0 0.0
    %3927 = vmatpush1.msra.mxu0 0.0
    %3928 = vmatprep.subr.mxu0 0.0
    %3929 = vmatpush1.msra.mxu0 0.0
    %3930 = vmatprep.subr.mxu0 0.0
    %3931 = vmatpush1.msra.mxu0 0.0
    %3932 = vmatprep.subr.mxu0 0.0
    %3933 = vmatpush1.msra.mxu0 0.0
    %3934 = vmatprep.subr.mxu0 0.0
    %3935 = vmatpush1.msra.mxu0 0.0
    %3936 = vmatprep.subr.mxu0 0.0
    %3937 = vmatpush1.msra.mxu0 0.0
    %3938 = vmatprep.subr.mxu0 0.0
    %3939 = vmatpush1.msra.mxu0 0.0
    %3940 = vmatprep.subr.mxu0 0.0
    %3941 = vmatpush1.msra.mxu0 0.0
    %3942 = vmatprep.subr.mxu0 0.0
    %3943 = vmatpush1.msra.mxu0 0.0
    %3944 = vmatprep.subr.mxu0 0.0
    %3945 = vmatpush1.msra.mxu0 0.0
    %3946 = vmatprep.subr.mxu0 0.0
    %3947 = vmatpush1.msra.mxu0 0.0
    %3948 = vmatprep.subr.mxu0 0.0
    %3949 = vmatpush1.msra.mxu0 0.0
    %3950 = vmatprep.subr.mxu0 0.0
    %3951 = vmatpush1.msra.mxu0 0.0
    %3952 = vmatprep.subr.mxu0 0.0
    %3953 = vmatpush1.msra.mxu0 0.0
    %3954 = vmatprep.subr.mxu0 0.0
    %3955 = vmatpush1.msra.mxu0 0.0
    %3956 = vmatprep.subr.mxu0 0.0
    %3957 = vmatpush1.msra.mxu0 0.0
    %3958 = vmatprep.subr.mxu0 0.0
    %3959 = vmatpush1.msra.mxu0 0.0
    %3960 = vmatprep.subr.mxu0 0.0
    %3961 = vmatpush1.msra.mxu0 0.0
    %3962 = vmatprep.subr.mxu0 0.0
    %3963 = vmatpush1.msra.mxu0 0.0
    %3964 = vmatprep.subr.mxu0 0.0
    %3965 = vmatpush1.msra.mxu0 0.0
    %3966 = vmatprep.subr.mxu0 0.0
    %3967 = vmatpush1.msra.mxu0 0.0
    %3968 = vmatprep.mubr.f32.mxu0 0.0
    %3969 = vmatmul.mubr.f32.gmra.mrb[0].mxu0 %v3902
    %v3970 = vpop.f32.mrb[0].mxu0
    %v3971 = vadd.f32 %v3826, %v3970
    %v3972 = vpop.f32.mrb[0].mxu0
    %v3973 = vadd.f32 %v3828, %v3972
    %3974 = vdwg.mxu0
    %3975 = vmatprep.subr.mxu0 %v428
    %3976 = vmatpush1.msra.mxu0 %v426
    %3977 = vmatprep.subr.mxu0 0.0
    %3978 = vmatpush1.msra.mxu0 0.0
    %3979 = vmatprep.subr.mxu0 0.0
    %3980 = vmatpush1.msra.mxu0 0.0
    %3981 = vmatprep.subr.mxu0 0.0
    %3982 = vmatpush1.msra.mxu0 0.0
    %3983 = vmatprep.subr.mxu0 0.0
    %3984 = vmatpush1.msra.mxu0 0.0
    %3985 = vmatprep.subr.mxu0 0.0
    %3986 = vmatpush1.msra.mxu0 0.0
    %3987 = vmatprep.subr.mxu0 0.0
    %3988 = vmatpush1.msra.mxu0 0.0
    %3989 = vmatprep.subr.mxu0 0.0
    %3990 = vmatpush1.msra.mxu0 0.0
    %3991 = vmatprep.subr.mxu0 0.0
    %3992 = vmatpush1.msra.mxu0 0.0
    %3993 = vmatprep.subr.mxu0 0.0
    %3994 = vmatpush1.msra.mxu0 0.0
    %3995 = vmatprep.subr.mxu0 0.0
    %3996 = vmatpush1.msra.mxu0 0.0
    %3997 = vmatprep.subr.mxu0 0.0
    %3998 = vmatpush1.msra.mxu0 0.0
    %3999 = vmatprep.subr.mxu0 0.0
    %4000 = vmatpush1.msra.mxu0 0.0
    %4001 = vmatprep.subr.mxu0 0.0
    %4002 = vmatpush1.msra.mxu0 0.0
    %4003 = vmatprep.subr.mxu0 0.0
    %4004 = vmatpush1.msra.mxu0 0.0
    %4005 = vmatprep.subr.mxu0 0.0
    %4006 = vmatpush1.msra.mxu0 0.0
    %4007 = vmatprep.subr.mxu0 0.0
    %4008 = vmatpush1.msra.mxu0 0.0
    %4009 = vmatprep.subr.mxu0 0.0
    %4010 = vmatpush1.msra.mxu0 0.0
    %4011 = vmatprep.subr.mxu0 0.0
    %4012 = vmatpush1.msra.mxu0 0.0
    %4013 = vmatprep.subr.mxu0 0.0
    %4014 = vmatpush1.msra.mxu0 0.0
    %4015 = vmatprep.subr.mxu0 0.0
    %4016 = vmatpush1.msra.mxu0 0.0
    %4017 = vmatprep.subr.mxu0 0.0
    %4018 = vmatpush1.msra.mxu0 0.0
    %4019 = vmatprep.subr.mxu0 0.0
    %4020 = vmatpush1.msra.mxu0 0.0
    %4021 = vmatprep.subr.mxu0 0.0
    %4022 = vmatpush1.msra.mxu0 0.0
    %4023 = vmatprep.subr.mxu0 0.0
    %4024 = vmatpush1.msra.mxu0 0.0
    %4025 = vmatprep.subr.mxu0 0.0
    %4026 = vmatpush1.msra.mxu0 0.0
    %4027 = vmatprep.subr.mxu0 0.0
    %4028 = vmatpush1.msra.mxu0 0.0
    %4029 = vmatprep.subr.mxu0 0.0
    %4030 = vmatpush1.msra.mxu0 0.0
    %4031 = vmatprep.subr.mxu0 0.0
    %4032 = vmatpush1.msra.mxu0 0.0
    %4033 = vmatprep.subr.mxu0 0.0
    %4034 = vmatpush1.msra.mxu0 0.0
    %4035 = vmatprep.subr.mxu0 0.0
    %4036 = vmatpush1.msra.mxu0 0.0
    %4037 = vmatprep.subr.mxu0 0.0
    %4038 = vmatpush1.msra.mxu0 0.0
    %4039 = vmatprep.mubr.f32.mxu0 0.0
    %4040 = vmatmul.mubr.f32.gmra.mrb[0].mxu0 %v3902
    %v4041 = vpop.f32.mrb[0].mxu0
    %v4042 = vadd.f32 %v3897, %v4041
    %v4043 = vpop.f32.mrb[0].mxu0
    %v4044 = vadd.f32 %v3899, %v4043
    %4045 = vdwg.mxu0
    %v4046 = vsub.f32 0.0, %v3971
    %v4047 = vsub.f32 0.0, %v3973
    %v4048 = vsub.f32 0.0, %v4042
    %v4049 = vsub.f32 0.0, %v4044
    %v4050 = vmul.f32 %v4046, 1.442695
    %v4051 = vpow.pop %v4050
    %v4052 = vmul.f32 %v4047, 1.442695
    %v4053 = vpow.pop %v4052
    %v4054 = vmul.f32 %v4048, 1.442695
    %v4055 = vpow.pop %v4054
    %v4056 = vmul.f32 %v4049, 1.442695
    %v4057 = vpow.pop %v4056
    %v4058 = vadd.f32 %v4051, 1.0
    %v4059 = vadd.f32 %v4053, 1.0
    %v4060 = vadd.f32 %v4055, 1.0
    %v4061 = vadd.f32 %v4057, 1.0
    %v4062 = vrcp.pop %v4058
    %v4063 = vrcp.pop %v4059
    %v4064 = vrcp.pop %v4060
    %v4065 = vrcp.pop %v4061
    %v4066 = vlaneseq
    %v4067 = vshrl.u32 %v4066, 7
    %v4068 = vsub.s32 0, %v4067
    %v4069 = vrot.slane %v4062, %v4068
    %v4070 = vlaneseq
    %v4071 = vshrl.u32 %v4070, 7
    %v4072 = vsub.s32 0, %v4071
    %v4073 = vrot.slane %v4063, %v4072
    %v4074 = vlaneseq
    %v4075 = vshrl.u32 %v4074, 7
    %v4076 = vsub.s32 0, %v4075
    %v4077 = vrot.slane %v4064, %v4076
    %v4078 = vlaneseq
    %v4079 = vshrl.u32 %v4078, 7
    %v4080 = vsub.s32 0, %v4079
    %v4081 = vrot.slane %v4065, %v4080
    %v4082 = vmul.f32 %v280, %v4069
    %v4083 = vmul.f32 %v282, %v4073
    %v4084 = vmul.f32 %v426, %v4077
    %v4085 = vmul.f32 %v428, %v4081
    %v4086 = vlaneseq
    %v4087 = vshrl.u32 %v4086, 7
    %v4088 = vsub.s32 1, %v4087
    %v4089 = vrot.slane %v4062, %v4088
    %v4090 = vlaneseq
    %v4091 = vshrl.u32 %v4090, 7
    %v4092 = vsub.s32 1, %v4091
    %v4093 = vrot.slane %v4063, %v4092
    %v4094 = vlaneseq
    %v4095 = vshrl.u32 %v4094, 7
    %v4096 = vsub.s32 1, %v4095
    %v4097 = vrot.slane %v4064, %v4096
    %v4098 = vlaneseq
    %v4099 = vshrl.u32 %v4098, 7
    %v4100 = vsub.s32 1, %v4099
    %v4101 = vrot.slane %v4065, %v4100
    %v4102 = vmul.f32 %v3752, %v4089
    %v4103 = vmul.f32 %v3753, %v4093
    %v4104 = vmul.f32 %v3754, %v4097
    %v4105 = vmul.f32 %v3755, %v4101
    %v4106 = vadd.f32 %v4082, %v4102
    %v4107 = vadd.f32 %v4083, %v4103
    %v4108 = vadd.f32 %v4084, %v4104
    %v4109 = vadd.f32 %v4085, %v4105
    %v4110 = vadd.s32 %v448, 128
    %v4111 = vcvt.s32.f32 %v448
    %v4112 = vcvt.s32.f32 %v4110
    %v4113 = vrcp.pop 16.0
    %v4114 = vmul.f32 %v4111, %v4113
    %v4115 = vmul.f32 %v4112, %v4113
    %v4116 = vfloor.f32 %v4114
    %v4117 = vfloor.f32 %v4115
    %v4118 = vmul.f32 %v4116, 16.0
    %v4119 = vmul.f32 %v4117, 16.0
    %v4120 = vsub.f32 %v4111, %v4118
    %v4121 = vsub.f32 %v4112, %v4119
    %v4122 = vrot.slane %v4106, 4
    %v4123 = vadd.f32 %v4106, %v4122
    %v4124 = vrot.slane %v4123, 2
    %v4125 = vadd.f32 %v4123, %v4124
    %v4126 = vrot.slane %v4125, 1
    %v4127 = vadd.f32 %v4125, %v4126
    %v4128 = vrot.slane %v4107, 4
    %v4129 = vadd.f32 %v4107, %v4128
    %v4130 = vrot.slane %v4129, 2
    %v4131 = vadd.f32 %v4129, %v4130
    %v4132 = vrot.slane %v4131, 1
    %v4133 = vadd.f32 %v4131, %v4132
    %v4134 = vmax.f32 %v4127, %v4133
    %4135 = vmax.xlane.f32.xlu0 %v4134
    %v4136 = vpop.xlane.xlu0 %4135
    %vm4137 = vcmp.eq.f32.partialorder %v4127, %v4136
    %vm4138 = vcmp.eq.f32.partialorder %v4133, %v4136
    %v4139 = vsel %vm4137, %v4111, 256.0
    %v4140 = vsel %vm4138, %v4112, 256.0
    %v4141 = vmin.f32 %v4139, %v4140
    %4142 = vmin.xlane.f32.xlu0 %v4141
    %v4143 = vpop.xlane.xlu0 %4142
    %v4144 = vmul.f32 %v4143, %v4113
    %v4145 = vfloor.f32 %v4144
    %v4146 = vmul.f32 %v4145, 16.0
    %v4147 = vadd.f32 %v4146, %v4145
    %vm4148 = vcmp.eq.f32.partialorder %v4111, %v4147
    %vm4149 = vcmp.eq.f32.partialorder %v4112, %v4147
    %v4150 = vsel %vm4148, 1, 0
    %v4151 = vsel %vm4149, 1, 0
    %v4152 = vcvt.s32.f32 %v4150
    %v4153 = vcvt.s32.f32 %v4151
    %v4154 = vmul.f32 %v4106, %v4152
    %v4155 = vmul.f32 %v4107, %v4153
    %v4156 = vadd.f32 %v4154, %v4155
    %4157 = vadd.xlane.f32.xlu0 %v4156
    %v4158 = vpop.xlane.xlu0 %4157
    %v4159 = vmul.f32 %v4158, %v4106
    %v4160 = vmul.f32 %v4158, %v4107
    %v4161 = vrot.slane %v4159, 4
    %v4162 = vadd.f32 %v4159, %v4161
    %v4163 = vrot.slane %v4162, 2
    %v4164 = vadd.f32 %v4162, %v4163
    %v4165 = vrot.slane %v4164, 1
    %v4166 = vadd.f32 %v4164, %v4165
    %v4167 = vrot.slane %v4160, 4
    %v4168 = vadd.f32 %v4160, %v4167
    %v4169 = vrot.slane %v4168, 2
    %v4170 = vadd.f32 %v4168, %v4169
    %v4171 = vrot.slane %v4170, 1
    %v4172 = vadd.f32 %v4170, %v4171
    %v4173 = vadd.f32 %v4106, %v4107
    %4174 = vadd.xlane.f32.xlu0 %v4173
    %v4175 = vpop.xlane.xlu0 %4174
    %v4176 = vmul.f32 %v4175, %v2188
    %v4177 = vmul.f32 %v4176, %v4106
    %v4178 = vmul.f32 %v4176, %v4107
    %v4179 = vrot.slane %v4177, 4
    %v4180 = vadd.f32 %v4177, %v4179
    %v4181 = vrot.slane %v4180, 2
    %v4182 = vadd.f32 %v4180, %v4181
    %v4183 = vrot.slane %v4182, 1
    %v4184 = vadd.f32 %v4182, %v4183
    %v4185 = vrot.slane %v4178, 4
    %v4186 = vadd.f32 %v4178, %v4185
    %v4187 = vrot.slane %v4186, 2
    %v4188 = vadd.f32 %v4186, %v4187
    %v4189 = vrot.slane %v4188, 1
    %v4190 = vadd.f32 %v4188, %v4189
    %v4191 = vsub.f32 %v4116, %v4145
    %v4192 = vsub.f32 %v4117, %v4145
    %v4193 = vand.u32 2147483647, %v4191
    %v4194 = vand.u32 2147483647, %v4192
    %v4195 = vstv %s91
    %v4196 = vmul.f32 %v4193, %v4195
    %v4197 = vmul.f32 %v4194, %v4195
    %v4198 = vsub.f32 %v4120, %v4145
    %v4199 = vsub.f32 %v4121, %v4145
    %v4200 = vand.u32 2147483647, %v4198
    %v4201 = vand.u32 2147483647, %v4199
    %v4202 = vstv %s92
    %v4203 = vmul.f32 %v4200, %v4202
    %v4204 = vmul.f32 %v4201, %v4202
    %v4205 = vmul.f32 %v4196, %v4196
    %v4206 = vmul.f32 %v4197, %v4197
    %v4207 = vsub.f32 0.0, %v4205
    %v4208 = vsub.f32 0.0, %v4206
    %v4209 = vstv %s102
    %v4210 = vmul.f32 %v4207, %v4209
    %v4211 = vmul.f32 %v4208, %v4209
    %v4212 = vmul.f32 %v4210, 1.442695
    %v4213 = vpow.pop %v4212
    %v4214 = vmul.f32 %v4211, 1.442695
    %v4215 = vpow.pop %v4214
    %v4216 = vstv %s106
    %v4217 = vmul.f32 %v4213, %v4216
    %v4218 = vmul.f32 %v4215, %v4216
    %v4219 = vmul.f32 %v4203, %v4203
    %v4220 = vmul.f32 %v4204, %v4204
    %v4221 = vsub.f32 0.0, %v4219
    %v4222 = vsub.f32 0.0, %v4220
    %v4223 = vmul.f32 %v4221, %v4209
    %v4224 = vmul.f32 %v4222, %v4209
    %v4225 = vmul.f32 %v4223, 1.442695
    %v4226 = vpow.pop %v4225
    %v4227 = vmul.f32 %v4224, 1.442695
    %v4228 = vpow.pop %v4227
    %v4229 = vmul.f32 %v4226, %v4216
    %v4230 = vmul.f32 %v4228, %v4216
    %v4231 = vadd.f32 %v4217, %v4229
    %v4232 = vadd.f32 %v4218, %v4230
    %v4233 = vmul.f32 %v4231, 0.5
    %v4234 = vmul.f32 %v4232, 0.5
    %v4235 = vmul.f32 %v4166, %v4233
    %v4236 = vmul.f32 %v4172, %v4234
    %v4237 = vstv %s97
    %v4238 = vmul.f32 %v4235, %v4237
    %v4239 = vmul.f32 %v4236, %v4237
    %v4240 = vstv %s96
    %v4241 = vmul.f32 %v4184, %v4240
    %v4242 = vmul.f32 %v4190, %v4240
    %v4243 = vadd.f32 %v4238, %v4241
    %v4244 = vadd.f32 %v4239, %v4242
    %v4245 = vadd.f32 %v4243, %v4244
    %4246 = vadd.xlane.f32.xlu0 %v4245
    %v4247 = vpop.xlane.xlu0 %4246
    %v4248 = vmul.f32 %v4247, %v2188
    %v4249 = vsub.f32 %v4243, %v4248
    %v4250 = vsub.f32 %v4244, %v4248
    %v4251 = vadd.f32 %v4249, %v4250
    %4252 = vadd.xlane.f32.xlu0 %v4251
    %v4253 = vpop.xlane.xlu0 %4252
    %v4254 = vmul.f32 %v4253, %v2188
    %v4255 = vsub.f32 %v4249, %v4254
    %v4256 = vsub.f32 %v4250, %v4254
    %v4257 = vmul.f32 %v4255, %v4255
    %v4258 = vmul.f32 %v4256, %v4256
    %v4259 = vadd.f32 %v4257, %v4258
    %4260 = vadd.xlane.f32.xlu0 %v4259
    %v4261 = vpop.xlane.xlu0 %4260
    %v4262 = vmul.f32 %v4261, 0.003921569
    %v4263 = vrsqrt.pop %v4262
    %v4264 = vmul.f32 %v4262, %v4263
    %vm4265 = vcmp.eq.f32.partialorder %v4262, inf
    %v4266 = vsel %vm4265, %v4262, %v4264
    %vm4267 = vcmp.eq.f32.partialorder %v4262, 0.0
    %v4268 = vand.u32 %v4262, 2147483648
    %v4269 = vsel %vm4267, %v4268, %v4266
    %v4270 = vadd.f32 %v4269, 1e-05
    %v4271 = vrcp.pop %v4270
    %v4272 = vmul.f32 %v4249, %v4271
    %v4273 = vmul.f32 %v4250, %v4271
    %v4274 = vstv %s94
    %v4275 = vmul.f32 %v4272, %v4274
    %v4276 = vmul.f32 %v4273, %v4274
    %v4277 = vstv %s95
    %v4278 = vadd.f32 %v4275, %v4277
    %v4279 = vadd.f32 %v4276, %v4277
    %v4280 = vsub.f32 0.0, %v4278
    %v4281 = vsub.f32 0.0, %v4279
    %v4282 = vmul.f32 %v4280, 1.442695
    %v4283 = vpow.pop %v4282
    %v4284 = vmul.f32 %v4281, 1.442695
    %v4285 = vpow.pop %v4284
    %v4286 = vadd.f32 %v4283, 1.0
    %v4287 = vadd.f32 %v4285, 1.0
    %v4288 = vrcp.pop %v4286
    %v4289 = vrcp.pop %v4287
    %v4290 = vmul.f32 %v4106, %v4288
    %v4291 = vmul.f32 %v4107, %v4289
    %4292 = vst [vmem:[#allocation10] sm:$0xff] %v4290
    %4293 = vst [vmem:[#allocation10 + $0x8] sm:$0xff] %v4291
    %v4296 = vcombine.low %v4288, %v4289
    %v4298 = vunpack.c.l.s4 1966171168
    %v4299 = vunpack.c.0.s8 %v4298
    %v4300 = vlaneseq
    %v4301 = vshrl.u32 %v4300, 7
    %v4302 = vsub.s32 %v4299, %v4301
    %v4303 = vrot.slane %v4296, %v4302
    %v4305 = vunpack.c.l.s4 1966171168
    %v4306 = vunpack.c.0.s8 %v4305
    %v4307 = vlaneseq
    %v4308 = vshrl.u32 %v4307, 7
    %v4309 = vsub.s32 %v4306, %v4308
    %v4310 = vrot.slane %v4303, %v4309
    %v4312 = vlaneseq
    %vm4313 = vcmp.ge.s32.totalorder %v4312, 0
    %vm4314 = vcmp.lt.s32.totalorder %v4312, 256
    %vm4315 = vmand %vm4313, %vm4314
    %4316 = vst.msk [vmem:[#allocation11] sm:$0x3] %vm4315, %v4310
    %v4317 = vrot.slane %v4108, 4
    %v4318 = vadd.f32 %v4108, %v4317
    %v4319 = vrot.slane %v4318, 2
    %v4320 = vadd.f32 %v4318, %v4319
    %v4321 = vrot.slane %v4320, 1
    %v4322 = vadd.f32 %v4320, %v4321
    %v4323 = vrot.slane %v4109, 4
    %v4324 = vadd.f32 %v4109, %v4323
    %v4325 = vrot.slane %v4324, 2
    %v4326 = vadd.f32 %v4324, %v4325
    %v4327 = vrot.slane %v4326, 1
    %v4328 = vadd.f32 %v4326, %v4327
    %v4329 = vmax.f32 %v4322, %v4328
    %4330 = vmax.xlane.f32.xlu0 %v4329
    %v4331 = vpop.xlane.xlu0 %4330
    %vm4332 = vcmp.eq.f32.partialorder %v4322, %v4331
    %vm4333 = vcmp.eq.f32.partialorder %v4328, %v4331
    %v4334 = vsel %vm4332, %v4111, 256.0
    %v4335 = vsel %vm4333, %v4112, 256.0
    %v4336 = vmin.f32 %v4334, %v4335
    %4337 = vmin.xlane.f32.xlu0 %v4336
    %v4338 = vpop.xlane.xlu0 %4337
    %v4339 = vmul.f32 %v4338, %v4113
    %v4340 = vfloor.f32 %v4339
    %v4341 = vmul.f32 %v4340, 16.0
    %v4342 = vadd.f32 %v4341, %v4340
    %vm4343 = vcmp.eq.f32.partialorder %v4111, %v4342
    %vm4344 = vcmp.eq.f32.partialorder %v4112, %v4342
    %v4345 = vsel %vm4343, 1, 0
    %v4346 = vsel %vm4344, 1, 0
    %v4347 = vcvt.s32.f32 %v4345
    %v4348 = vcvt.s32.f32 %v4346
    %v4349 = vmul.f32 %v4108, %v4347
    %v4350 = vmul.f32 %v4109, %v4348
    %v4351 = vadd.f32 %v4349, %v4350
    %4352 = vadd.xlane.f32.xlu0 %v4351
    %v4353 = vpop.xlane.xlu0 %4352
    %v4354 = vmul.f32 %v4353, %v4108
    %v4355 = vmul.f32 %v4353, %v4109
    %v4356 = vrot.slane %v4354, 4
    %v4357 = vadd.f32 %v4354, %v4356
    %v4358 = vrot.slane %v4357, 2
    %v4359 = vadd.f32 %v4357, %v4358
    %v4360 = vrot.slane %v4359, 1
    %v4361 = vadd.f32 %v4359, %v4360
    %v4362 = vrot.slane %v4355, 4
    %v4363 = vadd.f32 %v4355, %v4362
    %v4364 = vrot.slane %v4363, 2
    %v4365 = vadd.f32 %v4363, %v4364
    %v4366 = vrot.slane %v4365, 1
    %v4367 = vadd.f32 %v4365, %v4366
    %v4368 = vadd.f32 %v4108, %v4109
    %4369 = vadd.xlane.f32.xlu0 %v4368
    %v4370 = vpop.xlane.xlu0 %4369
    %v4371 = vmul.f32 %v4370, %v2188
    %v4372 = vmul.f32 %v4371, %v4108
    %v4373 = vmul.f32 %v4371, %v4109
    %v4374 = vrot.slane %v4372, 4
    %v4375 = vadd.f32 %v4372, %v4374
    %v4376 = vrot.slane %v4375, 2
    %v4377 = vadd.f32 %v4375, %v4376
    %v4378 = vrot.slane %v4377, 1
    %v4379 = vadd.f32 %v4377, %v4378
    %v4380 = vrot.slane %v4373, 4
    %v4381 = vadd.f32 %v4373, %v4380
    %v4382 = vrot.slane %v4381, 2
    %v4383 = vadd.f32 %v4381, %v4382
    %v4384 = vrot.slane %v4383, 1
    %v4385 = vadd.f32 %v4383, %v4384
    %v4386 = vsub.f32 %v4116, %v4340
    %v4387 = vsub.f32 %v4117, %v4340
    %v4388 = vand.u32 2147483647, %v4386
    %v4389 = vand.u32 2147483647, %v4387
    %v4390 = vmul.f32 %v4388, %v4195
    %v4391 = vmul.f32 %v4389, %v4195
    %v4392 = vsub.f32 %v4120, %v4340
    %v4393 = vsub.f32 %v4121, %v4340
    %v4394 = vand.u32 2147483647, %v4392
    %v4395 = vand.u32 2147483647, %v4393
    %v4396 = vmul.f32 %v4394, %v4202
    %v4397 = vmul.f32 %v4395, %v4202
    %v4398 = vmul.f32 %v4390, %v4390
    %v4399 = vmul.f32 %v4391, %v4391
    %v4400 = vsub.f32 0.0, %v4398
    %v4401 = vsub.f32 0.0, %v4399
    %v4402 = vmul.f32 %v4400, %v4209
    %v4403 = vmul.f32 %v4401, %v4209
    %v4404 = vmul.f32 %v4402, 1.442695
    %v4405 = vpow.pop %v4404
    %v4406 = vmul.f32 %v4403, 1.442695
    %v4407 = vpow.pop %v4406
    %v4408 = vmul.f32 %v4405, %v4216
    %v4409 = vmul.f32 %v4407, %v4216
    %v4410 = vmul.f32 %v4396, %v4396
    %v4411 = vmul.f32 %v4397, %v4397
    %v4412 = vsub.f32 0.0, %v4410
    %v4413 = vsub.f32 0.0, %v4411
    %v4414 = vmul.f32 %v4412, %v4209
    %v4415 = vmul.f32 %v4413, %v4209
    %v4416 = vmul.f32 %v4414, 1.442695
    %v4417 = vpow.pop %v4416
    %v4418 = vmul.f32 %v4415, 1.442695
    %v4419 = vpow.pop %v4418
    %v4420 = vmul.f32 %v4417, %v4216
    %v4421 = vmul.f32 %v4419, %v4216
    %v4422 = vadd.f32 %v4408, %v4420
    %v4423 = vadd.f32 %v4409, %v4421
    %v4424 = vmul.f32 %v4422, 0.5
    %v4425 = vmul.f32 %v4423, 0.5
    %v4426 = vmul.f32 %v4361, %v4424
    %v4427 = vmul.f32 %v4367, %v4425
    %v4428 = vmul.f32 %v4426, %v4237
    %v4429 = vmul.f32 %v4427, %v4237
    %v4430 = vmul.f32 %v4379, %v4240
    %v4431 = vmul.f32 %v4385, %v4240
    %v4432 = vadd.f32 %v4428, %v4430
    %v4433 = vadd.f32 %v4429, %v4431
    %v4434 = vadd.f32 %v4432, %v4433
    %4435 = vadd.xlane.f32.xlu0 %v4434
    %v4436 = vpop.xlane.xlu0 %4435
    %v4437 = vmul.f32 %v4436, %v2188
    %v4438 = vsub.f32 %v4432, %v4437
    %v4439 = vsub.f32 %v4433, %v4437
    %v4440 = vadd.f32 %v4438, %v4439
    %4441 = vadd.xlane.f32.xlu0 %v4440
    %v4442 = vpop.xlane.xlu0 %4441
    %v4443 = vmul.f32 %v4442, %v2188
    %v4444 = vsub.f32 %v4438, %v4443
    %v4445 = vsub.f32 %v4439, %v4443
    %v4446 = vmul.f32 %v4444, %v4444
    %v4447 = vmul.f32 %v4445, %v4445
    %v4448 = vadd.f32 %v4446, %v4447
    %4449 = vadd.xlane.f32.xlu0 %v4448
    %v4450 = vpop.xlane.xlu0 %4449
    %v4451 = vmul.f32 %v4450, 0.003921569
    %v4452 = vrsqrt.pop %v4451
    %v4453 = vmul.f32 %v4451, %v4452
    %vm4454 = vcmp.eq.f32.partialorder %v4451, inf
    %v4455 = vsel %vm4454, %v4451, %v4453
    %vm4456 = vcmp.eq.f32.partialorder %v4451, 0.0
    %v4457 = vand.u32 %v4451, 2147483648
    %v4458 = vsel %vm4456, %v4457, %v4455
    %v4459 = vadd.f32 %v4458, 1e-05
    %v4460 = vrcp.pop %v4459
    %v4461 = vmul.f32 %v4438, %v4460
    %v4462 = vmul.f32 %v4439, %v4460
    %v4463 = vmul.f32 %v4461, %v4274
    %v4464 = vmul.f32 %v4462, %v4274
    %v4465 = vadd.f32 %v4463, %v4277
    %v4466 = vadd.f32 %v4464, %v4277
    %v4467 = vsub.f32 0.0, %v4465
    %v4468 = vsub.f32 0.0, %v4466
    %v4469 = vmul.f32 %v4467, 1.442695
    %v4470 = vpow.pop %v4469
    %v4471 = vmul.f32 %v4468, 1.442695
    %v4472 = vpow.pop %v4471
    %v4473 = vadd.f32 %v4470, 1.0
    %v4474 = vadd.f32 %v4472, 1.0
    %v4475 = vrcp.pop %v4473
    %v4476 = vrcp.pop %v4474
    %v4477 = vmul.f32 %v4108, %v4475
    %v4478 = vmul.f32 %v4109, %v4476
    %s4479 = scalar_lea.vmem [#allocation10], 16
    %4480 = vst [vmem:[%s4479] sm:$0xff] %v4477
    %4481 = vst [vmem:[%s4479 + $0x8] sm:$0xff] %v4478
    %v4484 = vcombine.low %v4475, %v4476
    %v4486 = vunpack.c.l.s4 1966171168
    %v4487 = vunpack.c.0.s8 %v4486
    %v4488 = vlaneseq
    %v4489 = vshrl.u32 %v4488, 7
    %v4490 = vsub.s32 %v4487, %v4489
    %v4491 = vrot.slane %v4484, %v4490
    %v4493 = vunpack.c.l.s4 1966171168
    %v4494 = vunpack.c.0.s8 %v4493
    %v4495 = vlaneseq
    %v4496 = vshrl.u32 %v4495, 7
    %v4497 = vsub.s32 %v4494, %v4496
    %v4498 = vrot.slane %v4491, %v4497
    %s4500 = scalar_lea.vmem [#allocation11], 2
    %4501 = vst.msk [vmem:[%s4500] sm:$0x3] %vm4315, %v4498
    // Predicated region
    $region58: #{tpu_custom_call.1} parent=1 // pred_check
      _
    $region59: #{tpu_custom_call.1} parent=1 // pred_check_branch
      %4503 = sbr.rel (0) target = $region61
    $region60: #{tpu_custom_call.1} parent=1 // pred_region
      %s4505 = ssub.s32 512, 512
      %4506 = vsyncadd [#allocation4], %s4505
      %s4507 = sshll.u32 [#allocation10], 4
      %s4508 = int_to_ptr.vmem [resolvable:$true] %s4507
      %4513 = dma.vmem_to_hbm [thread:$0]  %s4508, 512, %s10, [#allocation4], 256, 256, 16
    $region61: #{tpu_custom_call.1} parent=1 // pred_fallthru
      _
    // Predicated region
    $region62: #{tpu_custom_call.1} parent=1 // pred_check
      _
    $region63: #{tpu_custom_call.1} parent=1 // pred_check_branch
      %4515 = sbr.rel (0) target = $region65
    $region64: #{tpu_custom_call.1} parent=1 // pred_region
      %s4517 = ssub.s32 64, 64
      %4518 = vsyncadd [#allocation12], %s4517
      %s4519 = sshll.u32 [#allocation11], 4
      %s4520 = int_to_ptr.vmem [resolvable:$true] %s4519
      %4525 = dma.vmem_to_hbm [thread:$0]  %s4520, 64, %s11, [#allocation12], 32, 32, 2
    $region65: #{tpu_custom_call.1} parent=1 // pred_fallthru
      _
    // Predicated region
    $region66: #{tpu_custom_call.1} parent=1 // pred_check
      _
    $region67: #{tpu_custom_call.1} parent=1 // pred_check_branch
      %4527 = sbr.rel (0) target = $region69
    $region68: #{tpu_custom_call.1} parent=1 // pred_region
      %4528 = dma.done [#allocation4], 512
    $region69: #{tpu_custom_call.1} parent=1 // pred_fallthru
      _
    // Predicated region
    $region70: #{tpu_custom_call.1} parent=1 // pred_check
      _
    $region71: #{tpu_custom_call.1} parent=1 // pred_check_branch
      %4530 = sbr.rel (0) target = $region73
    $region72: #{tpu_custom_call.1} parent=1 // pred_region
      %4531 = dma.done [#allocation12], 64
    $region73: #{tpu_custom_call.1} parent=1 // pred_fallthru
      _
    %4532 = vsyncpa [#allocation3], 1
    %4533 = vsyncpa [#allocation7], 1
    %4534 = vsyncpa [#allocation4], 1
    %4535 = vsyncpa [#allocation12], 1
    %4536 = vsyncpa [#allocation5], 1

</llo_original>
